<compile_context>
chip_gen: v7x
topology: tpu7x:2x2x1
jax: 0.10.0
libtpu: 0.0.40
codegen_flags: <defaults>
</compile_context>

<pallas_src>
import functools
import math

import jax
import jax.numpy as jnp
from jax.experimental import pallas as pl
from jax.experimental.pallas import tpu as pltpu


# ----------------------------------------------------------------------------
# Kernel
# ----------------------------------------------------------------------------
def _cat_vae_kernel(x_ref, g_ref, w1_ref, b1_ref, w2_ref, b2_ref,
                    w3_ref, b3_ref, w4_ref, b4_ref,
                    recon_ref, logits_ref, *, inv_temp, num_categories):
    f32, bf16 = jnp.float32, jnp.bfloat16
    K = num_categories

    x = x_ref[...]                                                   # (TB, Dp) bf16

    # ---- encoder: Linear(784,512) -> ReLU -> Linear(512, L*K) ---------------
    h1 = jnp.dot(x, w1_ref[...], preferred_element_type=f32) + b1_ref[...]
    h1 = jnp.maximum(h1, 0.0)
    logits = jnp.dot(h1.astype(bf16), w2_ref[...],
                     preferred_element_type=f32) + b2_ref[...]       # (TB, W) f32
    logits_ref[...] = logits

    # ---- gumbel-softmax (soft path), softmax over each latent's K categories.
    # Latent layout: category k of latent l sits at lane k*stride + l, so a
    # cyclic roll of the whole row by a multiple of `stride` permutes lanes
    # strictly within each softmax group -> exact per-group max and sum.
    y = (logits + g_ref[...].astype(f32)) * inv_temp
    stride = y.shape[-1] // K                                        # = L_pad

    gmax = y                                    # per-group max (exact, any K)
    s = 1
    while s < K:                                # static unroll, ceil(log2 K) rounds
        gmax = jnp.maximum(gmax, pltpu.roll(gmax, s * stride, 1))
        s *= 2
    e = jnp.exp(y - gmax)                       # group max -> exp(0)=1, denom >= 1

    if K & (K - 1) == 0:                        # power-of-two K: doubling sum exact
        denom = e
        s = 1
        while s < K:
            denom = denom + pltpu.roll(denom, s * stride, 1)
            s *= 2
    else:                                       # general K: add all K-1 rotations
        denom = e
        for s in range(1, K):
            denom = denom + pltpu.roll(e, s * stride, 1)

    z = e * pl.reciprocal(denom, approx=True)   # soft one-hots, (TB, W)

    # ---- decoder: Linear(L*K,512) -> ReLU -> Linear(512,784) -> Sigmoid -----
    h2 = jnp.dot(z.astype(bf16), w3_ref[...], preferred_element_type=f32) + b3_ref[...]
    h2 = jnp.maximum(h2, 0.0)
    out = jnp.dot(h2.astype(bf16), w4_ref[...], preferred_element_type=f32) + b4_ref[...]
    # sigmoid = 1 / (1 + exp(-x)); approx EUP reciprocal + bf16 writeback
    recon = pl.reciprocal(1.0 + jnp.exp(-out), approx=True)
    recon_ref[...] = recon.astype(recon_ref.dtype)


# ----------------------------------------------------------------------------
# Layout helpers (used once at parameter-prep time, and per-call for x/gumbel)
# ----------------------------------------------------------------------------
def _round_up(n, m):
    return -(-n // m) * m


def _cdiv(a, b):
    return -(-a // b)


def _pad2(a, rows, cols):
    return jnp.pad(a, ((0, rows - a.shape[0]), (0, cols - a.shape[1])))


def _perm_cols(a, L, K, L_pad):
    """(..., L*K) -> (..., K*L_pad): column l*K + k -> column k*L_pad + l."""
    a3 = jnp.swapaxes(a.reshape(a.shape[:-1] + (L, K)), -1, -2)
    a3 = jnp.pad(a3, [(0, 0)] * (a3.ndim - 1) + [(0, L_pad - L)])
    return a3.reshape(a.shape[:-1] + (K * L_pad,))


def prepare_params(params, *, input_dim, latent_dim, num_categories):
    """One-time weight reformatting (pad + latent re-layout + bf16 cast).

    Call this once at parameter-load time; pass the result to
    categorical_vae_forward on every call (hoists ~2 MiB of per-call
    transpose/pad/cast XLA work out of the forward).
    """
    D, L, K = input_dim, latent_dim, num_categories
    H = params["w1"].shape[1]                            # 512
    LK = L * K

    D_pad = _round_up(D, 128)                            # 784 -> 896
    L_pad = _round_up(L, 128 // math.gcd(K, 128))        # so K*L_pad % 128 == 0
    W = K * L_pad                                        # padded latent width
    assert W == K * L_pad and W % 128 == 0               # roll-softmax invariant

    prepped = dict(
        w1=_pad2(params["w1"], D_pad, H).astype(jnp.bfloat16),
        b1=params["b1"].reshape(1, H).astype(jnp.float32),
        w2=_perm_cols(params["w2"], L, K, L_pad).astype(jnp.bfloat16),      # (H, W)
        b2=_perm_cols(params["b2"].reshape(1, LK), L, K, L_pad).astype(jnp.float32),
        w3=jnp.pad(jnp.swapaxes(params["w3"].reshape(L, K, H), 0, 1),
                   ((0, 0), (0, L_pad - L), (0, 0)))
             .reshape(W, H).astype(jnp.bfloat16),                           # (W, H)
        b3=params["b3"].reshape(1, H).astype(jnp.float32),
        w4=_pad2(params["w4"], H, D_pad).astype(jnp.bfloat16),
        b4=_pad2(params["b4"].reshape(1, D), 1, D_pad).astype(jnp.float32),
    )
    prepped = jax.tree_util.tree_map(jax.block_until_ready, prepped)
    meta = dict(D=D, D_pad=D_pad, H=H, L=L, K=K, L_pad=L_pad, W=W)
    return prepped, meta


# ----------------------------------------------------------------------------
# Forward
# ----------------------------------------------------------------------------
def categorical_vae_forward(x, prepped, meta, gumbel_noise, *, temperature=1.0):
    """Forward pass. Returns (reconstruction (B, 784) bf16, logits (B, L, K) f32)."""
    D, D_pad, H = meta["D"], meta["D_pad"], meta["H"]
    L, K, L_pad, W = meta["L"], meta["K"], meta["L_pad"], meta["W"]
    assert W == K * L_pad                                  # roll-softmax invariant

    B = x.shape[0]
    x2 = x.reshape(B, -1).astype(jnp.float32)              # x.view(-1, 784)
    assert x2.shape[1] == D

    # balanced batch tiling: always >=2 grid steps (megacore split / pipelining),
    # tile target 256 rows (fills the MXU M dim, ~half the VMEM of 512).
    steps = max(2, _cdiv(B, 256))
    TB = _round_up(_cdiv(B, steps), 8)
    B_pad = steps * TB
    grid = (steps,)

    xp = _pad2(x2, B_pad, D_pad).astype(jnp.bfloat16)
    gp = _pad2(_perm_cols(gumbel_noise.astype(jnp.float32), L, K, L_pad),
               B_pad, W).astype(jnp.bfloat16)

    kernel = functools.partial(_cat_vae_kernel,
                               inv_temp=float(1.0 / temperature),
                               num_categories=int(K))

    tiled = lambda shape: pl.BlockSpec(shape, lambda i: (i, 0))   # batch-tiled
    const = lambda shape: pl.BlockSpec(shape, lambda i: (0, 0))   # VMEM-resident

    flops = 2 * B_pad * (D_pad * H + H * W + W * H + H * D_pad)
    transcendentals = B_pad * 2 * (W + D_pad)
    bytes_accessed = (B_pad * (D_pad + W) * 2                         # x, gumbel (bf16)
                      + 2 * (D_pad * H + H * W + W * H + H * D_pad)   # bf16 weights
                      + 4 * (2 * H + W + D_pad)                       # f32 biases
                      + B_pad * (D_pad * 2 + W * 4))                  # recon bf16, logits f32

    recon, logits = pl.pallas_call(
        kernel,
        out_shape=(jax.ShapeDtypeStruct((B_pad, D_pad), jnp.bfloat16),
                   jax.ShapeDtypeStruct((B_pad, W), jnp.float32)),
        grid=grid,
        in_specs=[
            tiled((TB, D_pad)),                     # x
            tiled((TB, W)),                         # gumbel noise
            const((D_pad, H)), const((1, H)),       # w1, b1
            const((H, W)),     const((1, W)),       # w2, b2
            const((W, H)),     const((1, H)),       # w3, b3
            const((H, D_pad)), const((1, D_pad)),   # w4, b4
        ],
        out_specs=(tiled((TB, D_pad)), tiled((TB, W))),
        compiler_params=pltpu.CompilerParams(
            dimension_semantics=("parallel",),
            vmem_limit_bytes=32 * 1024 * 1024),
        cost_estimate=pl.CostEstimate(flops=flops,
                                      transcendentals=transcendentals,
                                      bytes_accessed=bytes_accessed),
    )(xp, gp, prepped["w1"], prepped["b1"], prepped["w2"], prepped["b2"],
      prepped["w3"], prepped["b3"], prepped["w4"], prepped["b4"])

    recon = recon[:B, :D]
    logits = jnp.swapaxes(logits[:B].reshape(B, K, L_pad)[:, :, :L], 1, 2)  # (B,L,K)
    return recon, logits


# ----------------------------------------------------------------------------
# Init + pure-JAX reference
# ----------------------------------------------------------------------------
def init_params(key, input_dim, latent_dim, num_categories, hidden=512):
    """Deterministic init matching PyTorch nn.Linear default (U(-1/sqrt(fan_in), ..))."""
    LK = latent_dim * num_categories

    def linear(k, fan_in, fan_out):
        kw, kb = jax.random.split(k)
        bound = 1.0 / float(fan_in) ** 0.5
        w = jax.random.uniform(kw, (fan_in, fan_out), jnp.float32, -bound, bound)
        b = jax.random.uniform(kb, (1, fan_out), jnp.float32, -bound, bound)
        return w, b

    k1, k2, k3, k4 = jax.random.split(key, 4)
    w1, b1 = linear(k1, input_dim, hidden)
    w2, b2 = linear(k2, hidden, LK)
    w3, b3 = linear(k3, LK, hidden)
    w4, b4 = linear(k4, hidden, input_dim)
    return dict(w1=w1, b1=b1, w2=w2, b2=b2, w3=w3, b3=b3, w4=w4, b4=b4)


def _reference_forward(x, p, g, latent_dim, num_categories, temperature=1.0):
    """Pure-JAX f32 reference with the same gumbel noise."""
    xf = x.reshape(x.shape[0], -1)
    h1 = jnp.maximum(xf @ p["w1"] + p["b1"], 0.0)
    logits = h1 @ p["w2"] + p["b2"]
    y = (logits + g) / temperature
    y3 = y.reshape(-1, latent_dim, num_categories)
    z = jax.nn.softmax(y3, axis=-1).reshape(-1, latent_dim * num_categories)
    h2 = jnp.maximum(z @ p["w3"] + p["b3"], 0.0)
    recon = jax.nn.sigmoid(h2 @ p["w4"] + p["b4"])
    return recon, logits.reshape(-1, latent_dim, num_categories)


if __name__ == "__main__":
    B, latent_dim, num_categories = 2, 8, 4
    input_dim = 784                      # forward() hard-codes x.view(-1, 784)

    key = jax.random.PRNGKey(0)
    kx, kp, kg = jax.random.split(key, 3)

    x = jax.random.uniform(kx, (B, 1, 28, 28), jnp.float32)   # MNIST-like NCHW
    params = init_params(kp, input_dim, latent_dim, num_categories)
    # Gumbel(0,1) noise, same role as -log(Exp(1)) in the PyTorch module.
    # TODO(synk): noise is precomputed on host (not pltpu.prng in-kernel) so the
    # kernel stays bit-comparable to the f32 reference.
    gumbel = jax.random.gumbel(kg, (B, latent_dim * num_categories), jnp.float32)

    # one-time weight prep (hoisted out of the per-call forward)
    prepped, meta = prepare_params(params, input_dim=input_dim,
                                   latent_dim=latent_dim,
                                   num_categories=num_categories)

    recon, logits = categorical_vae_forward(x, prepped, meta, gumbel,
                                            temperature=1.0)
    jax.block_until_ready((recon, logits))

    r_ref, l_ref = _reference_forward(x, params, gumbel, latent_dim, num_categories)

    assert recon.shape == (B, input_dim)
    assert logits.shape == (B, latent_dim, num_categories)
    recon_f32 = recon.astype(jnp.float32)
    assert bool(jnp.all(jnp.isfinite(recon_f32))) and bool(jnp.all(jnp.isfinite(logits)))
    # bf16 MXU operands / bf16 recon+noise (f32 accumulate) vs all-f32 reference
    assert bool(jnp.allclose(recon_f32, r_ref, atol=2e-2, rtol=2e-2))
    assert bool(jnp.allclose(logits, l_ref, atol=2e-2, rtol=2e-2))

    print("KERNEL_OK")
</pallas_src>

<mosaic_0001>
module attributes {stable_mosaic.version = 11 : i64} {
  func.func @_cat_vae_kernel(%arg0: i32, %arg1: memref<8x896xbf16, #tpu.memory_space<vmem>>, %arg2: memref<8x128xbf16, #tpu.memory_space<vmem>>, %arg3: memref<896x512xbf16, #tpu.memory_space<vmem>>, %arg4: memref<1x512xf32, #tpu.memory_space<vmem>>, %arg5: memref<512x128xbf16, #tpu.memory_space<vmem>>, %arg6: memref<1x128xf32, #tpu.memory_space<vmem>>, %arg7: memref<128x512xbf16, #tpu.memory_space<vmem>>, %arg8: memref<1x512xf32, #tpu.memory_space<vmem>>, %arg9: memref<512x896xbf16, #tpu.memory_space<vmem>>, %arg10: memref<1x896xf32, #tpu.memory_space<vmem>>, %arg11: memref<8x896xbf16, #tpu.memory_space<vmem>>, %arg12: memref<8x128xf32, #tpu.memory_space<vmem>>) attributes {dimension_semantics = [#tpu.dimension_semantics<parallel>], iteration_bounds = array<i64: 2>, scalar_prefetch = 0 : i64, scratch_operands = 0 : i64, tpu.core_type = #tpu.core_type<tc>, window_params = [{transform_indices = @transform_0, window_bounds = array<i64: 8, 896>}, {transform_indices = @transform_1, window_bounds = array<i64: 8, 128>}, {pipeline_mode = #tpu.pipeline_mode<synchronous>, transform_indices = @transform_2, window_bounds = array<i64: 896, 512>}, {pipeline_mode = #tpu.pipeline_mode<synchronous>, transform_indices = @transform_3, window_bounds = array<i64: 1, 512>}, {pipeline_mode = #tpu.pipeline_mode<synchronous>, transform_indices = @transform_4, window_bounds = array<i64: 512, 128>}, {pipeline_mode = #tpu.pipeline_mode<synchronous>, transform_indices = @transform_5, window_bounds = array<i64: 1, 128>}, {pipeline_mode = #tpu.pipeline_mode<synchronous>, transform_indices = @transform_6, window_bounds = array<i64: 128, 512>}, {pipeline_mode = #tpu.pipeline_mode<synchronous>, transform_indices = @transform_7, window_bounds = array<i64: 1, 512>}, {pipeline_mode = #tpu.pipeline_mode<synchronous>, transform_indices = @transform_8, window_bounds = array<i64: 512, 896>}, {pipeline_mode = #tpu.pipeline_mode<synchronous>, transform_indices = @transform_9, window_bounds = array<i64: 1, 896>}, {transform_indices = @transform_10, window_bounds = array<i64: 8, 896>}, {transform_indices = @transform_11, window_bounds = array<i64: 8, 128>}]} {
    %c0 = arith.constant 0 : index
    %c0_0 = arith.constant 0 : index
    %0 = vector.load %arg1[%c0, %c0_0] : memref<8x896xbf16, #tpu.memory_space<vmem>>, vector<8x896xbf16>
    %c0_1 = arith.constant 0 : index
    %c0_2 = arith.constant 0 : index
    %1 = vector.load %arg3[%c0_1, %c0_2] : memref<896x512xbf16, #tpu.memory_space<vmem>>, vector<896x512xbf16>
    %cst = arith.constant dense<0.000000e+00> : vector<8x512xf32>
    %2 = tpu.matmul %0, %1, %cst {dimension_numbers = #tpu.dot_dimension_numbers<[1], [0], [0], [1], [0, 0, 1, 1], [], []>} : vector<8x896xbf16>, vector<896x512xbf16>, vector<8x512xf32> -> vector<8x512xf32>
    %c0_3 = arith.constant 0 : index
    %c0_4 = arith.constant 0 : index
    %3 = vector.load %arg4[%c0_3, %c0_4] : memref<1x512xf32, #tpu.memory_space<vmem>>, vector<1x512xf32>
    %4 = vector.broadcast %3 : vector<1x512xf32> to vector<8x512xf32>
    %5 = arith.addf %2, %4 : vector<8x512xf32>
    %cst_5 = arith.constant 0.000000e+00 : f32
    %6 = vector.broadcast %cst_5 : f32 to vector<8x512xf32>
    %7 = arith.maximumf %5, %6 : vector<8x512xf32>
    %8 = arith.truncf %7 : vector<8x512xf32> to vector<8x512xbf16>
    %c0_6 = arith.constant 0 : index
    %c0_7 = arith.constant 0 : index
    %9 = vector.load %arg5[%c0_6, %c0_7] : memref<512x128xbf16, #tpu.memory_space<vmem>>, vector<512x128xbf16>
    %cst_8 = arith.constant dense<0.000000e+00> : vector<8x128xf32>
    %10 = tpu.matmul %8, %9, %cst_8 {dimension_numbers = #tpu.dot_dimension_numbers<[1], [0], [0], [1], [0, 0, 1, 1], [], []>} : vector<8x512xbf16>, vector<512x128xbf16>, vector<8x128xf32> -> vector<8x128xf32>
    %c0_9 = arith.constant 0 : index
    %c0_10 = arith.constant 0 : index
    %11 = vector.load %arg6[%c0_9, %c0_10] : memref<1x128xf32, #tpu.memory_space<vmem>>, vector<1x128xf32>
    %12 = vector.broadcast %11 : vector<1x128xf32> to vector<8x128xf32>
    %13 = arith.addf %10, %12 : vector<8x128xf32>
    %c0_11 = arith.constant 0 : index
    %c0_12 = arith.constant 0 : index
    %14 = vector.load %arg12[%c0_11, %c0_12] : memref<8x128xf32, #tpu.memory_space<vmem>>, vector<8x128xf32>
    tpu.vector_store %arg12[%c0_11, %c0_12], %13 {strides = array<i32>} : memref<8x128xf32, #tpu.memory_space<vmem>>, vector<8x128xf32>,
    %c0_13 = arith.constant 0 : index
    %c0_14 = arith.constant 0 : index
    %15 = vector.load %arg2[%c0_13, %c0_14] : memref<8x128xbf16, #tpu.memory_space<vmem>>, vector<8x128xbf16>
    %16 = arith.extf %15 : vector<8x128xbf16> to vector<8x128xf32>
    %17 = arith.addf %13, %16 : vector<8x128xf32>
    %cst_15 = arith.constant 1.000000e+00 : f32
    %18 = vector.broadcast %cst_15 : f32 to vector<8x128xf32>
    %19 = arith.mulf %17, %18 : vector<8x128xf32>
    %c32_i32 = arith.constant 32 : i32
    %20 = tpu.dynamic_rotate %19 by %c32_i32 dim 1 : vector<8x128xf32>, i32 -> vector<8x128xf32>
    %21 = arith.maximumf %19, %20 : vector<8x128xf32>
    %c64_i32 = arith.constant 64 : i32
    %22 = tpu.dynamic_rotate %21 by %c64_i32 dim 1 : vector<8x128xf32>, i32 -> vector<8x128xf32>
    %23 = arith.maximumf %21, %22 : vector<8x128xf32>
    %24 = arith.subf %19, %23 : vector<8x128xf32>
    %25 = math.exp %24 : vector<8x128xf32>
    %c32_i32_16 = arith.constant 32 : i32
    %26 = tpu.dynamic_rotate %25 by %c32_i32_16 dim 1 : vector<8x128xf32>, i32 -> vector<8x128xf32>
    %27 = arith.addf %25, %26 : vector<8x128xf32>
    %c64_i32_17 = arith.constant 64 : i32
    %28 = tpu.dynamic_rotate %27 by %c64_i32_17 dim 1 : vector<8x128xf32>, i32 -> vector<8x128xf32>
    %29 = arith.addf %27, %28 : vector<8x128xf32>
    %30 = tpu.reciprocal %29 {approx = true} : vector<8x128xf32> -> vector<8x128xf32>
    %31 = arith.mulf %25, %30 : vector<8x128xf32>
    %32 = arith.truncf %31 : vector<8x128xf32> to vector<8x128xbf16>
    %c0_18 = arith.constant 0 : index
    %c0_19 = arith.constant 0 : index
    %33 = vector.load %arg7[%c0_18, %c0_19] : memref<128x512xbf16, #tpu.memory_space<vmem>>, vector<128x512xbf16>
    %cst_20 = arith.constant dense<0.000000e+00> : vector<8x512xf32>
    %34 = tpu.matmul %32, %33, %cst_20 {dimension_numbers = #tpu.dot_dimension_numbers<[1], [0], [0], [1], [0, 0, 1, 1], [], []>} : vector<8x128xbf16>, vector<128x512xbf16>, vector<8x512xf32> -> vector<8x512xf32>
    %c0_21 = arith.constant 0 : index
    %c0_22 = arith.constant 0 : index
    %35 = vector.load %arg8[%c0_21, %c0_22] : memref<1x512xf32, #tpu.memory_space<vmem>>, vector<1x512xf32>
    %36 = vector.broadcast %35 : vector<1x512xf32> to vector<8x512xf32>
    %37 = arith.addf %34, %36 : vector<8x512xf32>
    %cst_23 = arith.constant 0.000000e+00 : f32
    %38 = vector.broadcast %cst_23 : f32 to vector<8x512xf32>
    %39 = arith.maximumf %37, %38 : vector<8x512xf32>
    %40 = arith.truncf %39 : vector<8x512xf32> to vector<8x512xbf16>
    %c0_24 = arith.constant 0 : index
    %c0_25 = arith.constant 0 : index
    %41 = vector.load %arg9[%c0_24, %c0_25] : memref<512x896xbf16, #tpu.memory_space<vmem>>, vector<512x896xbf16>
    %cst_26 = arith.constant dense<0.000000e+00> : vector<8x896xf32>
    %42 = tpu.matmul %40, %41, %cst_26 {dimension_numbers = #tpu.dot_dimension_numbers<[1], [0], [0], [1], [0, 0, 1, 1], [], []>} : vector<8x512xbf16>, vector<512x896xbf16>, vector<8x896xf32> -> vector<8x896xf32>
    %c0_27 = arith.constant 0 : index
    %c0_28 = arith.constant 0 : index
    %43 = vector.load %arg10[%c0_27, %c0_28] : memref<1x896xf32, #tpu.memory_space<vmem>>, vector<1x896xf32>
    %44 = vector.broadcast %43 : vector<1x896xf32> to vector<8x896xf32>
    %45 = arith.addf %42, %44 : vector<8x896xf32>
    %cst_29 = arith.constant 0.000000e+00 : f32
    %46 = vector.broadcast %cst_29 : f32 to vector<8x896xf32>
    %47 = arith.subf %46, %45 : vector<8x896xf32>
    %48 = math.exp %47 : vector<8x896xf32>
    %cst_30 = arith.constant 1.000000e+00 : f32
    %49 = vector.broadcast %cst_30 : f32 to vector<8x896xf32>
    %50 = arith.addf %49, %48 : vector<8x896xf32>
    %51 = tpu.reciprocal %50 {approx = true} : vector<8x896xf32> -> vector<8x896xf32>
    %52 = arith.truncf %51 : vector<8x896xf32> to vector<8x896xbf16>
    %c0_31 = arith.constant 0 : index
    %c0_32 = arith.constant 0 : index
    %53 = vector.load %arg11[%c0_31, %c0_32] : memref<8x896xbf16, #tpu.memory_space<vmem>>, vector<8x896xbf16>
    tpu.vector_store %arg11[%c0_31, %c0_32], %52 {strides = array<i32>} : memref<8x896xbf16, #tpu.memory_space<vmem>>, vector<8x896xbf16>,
    return
  }
  func.func @transform_0(%arg0: i32) -> (i32, i32) {
    %c0_i32 = arith.constant 0 : i32
    %c0_i32_0 = arith.constant 0 : i32
    return %arg0, %c0_i32 : i32, i32
  }
  func.func @transform_1(%arg0: i32) -> (i32, i32) {
    %c0_i32 = arith.constant 0 : i32
    %c0_i32_0 = arith.constant 0 : i32
    return %arg0, %c0_i32 : i32, i32
  }
  func.func @transform_2(%arg0: i32) -> (i32, i32) {
    %c0_i32 = arith.constant 0 : i32
    %c0_i32_0 = arith.constant 0 : i32
    %c0_i32_1 = arith.constant 0 : i32
    return %c0_i32, %c0_i32_0 : i32, i32
  }
  func.func @transform_3(%arg0: i32) -> (i32, i32) {
    %c0_i32 = arith.constant 0 : i32
    %c0_i32_0 = arith.constant 0 : i32
    %c0_i32_1 = arith.constant 0 : i32
    return %c0_i32, %c0_i32_0 : i32, i32
  }
  func.func @transform_4(%arg0: i32) -> (i32, i32) {
    %c0_i32 = arith.constant 0 : i32
    %c0_i32_0 = arith.constant 0 : i32
    %c0_i32_1 = arith.constant 0 : i32
    return %c0_i32, %c0_i32_0 : i32, i32
  }
  func.func @transform_5(%arg0: i32) -> (i32, i32) {
    %c0_i32 = arith.constant 0 : i32
    %c0_i32_0 = arith.constant 0 : i32
    %c0_i32_1 = arith.constant 0 : i32
    return %c0_i32, %c0_i32_0 : i32, i32
  }
  func.func @transform_6(%arg0: i32) -> (i32, i32) {
    %c0_i32 = arith.constant 0 : i32
    %c0_i32_0 = arith.constant 0 : i32
    %c0_i32_1 = arith.constant 0 : i32
    return %c0_i32, %c0_i32_0 : i32, i32
  }
  func.func @transform_7(%arg0: i32) -> (i32, i32) {
    %c0_i32 = arith.constant 0 : i32
    %c0_i32_0 = arith.constant 0 : i32
    %c0_i32_1 = arith.constant 0 : i32
    return %c0_i32, %c0_i32_0 : i32, i32
  }
  func.func @transform_8(%arg0: i32) -> (i32, i32) {
    %c0_i32 = arith.constant 0 : i32
    %c0_i32_0 = arith.constant 0 : i32
    %c0_i32_1 = arith.constant 0 : i32
    return %c0_i32, %c0_i32_0 : i32, i32
  }
  func.func @transform_9(%arg0: i32) -> (i32, i32) {
    %c0_i32 = arith.constant 0 : i32
    %c0_i32_0 = arith.constant 0 : i32
    %c0_i32_1 = arith.constant 0 : i32
    return %c0_i32, %c0_i32_0 : i32, i32
  }
  func.func @transform_10(%arg0: i32) -> (i32, i32) {
    %c0_i32 = arith.constant 0 : i32
    %c0_i32_0 = arith.constant 0 : i32
    return %arg0, %c0_i32 : i32, i32
  }
  func.func @transform_11(%arg0: i32) -> (i32, i32) {
    %c0_i32 = arith.constant 0 : i32
    %c0_i32_0 = arith.constant 0 : i32
    return %arg0, %c0_i32 : i32, i32
  }
}

</mosaic_0001>

<llo_original>
// kernel: tpu_custom_call.1
$region0: #{tpu_custom_call.1}
  #allocation0 [shape = 'u32[]', space=smem, size = 0x4, offset = 0x4, fixed_abs, tag = 'smem constant byte address 0x4 - core index']
  #allocation1 [shape = 'u32[144,128]{1,0:T(1,128)}', space=vmem, size = 0x12000, scoped, tag = 'internal scratch']
  %s0 = inlined_call_operand.hbm [shape: bf16[16,896], index: 0, kind: input, shape index: {}]
  %s1 = inlined_call_operand.hbm [shape: bf16[16,128], index: 1, kind: input, shape index: {}]
  %s2 = inlined_call_operand.hbm [shape: bf16[896,512], index: 2, kind: input, shape index: {}]
  %s3 = inlined_call_operand.vmem [shape: f32[1,512], index: 3, kind: input, shape index: {}]
  %s4 = inlined_call_operand.hbm [shape: bf16[512,128], index: 4, kind: input, shape index: {}]
  %s5 = inlined_call_operand.vmem [shape: f32[1,128], index: 5, kind: input, shape index: {}]
  %s6 = inlined_call_operand.hbm [shape: bf16[128,512], index: 6, kind: input, shape index: {}]
  %s7 = inlined_call_operand.vmem [shape: f32[1,512], index: 7, kind: input, shape index: {}]
  %s8 = inlined_call_operand.hbm [shape: bf16[512,896], index: 8, kind: input, shape index: {}]
  %s9 = inlined_call_operand.vmem [shape: f32[1,896], index: 9, kind: input, shape index: {}]
  %s10 = inlined_call_operand.hbm [shape: bf16[16,896], index: 10, kind: output, shape index: {0}]
  %s11 = inlined_call_operand.hbm [shape: f32[16,128], index: 11, kind: output, shape index: {1}]
  %12 = xla_tuple %s10, %s11
  %s13 = sld [smem:[#allocation0]]
  $region105: #{tpu_custom_call.1} parent=0
    _
  %s15 = ssub.s32 1, %s13
  %s16 = scalar_select 0, %s15, %s13
  $region1: #{tpu_custom_call.1} parent=0
    #allocation2 [shape = 'u8[28672]{0}', space=vmem, size = 0x7000, scoped, tag = 'input window, operand 0']
    #allocation3 [shape = 's32[2]{0}', space=sflag, size = 0x8, scoped, tag = 'scoped memory for tpu_custom_call.1']
    #allocation4 [shape = 's32[2]{0}', space=sflag, size = 0x8, scoped, tag = 'scoped memory for tpu_custom_call.1']
    #allocation5 [shape = 'u8[4096]{0}', space=vmem, size = 0x1000, scoped, tag = 'input window, operand 1']
    #allocation6 [shape = 's32[2]{0}', space=sflag, size = 0x8, scoped, tag = 'scoped memory for tpu_custom_call.1']
    #allocation7 [shape = 'u8[917504]{0}', space=vmem, size = 0xe0000, scoped, tag = 'input window, operand 2, single buffered']
    #allocation8 [shape = 'u8[131072]{0}', space=vmem, size = 0x20000, scoped, tag = 'input window, operand 4, single buffered']
    #allocation9 [shape = 's32[1]{0}', space=sflag, size = 0x4, scoped, tag = 'scoped memory for tpu_custom_call.1']
    #allocation10 [shape = 'u8[131072]{0}', space=vmem, size = 0x20000, scoped, tag = 'input window, operand 6, single buffered']
    #allocation11 [shape = 'u8[917504]{0}', space=vmem, size = 0xe0000, scoped, tag = 'input window, operand 8, single buffered']
    #allocation12 [shape = 's32[1]{0}', space=sflag, size = 0x4, scoped, tag = 'scoped memory for tpu_custom_call.1']
    #allocation13 [shape = 'u8[28672]{0}', space=vmem, size = 0x7000, scoped, tag = 'output window, operand 0']
    #allocation14 [shape = 'u8[8192]{0}', space=vmem, size = 0x2000, scoped, tag = 'output window, operand 1']
    #allocation15 [shape = 's32[2]{0}', space=sflag, size = 0x8, scoped, tag = 'scoped memory for tpu_custom_call.1']
    %17 = vsyncpa [#allocation3], 0
    %s18 = scalar_lea.sflag [#allocation3], 1
    %19 = vsyncpa %s18, 0
    %20 = vsyncpa [#allocation6], 0
    %s21 = scalar_lea.sflag [#allocation6], 1
    %22 = vsyncpa %s21, 0
    %23 = vsyncpa [#allocation9], 0
    %24 = vsyncpa [#allocation12], 0
    %25 = vsyncpa [#allocation4], 0
    %s26 = scalar_lea.sflag [#allocation4], 1
    %27 = vsyncpa %s26, 0
    %28 = vsyncpa [#allocation15], 0
    %s29 = scalar_lea.sflag [#allocation15], 1
    %30 = vsyncpa %s29, 0
    loop: start=0, step=1, limit=4
    $region2: #{tpu_custom_call.1} parent=1 // loop_pre_header
      _
    $region3: #{tpu_custom_call.1} parent=1 // loop_header
      %s32 = sphi 0, %s36
      %p33 = scmp.ge.s32.totalorder %s32, 4
      %s42 = sphi 0, %s44
      %s45 = sphi 0, %s42
      %s46 = sphi 0, %s45
      %s62 = sphi 0, %s46
      %s68 = sphi 0, %s70
      %s71 = sphi 0, %s68
      %s72 = sphi 0, %s71
      %s88 = sphi 0, %s72
      %s92 = sphi 0, %s92
      %s94 = sphi 0, %s92
      %s95 = sphi 0, %s94
      %s109 = sphi 0, %s95
      %s113 = sphi 0, %s113
      %s115 = sphi 0, %s113
      %s116 = sphi 0, %s115
      %s130 = sphi 0, %s116
      %s134 = sphi 0, %s134
      %s136 = sphi 0, %s134
      %s137 = sphi 0, %s136
      %s151 = sphi 0, %s137
      %s155 = sphi 0, %s155
      %s157 = sphi 0, %s155
      %s158 = sphi 0, %s157
      %s172 = sphi 0, %s158
      %s176 = sphi 0, %s176
      %s178 = sphi 0, %s176
      %s179 = sphi 0, %s178
      %s193 = sphi 0, %s179
      %s197 = sphi 0, %s197
      %s199 = sphi 0, %s197
      %s200 = sphi 0, %s199
      %s214 = sphi 0, %s200
      %s218 = sphi 0, %s218
      %s220 = sphi 0, %s218
      %s221 = sphi 0, %s220
      %s235 = sphi 0, %s221
      %s239 = sphi 0, %s239
      %s241 = sphi 0, %s239
      %s242 = sphi 0, %s241
      %s256 = sphi 0, %s242
      %s262 = sphi 0, %s264
      %s265 = sphi 0, %s262
      %s266 = sphi 0, %s265
      %s282 = sphi 0, %s266
      %s288 = sphi 0, %s290
      %s291 = sphi 0, %s288
      %s292 = sphi 0, %s291
      %s308 = sphi 0, %s292
    $region4: #{tpu_custom_call.1} parent=1 // loop_header_branch
      %35 = sbr.rel (%p33) target = $region8
    $region5: #{tpu_custom_call.1} parent=1 // loop_body
      %s37 = ssub.s32 %s32, 1
      %s38 = ssub.s32 %s32, 2
      %s39 = sadd.s32 %s32, 1
      %s40 = ssub.s32 %s32, %s39
      %p41 = scmp.eq.s32.totalorder %s40, 0
      %s43 = sadd.s32 %s42, 1
      %s44 = scalar_select %p41, %s42, %s43
      %p47 = pneg %p41
      %p48 = scmp.eq.s32.totalorder %s32, 1
      %p49 = por %p47, %p48
      %p50 = scmp.ne.s32.totalorder %s42, %s45
      %p51 = scmp.eq.s32.totalorder %s32, 0
      %p52 = por %p50, %p51
      %p53 = scmp.ne.s32.totalorder %s42, %s45
      %p54 = scmp.eq.s32.totalorder %s37, 1
      %p55 = por %p53, %p54
      %p56 = scmp.ne.s32.totalorder %s45, %s46
      %p57 = scmp.eq.s32.totalorder %s37, 0
      %p58 = por %p56, %p57
      %p59 = scmp.ne.s32.totalorder %s45, %s46
      %p60 = scmp.eq.s32.totalorder %s38, 1
      %p61 = por %p59, %p60
      %p63 = scmp.ne.s32.totalorder %s46, %s62
      %p64 = scmp.eq.s32.totalorder %s38, 0
      %p65 = por %p63, %p64
      %s66 = ssub.s32 %s32, %s39
      %p67 = scmp.eq.s32.totalorder %s66, 0
      %s69 = sadd.s32 %s68, 1
      %s70 = scalar_select %p67, %s68, %s69
      %p73 = pneg %p67
      %p74 = scmp.eq.s32.totalorder %s32, 1
      %p75 = por %p73, %p74
      %p76 = scmp.ne.s32.totalorder %s68, %s71
      %p77 = scmp.eq.s32.totalorder %s32, 0
      %p78 = por %p76, %p77
      %p79 = scmp.ne.s32.totalorder %s68, %s71
      %p80 = scmp.eq.s32.totalorder %s37, 1
      %p81 = por %p79, %p80
      %p82 = scmp.ne.s32.totalorder %s71, %s72
      %p83 = scmp.eq.s32.totalorder %s37, 0
      %p84 = por %p82, %p83
      %p85 = scmp.ne.s32.totalorder %s71, %s72
      %p86 = scmp.eq.s32.totalorder %s38, 1
      %p87 = por %p85, %p86
      %p89 = scmp.ne.s32.totalorder %s72, %s88
      %p90 = scmp.eq.s32.totalorder %s38, 0
      %p91 = por %p89, %p90
      %s93 = sadd.s32 %s92, 1
      %p96 = scmp.eq.s32.totalorder %s32, 1
      %p97 = scmp.ne.s32.totalorder %s92, %s94
      %p98 = scmp.eq.s32.totalorder %s32, 0
      %p99 = por %p97, %p98
      %p100 = scmp.ne.s32.totalorder %s92, %s94
      %p101 = scmp.eq.s32.totalorder %s37, 1
      %p102 = por %p100, %p101
      %p103 = scmp.ne.s32.totalorder %s94, %s95
      %p104 = scmp.eq.s32.totalorder %s37, 0
      %p105 = por %p103, %p104
      %p106 = scmp.ne.s32.totalorder %s94, %s95
      %p107 = scmp.eq.s32.totalorder %s38, 1
      %p108 = por %p106, %p107
      %p110 = scmp.ne.s32.totalorder %s95, %s109
      %p111 = scmp.eq.s32.totalorder %s38, 0
      %p112 = por %p110, %p111
      %s114 = sadd.s32 %s113, 1
      %p117 = scmp.eq.s32.totalorder %s32, 1
      %p118 = scmp.ne.s32.totalorder %s113, %s115
      %p119 = scmp.eq.s32.totalorder %s32, 0
      %p120 = por %p118, %p119
      %p121 = scmp.ne.s32.totalorder %s113, %s115
      %p122 = scmp.eq.s32.totalorder %s37, 1
      %p123 = por %p121, %p122
      %p124 = scmp.ne.s32.totalorder %s115, %s116
      %p125 = scmp.eq.s32.totalorder %s37, 0
      %p126 = por %p124, %p125
      %p127 = scmp.ne.s32.totalorder %s115, %s116
      %p128 = scmp.eq.s32.totalorder %s38, 1
      %p129 = por %p127, %p128
      %p131 = scmp.ne.s32.totalorder %s116, %s130
      %p132 = scmp.eq.s32.totalorder %s38, 0
      %p133 = por %p131, %p132
      %s135 = sadd.s32 %s134, 1
      %p138 = scmp.eq.s32.totalorder %s32, 1
      %p139 = scmp.ne.s32.totalorder %s134, %s136
      %p140 = scmp.eq.s32.totalorder %s32, 0
      %p141 = por %p139, %p140
      %p142 = scmp.ne.s32.totalorder %s134, %s136
      %p143 = scmp.eq.s32.totalorder %s37, 1
      %p144 = por %p142, %p143
      %p145 = scmp.ne.s32.totalorder %s136, %s137
      %p146 = scmp.eq.s32.totalorder %s37, 0
      %p147 = por %p145, %p146
      %p148 = scmp.ne.s32.totalorder %s136, %s137
      %p149 = scmp.eq.s32.totalorder %s38, 1
      %p150 = por %p148, %p149
      %p152 = scmp.ne.s32.totalorder %s137, %s151
      %p153 = scmp.eq.s32.totalorder %s38, 0
      %p154 = por %p152, %p153
      %s156 = sadd.s32 %s155, 1
      %p159 = scmp.eq.s32.totalorder %s32, 1
      %p160 = scmp.ne.s32.totalorder %s155, %s157
      %p161 = scmp.eq.s32.totalorder %s32, 0
      %p162 = por %p160, %p161
      %p163 = scmp.ne.s32.totalorder %s155, %s157
      %p164 = scmp.eq.s32.totalorder %s37, 1
      %p165 = por %p163, %p164
      %p166 = scmp.ne.s32.totalorder %s157, %s158
      %p167 = scmp.eq.s32.totalorder %s37, 0
      %p168 = por %p166, %p167
      %p169 = scmp.ne.s32.totalorder %s157, %s158
      %p170 = scmp.eq.s32.totalorder %s38, 1
      %p171 = por %p169, %p170
      %p173 = scmp.ne.s32.totalorder %s158, %s172
      %p174 = scmp.eq.s32.totalorder %s38, 0
      %p175 = por %p173, %p174
      %s177 = sadd.s32 %s176, 1
      %p180 = scmp.eq.s32.totalorder %s32, 1
      %p181 = scmp.ne.s32.totalorder %s176, %s178
      %p182 = scmp.eq.s32.totalorder %s32, 0
      %p183 = por %p181, %p182
      %p184 = scmp.ne.s32.totalorder %s176, %s178
      %p185 = scmp.eq.s32.totalorder %s37, 1
      %p186 = por %p184, %p185
      %p187 = scmp.ne.s32.totalorder %s178, %s179
      %p188 = scmp.eq.s32.totalorder %s37, 0
      %p189 = por %p187, %p188
      %p190 = scmp.ne.s32.totalorder %s178, %s179
      %p191 = scmp.eq.s32.totalorder %s38, 1
      %p192 = por %p190, %p191
      %p194 = scmp.ne.s32.totalorder %s179, %s193
      %p195 = scmp.eq.s32.totalorder %s38, 0
      %p196 = por %p194, %p195
      %s198 = sadd.s32 %s197, 1
      %p201 = scmp.eq.s32.totalorder %s32, 1
      %p202 = scmp.ne.s32.totalorder %s197, %s199
      %p203 = scmp.eq.s32.totalorder %s32, 0
      %p204 = por %p202, %p203
      %p205 = scmp.ne.s32.totalorder %s197, %s199
      %p206 = scmp.eq.s32.totalorder %s37, 1
      %p207 = por %p205, %p206
      %p208 = scmp.ne.s32.totalorder %s199, %s200
      %p209 = scmp.eq.s32.totalorder %s37, 0
      %p210 = por %p208, %p209
      %p211 = scmp.ne.s32.totalorder %s199, %s200
      %p212 = scmp.eq.s32.totalorder %s38, 1
      %p213 = por %p211, %p212
      %p215 = scmp.ne.s32.totalorder %s200, %s214
      %p216 = scmp.eq.s32.totalorder %s38, 0
      %p217 = por %p215, %p216
      %s219 = sadd.s32 %s218, 1
      %p222 = scmp.eq.s32.totalorder %s32, 1
      %p223 = scmp.ne.s32.totalorder %s218, %s220
      %p224 = scmp.eq.s32.totalorder %s32, 0
      %p225 = por %p223, %p224
      %p226 = scmp.ne.s32.totalorder %s218, %s220
      %p227 = scmp.eq.s32.totalorder %s37, 1
      %p228 = por %p226, %p227
      %p229 = scmp.ne.s32.totalorder %s220, %s221
      %p230 = scmp.eq.s32.totalorder %s37, 0
      %p231 = por %p229, %p230
      %p232 = scmp.ne.s32.totalorder %s220, %s221
      %p233 = scmp.eq.s32.totalorder %s38, 1
      %p234 = por %p232, %p233
      %p236 = scmp.ne.s32.totalorder %s221, %s235
      %p237 = scmp.eq.s32.totalorder %s38, 0
      %p238 = por %p236, %p237
      %s240 = sadd.s32 %s239, 1
      %p243 = scmp.eq.s32.totalorder %s32, 1
      %p244 = scmp.ne.s32.totalorder %s239, %s241
      %p245 = scmp.eq.s32.totalorder %s32, 0
      %p246 = por %p244, %p245
      %p247 = scmp.ne.s32.totalorder %s239, %s241
      %p248 = scmp.eq.s32.totalorder %s37, 1
      %p249 = por %p247, %p248
      %p250 = scmp.ne.s32.totalorder %s241, %s242
      %p251 = scmp.eq.s32.totalorder %s37, 0
      %p252 = por %p250, %p251
      %p253 = scmp.ne.s32.totalorder %s241, %s242
      %p254 = scmp.eq.s32.totalorder %s38, 1
      %p255 = por %p253, %p254
      %p257 = scmp.ne.s32.totalorder %s242, %s256
      %p258 = scmp.eq.s32.totalorder %s38, 0
      %p259 = por %p257, %p258
      %s260 = ssub.s32 %s32, %s39
      %p261 = scmp.eq.s32.totalorder %s260, 0
      %s263 = sadd.s32 %s262, 1
      %s264 = scalar_select %p261, %s262, %s263
      %p267 = pneg %p261
      %p268 = scmp.eq.s32.totalorder %s32, 1
      %p269 = por %p267, %p268
      %p270 = scmp.ne.s32.totalorder %s262, %s265
      %p271 = scmp.eq.s32.totalorder %s32, 0
      %p272 = por %p270, %p271
      %p273 = scmp.ne.s32.totalorder %s262, %s265
      %p274 = scmp.eq.s32.totalorder %s37, 1
      %p275 = por %p273, %p274
      %p276 = scmp.ne.s32.totalorder %s265, %s266
      %p277 = scmp.eq.s32.totalorder %s37, 0
      %p278 = por %p276, %p277
      %p279 = scmp.ne.s32.totalorder %s265, %s266
      %p280 = scmp.eq.s32.totalorder %s38, 1
      %p281 = por %p279, %p280
      %p283 = scmp.ne.s32.totalorder %s266, %s282
      %p284 = scmp.eq.s32.totalorder %s38, 0
      %p285 = por %p283, %p284
      %s286 = ssub.s32 %s32, %s39
      %p287 = scmp.eq.s32.totalorder %s286, 0
      %s289 = sadd.s32 %s288, 1
      %s290 = scalar_select %p287, %s288, %s289
      %p293 = pneg %p287
      %p294 = scmp.eq.s32.totalorder %s32, 1
      %p295 = por %p293, %p294
      %p296 = scmp.ne.s32.totalorder %s288, %s291
      %p297 = scmp.eq.s32.totalorder %s32, 0
      %p298 = por %p296, %p297
      %p299 = scmp.ne.s32.totalorder %s288, %s291
      %p300 = scmp.eq.s32.totalorder %s37, 1
      %p301 = por %p299, %p300
      %p302 = scmp.ne.s32.totalorder %s291, %s292
      %p303 = scmp.eq.s32.totalorder %s37, 0
      %p304 = por %p302, %p303
      %p305 = scmp.ne.s32.totalorder %s291, %s292
      %p306 = scmp.eq.s32.totalorder %s38, 1
      %p307 = por %p305, %p306
      %p309 = scmp.ne.s32.totalorder %s292, %s308
      %p310 = scmp.eq.s32.totalorder %s38, 0
      %p311 = por %p309, %p310
      %p312 = scmp.le.s32.totalorder 1, %s32
      %p313 = scmp.lt.s32.totalorder %s32, 3
      %p314 = pnand %p312, %p313
      %p315 = pneg %p314
      // Predicated region
      $region9: #{tpu_custom_call.1} parent=5 // pred_check
        _
      $region10: #{tpu_custom_call.1} parent=5 // pred_check_branch
        %317 = sbr.rel (%p314) target = $region12
      $region11: #{tpu_custom_call.1} parent=5 // pred_region
        %s318 = ssub.s32 %s32, 1
        // Predicated region
        $region13: #{tpu_custom_call.1} parent=11 // pred_check
          %p319 = pneg %p105
        $region14: #{tpu_custom_call.1} parent=11 // pred_check_branch
          %321 = sbr.rel (%p319) target = $region16
        $region15: #{tpu_custom_call.1} parent=11 // pred_region
          %s323 = ssub.s32 28672, 28672
          %324 = vsyncadd [#allocation6], %s323
          %s325 = sshll.u32 [#allocation7], 4
          %s326 = int_to_ptr.vmem [resolvable:$true] %s325
          %331 = dma.hbm_to_vmem [thread:$0]  %s2, 28672, %s326, [#allocation6], 256, 256, 16
        $region16: #{tpu_custom_call.1} parent=11 // pred_fallthru
          _
        // Predicated region
        $region17: #{tpu_custom_call.1} parent=11 // pred_check
          %p332 = pneg %p126
        $region18: #{tpu_custom_call.1} parent=11 // pred_check_branch
          %334 = sbr.rel (%p332) target = $region20
        $region19: #{tpu_custom_call.1} parent=11 // pred_region
          _
        $region20: #{tpu_custom_call.1} parent=11 // pred_fallthru
          _
        // Predicated region
        $region21: #{tpu_custom_call.1} parent=11 // pred_check
          %p335 = pneg %p147
        $region22: #{tpu_custom_call.1} parent=11 // pred_check_branch
          %337 = sbr.rel (%p335) target = $region24
        $region23: #{tpu_custom_call.1} parent=11 // pred_region
          %s339 = ssub.s32 4096, 4096
          %340 = vsyncadd [#allocation9], %s339
          %s341 = sshll.u32 [#allocation8], 4
          %s342 = int_to_ptr.vmem [resolvable:$true] %s341
          %347 = dma.hbm_to_vmem [thread:$0]  %s4, 4096, %s342, [#allocation9], 64, 64, 4
        $region24: #{tpu_custom_call.1} parent=11 // pred_fallthru
          _
        // Predicated region
        $region25: #{tpu_custom_call.1} parent=11 // pred_check
          %p348 = pneg %p168
        $region26: #{tpu_custom_call.1} parent=11 // pred_check_branch
          %350 = sbr.rel (%p348) target = $region28
        $region27: #{tpu_custom_call.1} parent=11 // pred_region
          _
        $region28: #{tpu_custom_call.1} parent=11 // pred_fallthru
          _
        // Predicated region
        $region29: #{tpu_custom_call.1} parent=11 // pred_check
          %p351 = pneg %p189
        $region30: #{tpu_custom_call.1} parent=11 // pred_check_branch
          %353 = sbr.rel (%p351) target = $region32
        $region31: #{tpu_custom_call.1} parent=11 // pred_region
          %s355 = ssub.s32 4096, 4096
          %356 = vsyncadd [#allocation9], %s355
          %s357 = sshll.u32 [#allocation10], 4
          %s358 = int_to_ptr.vmem [resolvable:$true] %s357
          %363 = dma.hbm_to_vmem [thread:$0]  %s6, 4096, %s358, [#allocation9], 256, 256, 16
        $region32: #{tpu_custom_call.1} parent=11 // pred_fallthru
          _
        // Predicated region
        $region33: #{tpu_custom_call.1} parent=11 // pred_check
          %p364 = pneg %p210
        $region34: #{tpu_custom_call.1} parent=11 // pred_check_branch
          %366 = sbr.rel (%p364) target = $region36
        $region35: #{tpu_custom_call.1} parent=11 // pred_region
          _
        $region36: #{tpu_custom_call.1} parent=11 // pred_fallthru
          _
        // Predicated region
        $region37: #{tpu_custom_call.1} parent=11 // pred_check
          %p367 = pneg %p231
        $region38: #{tpu_custom_call.1} parent=11 // pred_check_branch
          %369 = sbr.rel (%p367) target = $region40
        $region39: #{tpu_custom_call.1} parent=11 // pred_region
          %s371 = ssub.s32 28672, 28672
          %372 = vsyncadd [#allocation12], %s371
          %s373 = sshll.u32 [#allocation11], 4
          %s374 = int_to_ptr.vmem [resolvable:$true] %s373
          %379 = dma.hbm_to_vmem [thread:$0]  %s8, 28672, %s374, [#allocation12], 448, 448, 28
        $region40: #{tpu_custom_call.1} parent=11 // pred_fallthru
          _
        // Predicated region
        $region41: #{tpu_custom_call.1} parent=11 // pred_check
          %p380 = pneg %p252
        $region42: #{tpu_custom_call.1} parent=11 // pred_check_branch
          %382 = sbr.rel (%p380) target = $region44
        $region43: #{tpu_custom_call.1} parent=11 // pred_region
          _
        $region44: #{tpu_custom_call.1} parent=11 // pred_fallthru
          _
      $region12: #{tpu_custom_call.1} parent=5 // pred_fallthru
        _
      %p383 = scmp.lt.s32.totalorder %s32, 2
      // Predicated region
      $region45: #{tpu_custom_call.1} parent=5 // pred_check
        %p384 = pneg %p383
      $region46: #{tpu_custom_call.1} parent=5 // pred_check_branch
        %386 = sbr.rel (%p384) target = $region48
      $region47: #{tpu_custom_call.1} parent=5 // pred_region
        // Predicated region
        $region49: #{tpu_custom_call.1} parent=47 // pred_check
          %p387 = pneg %p52
        $region50: #{tpu_custom_call.1} parent=47 // pred_check_branch
          %389 = sbr.rel (%p387) target = $region52
        $region51: #{tpu_custom_call.1} parent=47 // pred_region
          %s390 = sand.u32 %s42, 1
          %s391 = scalar_lea.sflag [#allocation3], %s390
          %s392 = sand.u32 %s42, 1
          %s393 = smul.addr %s392, 28
          %s394 = scalar_lea.vmem [#allocation2], %s393
          %s396 = ssub.s32 448, 448
          %397 = vsyncadd %s391, %s396
          %s398 = smul.addr %s32, 7
          %s399 = smul.addr %s398, 64
          %s400 = scalar_lea.hbm %s0, %s399
          %s402 = sshll.u32 %s394, 4
          %s403 = int_to_ptr.vmem [resolvable:$true] %s402
          %405 = dma.hbm_to_vmem [thread:$0]  %s400, 448, %s403, %s391
        $region52: #{tpu_custom_call.1} parent=47 // pred_fallthru
          _
        // Predicated region
        $region53: #{tpu_custom_call.1} parent=47 // pred_check
          %p406 = pneg %p78
        $region54: #{tpu_custom_call.1} parent=47 // pred_check_branch
          %408 = sbr.rel (%p406) target = $region56
        $region55: #{tpu_custom_call.1} parent=47 // pred_region
          %s409 = sand.u32 %s32, 1
          %s410 = scalar_lea.sflag [#allocation6], %s409
          %s411 = sand.u32 %s68, 1
          %s412 = smul.addr %s411, 4
          %s413 = scalar_lea.vmem [#allocation5], %s412
          %s415 = ssub.s32 64, 64
          %416 = vsyncadd %s410, %s415
          %s417 = smul.addr %s32, 64
          %s418 = scalar_lea.hbm %s1, %s417
          %s420 = sshll.u32 %s413, 4
          %s421 = int_to_ptr.vmem [resolvable:$true] %s420
          %423 = dma.hbm_to_vmem [thread:$0]  %s418, 64, %s421, %s410
        $region56: #{tpu_custom_call.1} parent=47 // pred_fallthru
          _
      $region48: #{tpu_custom_call.1} parent=5 // pred_fallthru
        _
      %p424 = scmp.le.s32.totalorder 1, %s32
      %p425 = scmp.lt.s32.totalorder %s32, 3
      %p426 = pnand %p424, %p425
      %p427 = pneg %p426
      // Predicated region
      $region57: #{tpu_custom_call.1} parent=5 // pred_check
        _
      $region58: #{tpu_custom_call.1} parent=5 // pred_check_branch
        %429 = sbr.rel (%p426) target = $region60
      $region59: #{tpu_custom_call.1} parent=5 // pred_region
        %s430 = ssub.s32 %s32, 1
        %s431 = sand.u32 %s45, 1
        %s432 = scalar_lea.sflag [#allocation3], %s431
        %s433 = sand.u32 %s45, 1
        %s434 = smul.addr %s433, 28
        %s435 = scalar_lea.vmem [#allocation2], %s434
        // Predicated region
        $region61: #{tpu_custom_call.1} parent=59 // pred_check
          %p436 = pneg %p58
        $region62: #{tpu_custom_call.1} parent=59 // pred_check_branch
          %438 = sbr.rel (%p436) target = $region64
        $region63: #{tpu_custom_call.1} parent=59 // pred_region
          %439 = dma.done %s432, 448
        $region64: #{tpu_custom_call.1} parent=59 // pred_fallthru
          _
        %s440 = sand.u32 %s37, 1
        %s441 = scalar_lea.sflag [#allocation6], %s440
        %s442 = sand.u32 %s71, 1
        %s443 = smul.addr %s442, 4
        %s444 = scalar_lea.vmem [#allocation5], %s443
        // Predicated region
        $region65: #{tpu_custom_call.1} parent=59 // pred_check
          %p445 = pneg %p84
        $region66: #{tpu_custom_call.1} parent=59 // pred_check_branch
          %447 = sbr.rel (%p445) target = $region68
        $region67: #{tpu_custom_call.1} parent=59 // pred_region
          %448 = dma.done %s441, 64
        $region68: #{tpu_custom_call.1} parent=59 // pred_fallthru
          _
        // Predicated region
        $region69: #{tpu_custom_call.1} parent=59 // pred_check
          %p449 = pneg %p105
        $region70: #{tpu_custom_call.1} parent=59 // pred_check_branch
          %451 = sbr.rel (%p449) target = $region72
        $region71: #{tpu_custom_call.1} parent=59 // pred_region
          %452 = dma.done [#allocation6], 28672
        $region72: #{tpu_custom_call.1} parent=59 // pred_fallthru
          _
        // Predicated region
        $region73: #{tpu_custom_call.1} parent=59 // pred_check
          %p453 = pneg %p147
        $region74: #{tpu_custom_call.1} parent=59 // pred_check_branch
          %455 = sbr.rel (%p453) target = $region76
        $region75: #{tpu_custom_call.1} parent=59 // pred_region
          %456 = dma.done [#allocation9], 4096
        $region76: #{tpu_custom_call.1} parent=59 // pred_fallthru
          _
        // Predicated region
        $region77: #{tpu_custom_call.1} parent=59 // pred_check
          %p457 = pneg %p189
        $region78: #{tpu_custom_call.1} parent=59 // pred_check_branch
          %459 = sbr.rel (%p457) target = $region80
        $region79: #{tpu_custom_call.1} parent=59 // pred_region
          %460 = dma.done [#allocation9], 4096
        $region80: #{tpu_custom_call.1} parent=59 // pred_fallthru
          _
        // Predicated region
        $region81: #{tpu_custom_call.1} parent=59 // pred_check
          %p461 = pneg %p231
        $region82: #{tpu_custom_call.1} parent=59 // pred_check_branch
          %463 = sbr.rel (%p461) target = $region84
        $region83: #{tpu_custom_call.1} parent=59 // pred_region
          %464 = dma.done [#allocation12], 28672
        $region84: #{tpu_custom_call.1} parent=59 // pred_fallthru
          _
        %s465 = sand.u32 %s45, 1
        %s466 = scalar_lea.sflag [#allocation3], %s465
        %s467 = sand.u32 %s45, 1
        %s468 = smul.addr %s467, 28
        %s469 = scalar_lea.vmem [#allocation2], %s468
        %p470 = pneg %p58
        %p471 = pneg %p55
        %s472 = sand.u32 %s37, 1
        %s473 = scalar_lea.sflag [#allocation6], %s472
        %s474 = sand.u32 %s71, 1
        %s475 = smul.addr %s474, 4
        %s476 = scalar_lea.vmem [#allocation5], %s475
        %p477 = pneg %p84
        %p478 = pneg %p81
        %p479 = pneg %p105
        %p480 = pneg %p102
        %p481 = pneg %p126
        %p482 = pneg %p123
        %p483 = pneg %p147
        %p484 = pneg %p144
        %p485 = pneg %p168
        %p486 = pneg %p165
        %p487 = pneg %p189
        %p488 = pneg %p186
        %p489 = pneg %p210
        %p490 = pneg %p207
        %p491 = pneg %p231
        %p492 = pneg %p228
        %p493 = pneg %p252
        %p494 = pneg %p249
        %p495 = pneg %p278
        %p496 = pneg %p275
        %s497 = sand.u32 %s265, 1
        %s498 = scalar_lea.sflag [#allocation4], %s497
        %s499 = sand.u32 %s265, 1
        %s500 = smul.addr %s499, 28
        %s501 = scalar_lea.vmem [#allocation13], %s500
        %p502 = pneg %p304
        %p503 = pneg %p301
        %s504 = sand.u32 %s291, 1
        %s505 = scalar_lea.sflag [#allocation15], %s504
        %s506 = sand.u32 %s291, 1
        %s507 = smul.addr %s506, 8
        %s508 = scalar_lea.vmem [#allocation14], %s507
        %v510 = vld [vmem:[%s435] sm:$0xff]
        %v511 = vld [vmem:[%s435 + $0x8] sm:$0xff]
        %v512 = vld [vmem:[%s435 + $0x10] sm:$0xff]
        %v513 = vld [vmem:[%s435 + $0x18] sm:$0xf]
        %v514 = vld [vmem:[#allocation7] sm:$0xff]
        %v515 = vld [vmem:[#allocation7 + $0x8] sm:$0xff]
        %v516 = vld [vmem:[#allocation7 + $0x10] sm:$0xff]
        %v517 = vld [vmem:[#allocation7 + $0x18] sm:$0xff]
        %v518 = vld [vmem:[#allocation7 + $0x20] sm:$0xff]
        %v519 = vld [vmem:[#allocation7 + $0x28] sm:$0xff]
        %v520 = vld [vmem:[#allocation7 + $0x30] sm:$0xff]
        %v521 = vld [vmem:[#allocation7 + $0x38] sm:$0xff]
        %v522 = vld [vmem:[#allocation7 + $0x40] sm:$0xff]
        %v523 = vld [vmem:[#allocation7 + $0x48] sm:$0xff]
        %v524 = vld [vmem:[#allocation7 + $0x50] sm:$0xff]
        %v525 = vld [vmem:[#allocation7 + $0x58] sm:$0xff]
        %v526 = vld [vmem:[#allocation7 + $0x60] sm:$0xff]
        %v527 = vld [vmem:[#allocation7 + $0x68] sm:$0xff]
        %v528 = vld [vmem:[#allocation7 + $0x70] sm:$0xff]
        %v529 = vld [vmem:[#allocation7 + $0x78] sm:$0xff]
        %v530 = vld [vmem:[#allocation7 + $0x80] sm:$0xff]
        %v531 = vld [vmem:[#allocation7 + $0x88] sm:$0xff]
        %v532 = vld [vmem:[#allocation7 + $0x90] sm:$0xff]
        %v533 = vld [vmem:[#allocation7 + $0x98] sm:$0xff]
        %v534 = vld [vmem:[#allocation7 + $0xa0] sm:$0xff]
        %v535 = vld [vmem:[#allocation7 + $0xa8] sm:$0xff]
        %v536 = vld [vmem:[#allocation7 + $0xb0] sm:$0xff]
        %v537 = vld [vmem:[#allocation7 + $0xb8] sm:$0xff]
        %v538 = vld [vmem:[#allocation7 + $0xc0] sm:$0xff]
        %v539 = vld [vmem:[#allocation7 + $0xc8] sm:$0xff]
        %v540 = vld [vmem:[#allocation7 + $0xd0] sm:$0xff]
        %v541 = vld [vmem:[#allocation7 + $0xd8] sm:$0xff]
        %v542 = vld [vmem:[#allocation7 + $0xe0] sm:$0xff]
        %v543 = vld [vmem:[#allocation7 + $0xe8] sm:$0xff]
        %v544 = vld [vmem:[#allocation7 + $0xf0] sm:$0xff]
        %v545 = vld [vmem:[#allocation7 + $0xf8] sm:$0xff]
        %v546 = vld [vmem:[#allocation7 + $0x100] sm:$0xff]
        %v547 = vld [vmem:[#allocation7 + $0x108] sm:$0xff]
        %v548 = vld [vmem:[#allocation7 + $0x110] sm:$0xff]
        %v549 = vld [vmem:[#allocation7 + $0x118] sm:$0xff]
        %v550 = vld [vmem:[#allocation7 + $0x120] sm:$0xff]
        %v551 = vld [vmem:[#allocation7 + $0x128] sm:$0xff]
        %v552 = vld [vmem:[#allocation7 + $0x130] sm:$0xff]
        %v553 = vld [vmem:[#allocation7 + $0x138] sm:$0xff]
        %v554 = vld [vmem:[#allocation7 + $0x140] sm:$0xff]
        %v555 = vld [vmem:[#allocation7 + $0x148] sm:$0xff]
        %v556 = vld [vmem:[#allocation7 + $0x150] sm:$0xff]
        %v557 = vld [vmem:[#allocation7 + $0x158] sm:$0xff]
        %v558 = vld [vmem:[#allocation7 + $0x160] sm:$0xff]
        %v559 = vld [vmem:[#allocation7 + $0x168] sm:$0xff]
        %v560 = vld [vmem:[#allocation7 + $0x170] sm:$0xff]
        %v561 = vld [vmem:[#allocation7 + $0x178] sm:$0xff]
        %v562 = vld [vmem:[#allocation7 + $0x180] sm:$0xff]
        %v563 = vld [vmem:[#allocation7 + $0x188] sm:$0xff]
        %v564 = vld [vmem:[#allocation7 + $0x190] sm:$0xff]
        %v565 = vld [vmem:[#allocation7 + $0x198] sm:$0xff]
        %v566 = vld [vmem:[#allocation7 + $0x1a0] sm:$0xff]
        %v567 = vld [vmem:[#allocation7 + $0x1a8] sm:$0xff]
        %v568 = vld [vmem:[#allocation7 + $0x1b0] sm:$0xff]
        %v569 = vld [vmem:[#allocation7 + $0x1b8] sm:$0xff]
        %v570 = vld [vmem:[#allocation7 + $0x1c0] sm:$0xff]
        %v571 = vld [vmem:[#allocation7 + $0x1c8] sm:$0xff]
        %v572 = vld [vmem:[#allocation7 + $0x1d0] sm:$0xff]
        %v573 = vld [vmem:[#allocation7 + $0x1d8] sm:$0xff]
        %v574 = vld [vmem:[#allocation7 + $0x1e0] sm:$0xff]
        %v575 = vld [vmem:[#allocation7 + $0x1e8] sm:$0xff]
        %v576 = vld [vmem:[#allocation7 + $0x1f0] sm:$0xff]
        %v577 = vld [vmem:[#allocation7 + $0x1f8] sm:$0xff]
        %v578 = vld [vmem:[#allocation7 + $0x200] sm:$0xff]
        %v579 = vld [vmem:[#allocation7 + $0x208] sm:$0xff]
        %v580 = vld [vmem:[#allocation7 + $0x210] sm:$0xff]
        %v581 = vld [vmem:[#allocation7 + $0x218] sm:$0xff]
        %v582 = vld [vmem:[#allocation7 + $0x220] sm:$0xff]
        %v583 = vld [vmem:[#allocation7 + $0x228] sm:$0xff]
        %v584 = vld [vmem:[#allocation7 + $0x230] sm:$0xff]
        %v585 = vld [vmem:[#allocation7 + $0x238] sm:$0xff]
        %v586 = vld [vmem:[#allocation7 + $0x240] sm:$0xff]
        %v587 = vld [vmem:[#allocation7 + $0x248] sm:$0xff]
        %v588 = vld [vmem:[#allocation7 + $0x250] sm:$0xff]
        %v589 = vld [vmem:[#allocation7 + $0x258] sm:$0xff]
        %v590 = vld [vmem:[#allocation7 + $0x260] sm:$0xff]
        %v591 = vld [vmem:[#allocation7 + $0x268] sm:$0xff]
        %v592 = vld [vmem:[#allocation7 + $0x270] sm:$0xff]
        %v593 = vld [vmem:[#allocation7 + $0x278] sm:$0xff]
        %v594 = vld [vmem:[#allocation7 + $0x280] sm:$0xff]
        %v595 = vld [vmem:[#allocation7 + $0x288] sm:$0xff]
        %v596 = vld [vmem:[#allocation7 + $0x290] sm:$0xff]
        %v597 = vld [vmem:[#allocation7 + $0x298] sm:$0xff]
        %v598 = vld [vmem:[#allocation7 + $0x2a0] sm:$0xff]
        %v599 = vld [vmem:[#allocation7 + $0x2a8] sm:$0xff]
        %v600 = vld [vmem:[#allocation7 + $0x2b0] sm:$0xff]
        %v601 = vld [vmem:[#allocation7 + $0x2b8] sm:$0xff]
        %v602 = vld [vmem:[#allocation7 + $0x2c0] sm:$0xff]
        %v603 = vld [vmem:[#allocation7 + $0x2c8] sm:$0xff]
        %v604 = vld [vmem:[#allocation7 + $0x2d0] sm:$0xff]
        %v605 = vld [vmem:[#allocation7 + $0x2d8] sm:$0xff]
        %v606 = vld [vmem:[#allocation7 + $0x2e0] sm:$0xff]
        %v607 = vld [vmem:[#allocation7 + $0x2e8] sm:$0xff]
        %v608 = vld [vmem:[#allocation7 + $0x2f0] sm:$0xff]
        %v609 = vld [vmem:[#allocation7 + $0x2f8] sm:$0xff]
        %v610 = vld [vmem:[#allocation7 + $0x300] sm:$0xff]
        %v611 = vld [vmem:[#allocation7 + $0x308] sm:$0xff]
        %v612 = vld [vmem:[#allocation7 + $0x310] sm:$0xff]
        %v613 = vld [vmem:[#allocation7 + $0x318] sm:$0xff]
        %v614 = vld [vmem:[#allocation7 + $0x320] sm:$0xff]
        %v615 = vld [vmem:[#allocation7 + $0x328] sm:$0xff]
        %v616 = vld [vmem:[#allocation7 + $0x330] sm:$0xff]
        %v617 = vld [vmem:[#allocation7 + $0x338] sm:$0xff]
        %v618 = vld [vmem:[#allocation7 + $0x340] sm:$0xff]
        %v619 = vld [vmem:[#allocation7 + $0x348] sm:$0xff]
        %v620 = vld [vmem:[#allocation7 + $0x350] sm:$0xff]
        %v621 = vld [vmem:[#allocation7 + $0x358] sm:$0xff]
        %v622 = vld [vmem:[#allocation7 + $0x360] sm:$0xff]
        %v623 = vld [vmem:[#allocation7 + $0x368] sm:$0xff]
        %v624 = vld [vmem:[#allocation7 + $0x370] sm:$0xff]
        %v625 = vld [vmem:[#allocation7 + $0x378] sm:$0xff]
        %v626 = vld [vmem:[#allocation7 + $0x380] sm:$0xff]
        %v627 = vld [vmem:[#allocation7 + $0x388] sm:$0xff]
        %v628 = vld [vmem:[#allocation7 + $0x390] sm:$0xff]
        %v629 = vld [vmem:[#allocation7 + $0x398] sm:$0xff]
        %v630 = vld [vmem:[#allocation7 + $0x3a0] sm:$0xff]
        %v631 = vld [vmem:[#allocation7 + $0x3a8] sm:$0xff]
        %v632 = vld [vmem:[#allocation7 + $0x3b0] sm:$0xff]
        %v633 = vld [vmem:[#allocation7 + $0x3b8] sm:$0xff]
        %v634 = vld [vmem:[#allocation7 + $0x3c0] sm:$0xff]
        %v635 = vld [vmem:[#allocation7 + $0x3c8] sm:$0xff]
        %v636 = vld [vmem:[#allocation7 + $0x3d0] sm:$0xff]
        %v637 = vld [vmem:[#allocation7 + $0x3d8] sm:$0xff]
        %v638 = vld [vmem:[#allocation7 + $0x3e0] sm:$0xff]
        %v639 = vld [vmem:[#allocation7 + $0x3e8] sm:$0xff]
        %v640 = vld [vmem:[#allocation7 + $0x3f0] sm:$0xff]
        %v641 = vld [vmem:[#allocation7 + $0x3f8] sm:$0xff]
        %v642 = vld [vmem:[#allocation7 + $0x400] sm:$0xff]
        %v643 = vld [vmem:[#allocation7 + $0x408] sm:$0xff]
        %v644 = vld [vmem:[#allocation7 + $0x410] sm:$0xff]
        %v645 = vld [vmem:[#allocation7 + $0x418] sm:$0xff]
        %v646 = vld [vmem:[#allocation7 + $0x420] sm:$0xff]
        %v647 = vld [vmem:[#allocation7 + $0x428] sm:$0xff]
        %v648 = vld [vmem:[#allocation7 + $0x430] sm:$0xff]
        %v649 = vld [vmem:[#allocation7 + $0x438] sm:$0xff]
        %v650 = vld [vmem:[#allocation7 + $0x440] sm:$0xff]
        %v651 = vld [vmem:[#allocation7 + $0x448] sm:$0xff]
        %v652 = vld [vmem:[#allocation7 + $0x450] sm:$0xff]
        %v653 = vld [vmem:[#allocation7 + $0x458] sm:$0xff]
        %v654 = vld [vmem:[#allocation7 + $0x460] sm:$0xff]
        %v655 = vld [vmem:[#allocation7 + $0x468] sm:$0xff]
        %v656 = vld [vmem:[#allocation7 + $0x470] sm:$0xff]
        %v657 = vld [vmem:[#allocation7 + $0x478] sm:$0xff]
        %v658 = vld [vmem:[#allocation7 + $0x480] sm:$0xff]
        %v659 = vld [vmem:[#allocation7 + $0x488] sm:$0xff]
        %v660 = vld [vmem:[#allocation7 + $0x490] sm:$0xff]
        %v661 = vld [vmem:[#allocation7 + $0x498] sm:$0xff]
        %v662 = vld [vmem:[#allocation7 + $0x4a0] sm:$0xff]
        %v663 = vld [vmem:[#allocation7 + $0x4a8] sm:$0xff]
        %v664 = vld [vmem:[#allocation7 + $0x4b0] sm:$0xff]
        %v665 = vld [vmem:[#allocation7 + $0x4b8] sm:$0xff]
        %v666 = vld [vmem:[#allocation7 + $0x4c0] sm:$0xff]
        %v667 = vld [vmem:[#allocation7 + $0x4c8] sm:$0xff]
        %v668 = vld [vmem:[#allocation7 + $0x4d0] sm:$0xff]
        %v669 = vld [vmem:[#allocation7 + $0x4d8] sm:$0xff]
        %v670 = vld [vmem:[#allocation7 + $0x4e0] sm:$0xff]
        %v671 = vld [vmem:[#allocation7 + $0x4e8] sm:$0xff]
        %v672 = vld [vmem:[#allocation7 + $0x4f0] sm:$0xff]
        %v673 = vld [vmem:[#allocation7 + $0x4f8] sm:$0xff]
        %v674 = vld [vmem:[#allocation7 + $0x500] sm:$0xff]
        %v675 = vld [vmem:[#allocation7 + $0x508] sm:$0xff]
        %v676 = vld [vmem:[#allocation7 + $0x510] sm:$0xff]
        %v677 = vld [vmem:[#allocation7 + $0x518] sm:$0xff]
        %v678 = vld [vmem:[#allocation7 + $0x520] sm:$0xff]
        %v679 = vld [vmem:[#allocation7 + $0x528] sm:$0xff]
        %v680 = vld [vmem:[#allocation7 + $0x530] sm:$0xff]
        %v681 = vld [vmem:[#allocation7 + $0x538] sm:$0xff]
        %v682 = vld [vmem:[#allocation7 + $0x540] sm:$0xff]
        %v683 = vld [vmem:[#allocation7 + $0x548] sm:$0xff]
        %v684 = vld [vmem:[#allocation7 + $0x550] sm:$0xff]
        %v685 = vld [vmem:[#allocation7 + $0x558] sm:$0xff]
        %v686 = vld [vmem:[#allocation7 + $0x560] sm:$0xff]
        %v687 = vld [vmem:[#allocation7 + $0x568] sm:$0xff]
        %v688 = vld [vmem:[#allocation7 + $0x570] sm:$0xff]
        %v689 = vld [vmem:[#allocation7 + $0x578] sm:$0xff]
        %v690 = vld [vmem:[#allocation7 + $0x580] sm:$0xff]
        %v691 = vld [vmem:[#allocation7 + $0x588] sm:$0xff]
        %v692 = vld [vmem:[#allocation7 + $0x590] sm:$0xff]
        %v693 = vld [vmem:[#allocation7 + $0x598] sm:$0xff]
        %v694 = vld [vmem:[#allocation7 + $0x5a0] sm:$0xff]
        %v695 = vld [vmem:[#allocation7 + $0x5a8] sm:$0xff]
        %v696 = vld [vmem:[#allocation7 + $0x5b0] sm:$0xff]
        %v697 = vld [vmem:[#allocation7 + $0x5b8] sm:$0xff]
        %v698 = vld [vmem:[#allocation7 + $0x5c0] sm:$0xff]
        %v699 = vld [vmem:[#allocation7 + $0x5c8] sm:$0xff]
        %v700 = vld [vmem:[#allocation7 + $0x5d0] sm:$0xff]
        %v701 = vld [vmem:[#allocation7 + $0x5d8] sm:$0xff]
        %v702 = vld [vmem:[#allocation7 + $0x5e0] sm:$0xff]
        %v703 = vld [vmem:[#allocation7 + $0x5e8] sm:$0xff]
        %v704 = vld [vmem:[#allocation7 + $0x5f0] sm:$0xff]
        %v705 = vld [vmem:[#allocation7 + $0x5f8] sm:$0xff]
        %v706 = vld [vmem:[#allocation7 + $0x600] sm:$0xff]
        %v707 = vld [vmem:[#allocation7 + $0x608] sm:$0xff]
        %v708 = vld [vmem:[#allocation7 + $0x610] sm:$0xff]
        %v709 = vld [vmem:[#allocation7 + $0x618] sm:$0xff]
        %v710 = vld [vmem:[#allocation7 + $0x620] sm:$0xff]
        %v711 = vld [vmem:[#allocation7 + $0x628] sm:$0xff]
        %v712 = vld [vmem:[#allocation7 + $0x630] sm:$0xff]
        %v713 = vld [vmem:[#allocation7 + $0x638] sm:$0xff]
        %v714 = vld [vmem:[#allocation7 + $0x640] sm:$0xff]
        %v715 = vld [vmem:[#allocation7 + $0x648] sm:$0xff]
        %v716 = vld [vmem:[#allocation7 + $0x650] sm:$0xff]
        %v717 = vld [vmem:[#allocation7 + $0x658] sm:$0xff]
        %v718 = vld [vmem:[#allocation7 + $0x660] sm:$0xff]
        %v719 = vld [vmem:[#allocation7 + $0x668] sm:$0xff]
        %v720 = vld [vmem:[#allocation7 + $0x670] sm:$0xff]
        %v721 = vld [vmem:[#allocation7 + $0x678] sm:$0xff]
        %v722 = vld [vmem:[#allocation7 + $0x680] sm:$0xff]
        %v723 = vld [vmem:[#allocation7 + $0x688] sm:$0xff]
        %v724 = vld [vmem:[#allocation7 + $0x690] sm:$0xff]
        %v725 = vld [vmem:[#allocation7 + $0x698] sm:$0xff]
        %v726 = vld [vmem:[#allocation7 + $0x6a0] sm:$0xff]
        %v727 = vld [vmem:[#allocation7 + $0x6a8] sm:$0xff]
        %v728 = vld [vmem:[#allocation7 + $0x6b0] sm:$0xff]
        %v729 = vld [vmem:[#allocation7 + $0x6b8] sm:$0xff]
        %v730 = vld [vmem:[#allocation7 + $0x6c0] sm:$0xff]
        %v731 = vld [vmem:[#allocation7 + $0x6c8] sm:$0xff]
        %v732 = vld [vmem:[#allocation7 + $0x6d0] sm:$0xff]
        %v733 = vld [vmem:[#allocation7 + $0x6d8] sm:$0xff]
        %v734 = vld [vmem:[#allocation7 + $0x6e0] sm:$0xff]
        %v735 = vld [vmem:[#allocation7 + $0x6e8] sm:$0xff]
        %v736 = vld [vmem:[#allocation7 + $0x6f0] sm:$0xff]
        %v737 = vld [vmem:[#allocation7 + $0x6f8] sm:$0xff]
        %v738 = vld [vmem:[%s3] sm:$0xf]
        %v740 = vlaneseq
        %v741 = vshrl.u32 %v740, 7
        %v742 = vsub.s32 0, %v741
        %v743 = vrot.slane %v738, %v742
        %v744 = vlaneseq
        %v745 = vshrl.u32 %v744, 7
        %v746 = vsub.s32 1, %v745
        %v747 = vrot.slane %v738, %v746
        %v748 = vlaneseq
        %v749 = vshrl.u32 %v748, 7
        %v750 = vsub.s32 2, %v749
        %v751 = vrot.slane %v738, %v750
        %v752 = vlaneseq
        %v753 = vshrl.u32 %v752, 7
        %v754 = vsub.s32 3, %v753
        %v755 = vrot.slane %v738, %v754
        %v764 = vunpack.c.l.b16 %v510
        %v765 = vunpack.c.h.b16 %v510
        %v766 = vunpack.c.l.b16 %v511
        %v767 = vunpack.c.h.b16 %v511
        %v768 = vunpack.c.l.b16 %v512
        %v769 = vunpack.c.h.b16 %v512
        %v770 = vunpack.c.l.b16 %v513
        %v771 = vpack.c.b16 %v764, %v764
        %v772 = vpack.c.b16 %v765, %v765
        %v773 = vpack.c.b16 %v766, %v766
        %v774 = vpack.c.b16 %v767, %v767
        %v775 = vpack.c.b16 %v768, %v768
        %v776 = vpack.c.b16 %v769, %v769
        %v777 = vpack.c.b16 %v770, %v770
        %v1009 = vunpack.c.l.b16 %v514
        %v1010 = vunpack.c.h.b16 %v514
        %v1011 = vunpack.c.l.b16 %v515
        %v1012 = vunpack.c.h.b16 %v515
        %v1013 = vunpack.c.l.b16 %v516
        %v1014 = vunpack.c.h.b16 %v516
        %v1015 = vunpack.c.l.b16 %v517
        %v1016 = vunpack.c.h.b16 %v517
        %v1017 = vunpack.c.l.b16 %v518
        %v1018 = vunpack.c.h.b16 %v518
        %v1019 = vunpack.c.l.b16 %v519
        %v1020 = vunpack.c.h.b16 %v519
        %v1021 = vunpack.c.l.b16 %v520
        %v1022 = vunpack.c.h.b16 %v520
        %v1023 = vunpack.c.l.b16 %v521
        %v1024 = vunpack.c.h.b16 %v521
        %v1025 = vunpack.c.l.b16 %v522
        %v1026 = vunpack.c.h.b16 %v522
        %v1027 = vunpack.c.l.b16 %v523
        %v1028 = vunpack.c.h.b16 %v523
        %v1029 = vunpack.c.l.b16 %v524
        %v1030 = vunpack.c.h.b16 %v524
        %v1031 = vunpack.c.l.b16 %v525
        %v1032 = vunpack.c.h.b16 %v525
        %v1033 = vunpack.c.l.b16 %v526
        %v1034 = vunpack.c.h.b16 %v526
        %v1035 = vunpack.c.l.b16 %v527
        %v1036 = vunpack.c.h.b16 %v527
        %v1037 = vunpack.c.l.b16 %v528
        %v1038 = vunpack.c.h.b16 %v528
        %v1039 = vunpack.c.l.b16 %v529
        %v1040 = vunpack.c.h.b16 %v529
        %v1041 = vunpack.c.l.b16 %v530
        %v1042 = vunpack.c.h.b16 %v530
        %v1043 = vunpack.c.l.b16 %v531
        %v1044 = vunpack.c.h.b16 %v531
        %v1045 = vunpack.c.l.b16 %v532
        %v1046 = vunpack.c.h.b16 %v532
        %v1047 = vunpack.c.l.b16 %v533
        %v1048 = vunpack.c.h.b16 %v533
        %v1049 = vunpack.c.l.b16 %v534
        %v1050 = vunpack.c.h.b16 %v534
        %v1051 = vunpack.c.l.b16 %v535
        %v1052 = vunpack.c.h.b16 %v535
        %v1053 = vunpack.c.l.b16 %v536
        %v1054 = vunpack.c.h.b16 %v536
        %v1055 = vunpack.c.l.b16 %v537
        %v1056 = vunpack.c.h.b16 %v537
        %v1057 = vunpack.c.l.b16 %v538
        %v1058 = vunpack.c.h.b16 %v538
        %v1059 = vunpack.c.l.b16 %v539
        %v1060 = vunpack.c.h.b16 %v539
        %v1061 = vunpack.c.l.b16 %v540
        %v1062 = vunpack.c.h.b16 %v540
        %v1063 = vunpack.c.l.b16 %v541
        %v1064 = vunpack.c.h.b16 %v541
        %v1065 = vunpack.c.l.b16 %v542
        %v1066 = vunpack.c.h.b16 %v542
        %v1067 = vunpack.c.l.b16 %v543
        %v1068 = vunpack.c.h.b16 %v543
        %v1069 = vunpack.c.l.b16 %v544
        %v1070 = vunpack.c.h.b16 %v544
        %v1071 = vunpack.c.l.b16 %v545
        %v1072 = vunpack.c.h.b16 %v545
        %v1073 = vunpack.c.l.b16 %v546
        %v1074 = vunpack.c.h.b16 %v546
        %v1075 = vunpack.c.l.b16 %v547
        %v1076 = vunpack.c.h.b16 %v547
        %v1077 = vunpack.c.l.b16 %v548
        %v1078 = vunpack.c.h.b16 %v548
        %v1079 = vunpack.c.l.b16 %v549
        %v1080 = vunpack.c.h.b16 %v549
        %v1081 = vunpack.c.l.b16 %v550
        %v1082 = vunpack.c.h.b16 %v550
        %v1083 = vunpack.c.l.b16 %v551
        %v1084 = vunpack.c.h.b16 %v551
        %v1085 = vunpack.c.l.b16 %v552
        %v1086 = vunpack.c.h.b16 %v552
        %v1087 = vunpack.c.l.b16 %v553
        %v1088 = vunpack.c.h.b16 %v553
        %v1089 = vunpack.c.l.b16 %v554
        %v1090 = vunpack.c.h.b16 %v554
        %v1091 = vunpack.c.l.b16 %v555
        %v1092 = vunpack.c.h.b16 %v555
        %v1093 = vunpack.c.l.b16 %v556
        %v1094 = vunpack.c.h.b16 %v556
        %v1095 = vunpack.c.l.b16 %v557
        %v1096 = vunpack.c.h.b16 %v557
        %v1097 = vunpack.c.l.b16 %v558
        %v1098 = vunpack.c.h.b16 %v558
        %v1099 = vunpack.c.l.b16 %v559
        %v1100 = vunpack.c.h.b16 %v559
        %v1101 = vunpack.c.l.b16 %v560
        %v1102 = vunpack.c.h.b16 %v560
        %v1103 = vunpack.c.l.b16 %v561
        %v1104 = vunpack.c.h.b16 %v561
        %v1105 = vunpack.c.l.b16 %v562
        %v1106 = vunpack.c.h.b16 %v562
        %v1107 = vunpack.c.l.b16 %v563
        %v1108 = vunpack.c.h.b16 %v563
        %v1109 = vunpack.c.l.b16 %v564
        %v1110 = vunpack.c.h.b16 %v564
        %v1111 = vunpack.c.l.b16 %v565
        %v1112 = vunpack.c.h.b16 %v565
        %v1113 = vunpack.c.l.b16 %v566
        %v1114 = vunpack.c.h.b16 %v566
        %v1115 = vunpack.c.l.b16 %v567
        %v1116 = vunpack.c.h.b16 %v567
        %v1117 = vunpack.c.l.b16 %v568
        %v1118 = vunpack.c.h.b16 %v568
        %v1119 = vunpack.c.l.b16 %v569
        %v1120 = vunpack.c.h.b16 %v569
        %v1121 = vunpack.c.l.b16 %v570
        %v1122 = vunpack.c.h.b16 %v570
        %v1123 = vunpack.c.l.b16 %v571
        %v1124 = vunpack.c.h.b16 %v571
        %v1125 = vunpack.c.l.b16 %v572
        %v1126 = vunpack.c.h.b16 %v572
        %v1127 = vunpack.c.l.b16 %v573
        %v1128 = vunpack.c.h.b16 %v573
        %v1129 = vunpack.c.l.b16 %v574
        %v1130 = vunpack.c.h.b16 %v574
        %v1131 = vunpack.c.l.b16 %v575
        %v1132 = vunpack.c.h.b16 %v575
        %v1133 = vunpack.c.l.b16 %v576
        %v1134 = vunpack.c.h.b16 %v576
        %v1135 = vunpack.c.l.b16 %v577
        %v1136 = vunpack.c.h.b16 %v577
        %v1137 = vunpack.c.l.b16 %v578
        %v1138 = vunpack.c.h.b16 %v578
        %v1139 = vunpack.c.l.b16 %v579
        %v1140 = vunpack.c.h.b16 %v579
        %v1141 = vunpack.c.l.b16 %v580
        %v1142 = vunpack.c.h.b16 %v580
        %v1143 = vunpack.c.l.b16 %v581
        %v1144 = vunpack.c.h.b16 %v581
        %v1145 = vunpack.c.l.b16 %v582
        %v1146 = vunpack.c.h.b16 %v582
        %v1147 = vunpack.c.l.b16 %v583
        %v1148 = vunpack.c.h.b16 %v583
        %v1149 = vunpack.c.l.b16 %v584
        %v1150 = vunpack.c.h.b16 %v584
        %v1151 = vunpack.c.l.b16 %v585
        %v1152 = vunpack.c.h.b16 %v585
        %v1153 = vunpack.c.l.b16 %v586
        %v1154 = vunpack.c.h.b16 %v586
        %v1155 = vunpack.c.l.b16 %v587
        %v1156 = vunpack.c.h.b16 %v587
        %v1157 = vunpack.c.l.b16 %v588
        %v1158 = vunpack.c.h.b16 %v588
        %v1159 = vunpack.c.l.b16 %v589
        %v1160 = vunpack.c.h.b16 %v589
        %v1161 = vunpack.c.l.b16 %v590
        %v1162 = vunpack.c.h.b16 %v590
        %v1163 = vunpack.c.l.b16 %v591
        %v1164 = vunpack.c.h.b16 %v591
        %v1165 = vunpack.c.l.b16 %v592
        %v1166 = vunpack.c.h.b16 %v592
        %v1167 = vunpack.c.l.b16 %v593
        %v1168 = vunpack.c.h.b16 %v593
        %v1169 = vunpack.c.l.b16 %v594
        %v1170 = vunpack.c.h.b16 %v594
        %v1171 = vunpack.c.l.b16 %v595
        %v1172 = vunpack.c.h.b16 %v595
        %v1173 = vunpack.c.l.b16 %v596
        %v1174 = vunpack.c.h.b16 %v596
        %v1175 = vunpack.c.l.b16 %v597
        %v1176 = vunpack.c.h.b16 %v597
        %v1177 = vunpack.c.l.b16 %v598
        %v1178 = vunpack.c.h.b16 %v598
        %v1179 = vunpack.c.l.b16 %v599
        %v1180 = vunpack.c.h.b16 %v599
        %v1181 = vunpack.c.l.b16 %v600
        %v1182 = vunpack.c.h.b16 %v600
        %v1183 = vunpack.c.l.b16 %v601
        %v1184 = vunpack.c.h.b16 %v601
        %v1185 = vunpack.c.l.b16 %v602
        %v1186 = vunpack.c.h.b16 %v602
        %v1187 = vunpack.c.l.b16 %v603
        %v1188 = vunpack.c.h.b16 %v603
        %v1189 = vunpack.c.l.b16 %v604
        %v1190 = vunpack.c.h.b16 %v604
        %v1191 = vunpack.c.l.b16 %v605
        %v1192 = vunpack.c.h.b16 %v605
        %v1193 = vunpack.c.l.b16 %v606
        %v1194 = vunpack.c.h.b16 %v606
        %v1195 = vunpack.c.l.b16 %v607
        %v1196 = vunpack.c.h.b16 %v607
        %v1197 = vunpack.c.l.b16 %v608
        %v1198 = vunpack.c.h.b16 %v608
        %v1199 = vunpack.c.l.b16 %v609
        %v1200 = vunpack.c.h.b16 %v609
        %v1201 = vunpack.c.l.b16 %v610
        %v1202 = vunpack.c.h.b16 %v610
        %v1203 = vunpack.c.l.b16 %v611
        %v1204 = vunpack.c.h.b16 %v611
        %v1205 = vunpack.c.l.b16 %v612
        %v1206 = vunpack.c.h.b16 %v612
        %v1207 = vunpack.c.l.b16 %v613
        %v1208 = vunpack.c.h.b16 %v613
        %v1209 = vunpack.c.l.b16 %v614
        %v1210 = vunpack.c.h.b16 %v614
        %v1211 = vunpack.c.l.b16 %v615
        %v1212 = vunpack.c.h.b16 %v615
        %v1213 = vunpack.c.l.b16 %v616
        %v1214 = vunpack.c.h.b16 %v616
        %v1215 = vunpack.c.l.b16 %v617
        %v1216 = vunpack.c.h.b16 %v617
        %v1217 = vunpack.c.l.b16 %v618
        %v1218 = vunpack.c.h.b16 %v618
        %v1219 = vunpack.c.l.b16 %v619
        %v1220 = vunpack.c.h.b16 %v619
        %v1221 = vunpack.c.l.b16 %v620
        %v1222 = vunpack.c.h.b16 %v620
        %v1223 = vunpack.c.l.b16 %v621
        %v1224 = vunpack.c.h.b16 %v621
        %v1225 = vunpack.c.l.b16 %v622
        %v1226 = vunpack.c.h.b16 %v622
        %v1227 = vunpack.c.l.b16 %v623
        %v1228 = vunpack.c.h.b16 %v623
        %v1229 = vunpack.c.l.b16 %v624
        %v1230 = vunpack.c.h.b16 %v624
        %v1231 = vunpack.c.l.b16 %v625
        %v1232 = vunpack.c.h.b16 %v625
        %v1233 = vunpack.c.l.b16 %v626
        %v1234 = vunpack.c.h.b16 %v626
        %v1235 = vunpack.c.l.b16 %v627
        %v1236 = vunpack.c.h.b16 %v627
        %v1237 = vunpack.c.l.b16 %v628
        %v1238 = vunpack.c.h.b16 %v628
        %v1239 = vunpack.c.l.b16 %v629
        %v1240 = vunpack.c.h.b16 %v629
        %v1241 = vunpack.c.l.b16 %v630
        %v1242 = vunpack.c.h.b16 %v630
        %v1243 = vunpack.c.l.b16 %v631
        %v1244 = vunpack.c.h.b16 %v631
        %v1245 = vunpack.c.l.b16 %v632
        %v1246 = vunpack.c.h.b16 %v632
        %v1247 = vunpack.c.l.b16 %v633
        %v1248 = vunpack.c.h.b16 %v633
        %v1249 = vunpack.c.l.b16 %v634
        %v1250 = vunpack.c.h.b16 %v634
        %v1251 = vunpack.c.l.b16 %v635
        %v1252 = vunpack.c.h.b16 %v635
        %v1253 = vunpack.c.l.b16 %v636
        %v1254 = vunpack.c.h.b16 %v636
        %v1255 = vunpack.c.l.b16 %v637
        %v1256 = vunpack.c.h.b16 %v637
        %v1257 = vunpack.c.l.b16 %v638
        %v1258 = vunpack.c.h.b16 %v638
        %v1259 = vunpack.c.l.b16 %v639
        %v1260 = vunpack.c.h.b16 %v639
        %v1261 = vunpack.c.l.b16 %v640
        %v1262 = vunpack.c.h.b16 %v640
        %v1263 = vunpack.c.l.b16 %v641
        %v1264 = vunpack.c.h.b16 %v641
        %v1265 = vunpack.c.l.b16 %v642
        %v1266 = vunpack.c.h.b16 %v642
        %v1267 = vunpack.c.l.b16 %v643
        %v1268 = vunpack.c.h.b16 %v643
        %v1269 = vunpack.c.l.b16 %v644
        %v1270 = vunpack.c.h.b16 %v644
        %v1271 = vunpack.c.l.b16 %v645
        %v1272 = vunpack.c.h.b16 %v645
        %v1273 = vunpack.c.l.b16 %v646
        %v1274 = vunpack.c.h.b16 %v646
        %v1275 = vunpack.c.l.b16 %v647
        %v1276 = vunpack.c.h.b16 %v647
        %v1277 = vunpack.c.l.b16 %v648
        %v1278 = vunpack.c.h.b16 %v648
        %v1279 = vunpack.c.l.b16 %v649
        %v1280 = vunpack.c.h.b16 %v649
        %v1281 = vunpack.c.l.b16 %v650
        %v1282 = vunpack.c.h.b16 %v650
        %v1283 = vunpack.c.l.b16 %v651
        %v1284 = vunpack.c.h.b16 %v651
        %v1285 = vunpack.c.l.b16 %v652
        %v1286 = vunpack.c.h.b16 %v652
        %v1287 = vunpack.c.l.b16 %v653
        %v1288 = vunpack.c.h.b16 %v653
        %v1289 = vunpack.c.l.b16 %v654
        %v1290 = vunpack.c.h.b16 %v654
        %v1291 = vunpack.c.l.b16 %v655
        %v1292 = vunpack.c.h.b16 %v655
        %v1293 = vunpack.c.l.b16 %v656
        %v1294 = vunpack.c.h.b16 %v656
        %v1295 = vunpack.c.l.b16 %v657
        %v1296 = vunpack.c.h.b16 %v657
        %v1297 = vunpack.c.l.b16 %v658
        %v1298 = vunpack.c.h.b16 %v658
        %v1299 = vunpack.c.l.b16 %v659
        %v1300 = vunpack.c.h.b16 %v659
        %v1301 = vunpack.c.l.b16 %v660
        %v1302 = vunpack.c.h.b16 %v660
        %v1303 = vunpack.c.l.b16 %v661
        %v1304 = vunpack.c.h.b16 %v661
        %v1305 = vunpack.c.l.b16 %v662
        %v1306 = vunpack.c.h.b16 %v662
        %v1307 = vunpack.c.l.b16 %v663
        %v1308 = vunpack.c.h.b16 %v663
        %v1309 = vunpack.c.l.b16 %v664
        %v1310 = vunpack.c.h.b16 %v664
        %v1311 = vunpack.c.l.b16 %v665
        %v1312 = vunpack.c.h.b16 %v665
        %v1313 = vunpack.c.l.b16 %v666
        %v1314 = vunpack.c.h.b16 %v666
        %v1315 = vunpack.c.l.b16 %v667
        %v1316 = vunpack.c.h.b16 %v667
        %v1317 = vunpack.c.l.b16 %v668
        %v1318 = vunpack.c.h.b16 %v668
        %v1319 = vunpack.c.l.b16 %v669
        %v1320 = vunpack.c.h.b16 %v669
        %v1321 = vunpack.c.l.b16 %v670
        %v1322 = vunpack.c.h.b16 %v670
        %v1323 = vunpack.c.l.b16 %v671
        %v1324 = vunpack.c.h.b16 %v671
        %v1325 = vunpack.c.l.b16 %v672
        %v1326 = vunpack.c.h.b16 %v672
        %v1327 = vunpack.c.l.b16 %v673
        %v1328 = vunpack.c.h.b16 %v673
        %v1329 = vunpack.c.l.b16 %v674
        %v1330 = vunpack.c.h.b16 %v674
        %v1331 = vunpack.c.l.b16 %v675
        %v1332 = vunpack.c.h.b16 %v675
        %v1333 = vunpack.c.l.b16 %v676
        %v1334 = vunpack.c.h.b16 %v676
        %v1335 = vunpack.c.l.b16 %v677
        %v1336 = vunpack.c.h.b16 %v677
        %v1337 = vunpack.c.l.b16 %v678
        %v1338 = vunpack.c.h.b16 %v678
        %v1339 = vunpack.c.l.b16 %v679
        %v1340 = vunpack.c.h.b16 %v679
        %v1341 = vunpack.c.l.b16 %v680
        %v1342 = vunpack.c.h.b16 %v680
        %v1343 = vunpack.c.l.b16 %v681
        %v1344 = vunpack.c.h.b16 %v681
        %v1345 = vunpack.c.l.b16 %v682
        %v1346 = vunpack.c.h.b16 %v682
        %v1347 = vunpack.c.l.b16 %v683
        %v1348 = vunpack.c.h.b16 %v683
        %v1349 = vunpack.c.l.b16 %v684
        %v1350 = vunpack.c.h.b16 %v684
        %v1351 = vunpack.c.l.b16 %v685
        %v1352 = vunpack.c.h.b16 %v685
        %v1353 = vunpack.c.l.b16 %v686
        %v1354 = vunpack.c.h.b16 %v686
        %v1355 = vunpack.c.l.b16 %v687
        %v1356 = vunpack.c.h.b16 %v687
        %v1357 = vunpack.c.l.b16 %v688
        %v1358 = vunpack.c.h.b16 %v688
        %v1359 = vunpack.c.l.b16 %v689
        %v1360 = vunpack.c.h.b16 %v689
        %v1361 = vunpack.c.l.b16 %v690
        %v1362 = vunpack.c.h.b16 %v690
        %v1363 = vunpack.c.l.b16 %v691
        %v1364 = vunpack.c.h.b16 %v691
        %v1365 = vunpack.c.l.b16 %v692
        %v1366 = vunpack.c.h.b16 %v692
        %v1367 = vunpack.c.l.b16 %v693
        %v1368 = vunpack.c.h.b16 %v693
        %v1369 = vunpack.c.l.b16 %v694
        %v1370 = vunpack.c.h.b16 %v694
        %v1371 = vunpack.c.l.b16 %v695
        %v1372 = vunpack.c.h.b16 %v695
        %v1373 = vunpack.c.l.b16 %v696
        %v1374 = vunpack.c.h.b16 %v696
        %v1375 = vunpack.c.l.b16 %v697
        %v1376 = vunpack.c.h.b16 %v697
        %v1377 = vunpack.c.l.b16 %v698
        %v1378 = vunpack.c.h.b16 %v698
        %v1379 = vunpack.c.l.b16 %v699
        %v1380 = vunpack.c.h.b16 %v699
        %v1381 = vunpack.c.l.b16 %v700
        %v1382 = vunpack.c.h.b16 %v700
        %v1383 = vunpack.c.l.b16 %v701
        %v1384 = vunpack.c.h.b16 %v701
        %v1385 = vunpack.c.l.b16 %v702
        %v1386 = vunpack.c.h.b16 %v702
        %v1387 = vunpack.c.l.b16 %v703
        %v1388 = vunpack.c.h.b16 %v703
        %v1389 = vunpack.c.l.b16 %v704
        %v1390 = vunpack.c.h.b16 %v704
        %v1391 = vunpack.c.l.b16 %v705
        %v1392 = vunpack.c.h.b16 %v705
        %v1393 = vunpack.c.l.b16 %v706
        %v1394 = vunpack.c.h.b16 %v706
        %v1395 = vunpack.c.l.b16 %v707
        %v1396 = vunpack.c.h.b16 %v707
        %v1397 = vunpack.c.l.b16 %v708
        %v1398 = vunpack.c.h.b16 %v708
        %v1399 = vunpack.c.l.b16 %v709
        %v1400 = vunpack.c.h.b16 %v709
        %v1401 = vunpack.c.l.b16 %v710
        %v1402 = vunpack.c.h.b16 %v710
        %v1403 = vunpack.c.l.b16 %v711
        %v1404 = vunpack.c.h.b16 %v711
        %v1405 = vunpack.c.l.b16 %v712
        %v1406 = vunpack.c.h.b16 %v712
        %v1407 = vunpack.c.l.b16 %v713
        %v1408 = vunpack.c.h.b16 %v713
        %v1409 = vunpack.c.l.b16 %v714
        %v1410 = vunpack.c.h.b16 %v714
        %v1411 = vunpack.c.l.b16 %v715
        %v1412 = vunpack.c.h.b16 %v715
        %v1413 = vunpack.c.l.b16 %v716
        %v1414 = vunpack.c.h.b16 %v716
        %v1415 = vunpack.c.l.b16 %v717
        %v1416 = vunpack.c.h.b16 %v717
        %v1417 = vunpack.c.l.b16 %v718
        %v1418 = vunpack.c.h.b16 %v718
        %v1419 = vunpack.c.l.b16 %v719
        %v1420 = vunpack.c.h.b16 %v719
        %v1421 = vunpack.c.l.b16 %v720
        %v1422 = vunpack.c.h.b16 %v720
        %v1423 = vunpack.c.l.b16 %v721
        %v1424 = vunpack.c.h.b16 %v721
        %v1425 = vunpack.c.l.b16 %v722
        %v1426 = vunpack.c.h.b16 %v722
        %v1427 = vunpack.c.l.b16 %v723
        %v1428 = vunpack.c.h.b16 %v723
        %v1429 = vunpack.c.l.b16 %v724
        %v1430 = vunpack.c.h.b16 %v724
        %v1431 = vunpack.c.l.b16 %v725
        %v1432 = vunpack.c.h.b16 %v725
        %v1433 = vunpack.c.l.b16 %v726
        %v1434 = vunpack.c.h.b16 %v726
        %v1435 = vunpack.c.l.b16 %v727
        %v1436 = vunpack.c.h.b16 %v727
        %v1437 = vunpack.c.l.b16 %v728
        %v1438 = vunpack.c.h.b16 %v728
        %v1439 = vunpack.c.l.b16 %v729
        %v1440 = vunpack.c.h.b16 %v729
        %v1441 = vunpack.c.l.b16 %v730
        %v1442 = vunpack.c.h.b16 %v730
        %v1443 = vunpack.c.l.b16 %v731
        %v1444 = vunpack.c.h.b16 %v731
        %v1445 = vunpack.c.l.b16 %v732
        %v1446 = vunpack.c.h.b16 %v732
        %v1447 = vunpack.c.l.b16 %v733
        %v1448 = vunpack.c.h.b16 %v733
        %v1449 = vunpack.c.l.b16 %v734
        %v1450 = vunpack.c.h.b16 %v734
        %v1451 = vunpack.c.l.b16 %v735
        %v1452 = vunpack.c.h.b16 %v735
        %v1453 = vunpack.c.l.b16 %v736
        %v1454 = vunpack.c.h.b16 %v736
        %v1455 = vunpack.c.l.b16 %v737
        %v1456 = vunpack.c.h.b16 %v737
        %v1457 = vpack.c.b16 %v1013, %v1009
        %v1458 = vpack.c.b16 %v1014, %v1010
        %v1459 = vpack.c.b16 %v1015, %v1011
        %v1460 = vpack.c.b16 %v1016, %v1012
        %v1461 = vpack.c.b16 %v1021, %v1017
        %v1462 = vpack.c.b16 %v1022, %v1018
        %v1463 = vpack.c.b16 %v1023, %v1019
        %v1464 = vpack.c.b16 %v1024, %v1020
        %v1465 = vpack.c.b16 %v1029, %v1025
        %v1466 = vpack.c.b16 %v1030, %v1026
        %v1467 = vpack.c.b16 %v1031, %v1027
        %v1468 = vpack.c.b16 %v1032, %v1028
        %v1469 = vpack.c.b16 %v1037, %v1033
        %v1470 = vpack.c.b16 %v1038, %v1034
        %v1471 = vpack.c.b16 %v1039, %v1035
        %v1472 = vpack.c.b16 %v1040, %v1036
        %v1473 = vpack.c.b16 %v1045, %v1041
        %v1474 = vpack.c.b16 %v1046, %v1042
        %v1475 = vpack.c.b16 %v1047, %v1043
        %v1476 = vpack.c.b16 %v1048, %v1044
        %v1477 = vpack.c.b16 %v1053, %v1049
        %v1478 = vpack.c.b16 %v1054, %v1050
        %v1479 = vpack.c.b16 %v1055, %v1051
        %v1480 = vpack.c.b16 %v1056, %v1052
        %v1481 = vpack.c.b16 %v1061, %v1057
        %v1482 = vpack.c.b16 %v1062, %v1058
        %v1483 = vpack.c.b16 %v1063, %v1059
        %v1484 = vpack.c.b16 %v1064, %v1060
        %v1485 = vpack.c.b16 %v1069, %v1065
        %v1486 = vpack.c.b16 %v1070, %v1066
        %v1487 = vpack.c.b16 %v1071, %v1067
        %v1488 = vpack.c.b16 %v1072, %v1068
        %v1489 = vpack.c.b16 %v1077, %v1073
        %v1490 = vpack.c.b16 %v1078, %v1074
        %v1491 = vpack.c.b16 %v1079, %v1075
        %v1492 = vpack.c.b16 %v1080, %v1076
        %v1493 = vpack.c.b16 %v1085, %v1081
        %v1494 = vpack.c.b16 %v1086, %v1082
        %v1495 = vpack.c.b16 %v1087, %v1083
        %v1496 = vpack.c.b16 %v1088, %v1084
        %v1497 = vpack.c.b16 %v1093, %v1089
        %v1498 = vpack.c.b16 %v1094, %v1090
        %v1499 = vpack.c.b16 %v1095, %v1091
        %v1500 = vpack.c.b16 %v1096, %v1092
        %v1501 = vpack.c.b16 %v1101, %v1097
        %v1502 = vpack.c.b16 %v1102, %v1098
        %v1503 = vpack.c.b16 %v1103, %v1099
        %v1504 = vpack.c.b16 %v1104, %v1100
        %v1505 = vpack.c.b16 %v1109, %v1105
        %v1506 = vpack.c.b16 %v1110, %v1106
        %v1507 = vpack.c.b16 %v1111, %v1107
        %v1508 = vpack.c.b16 %v1112, %v1108
        %v1509 = vpack.c.b16 %v1117, %v1113
        %v1510 = vpack.c.b16 %v1118, %v1114
        %v1511 = vpack.c.b16 %v1119, %v1115
        %v1512 = vpack.c.b16 %v1120, %v1116
        %v1513 = vpack.c.b16 %v1125, %v1121
        %v1514 = vpack.c.b16 %v1126, %v1122
        %v1515 = vpack.c.b16 %v1127, %v1123
        %v1516 = vpack.c.b16 %v1128, %v1124
        %v1517 = vpack.c.b16 %v1133, %v1129
        %v1518 = vpack.c.b16 %v1134, %v1130
        %v1519 = vpack.c.b16 %v1135, %v1131
        %v1520 = vpack.c.b16 %v1136, %v1132
        %v1521 = vpack.c.b16 %v1141, %v1137
        %v1522 = vpack.c.b16 %v1142, %v1138
        %v1523 = vpack.c.b16 %v1143, %v1139
        %v1524 = vpack.c.b16 %v1144, %v1140
        %v1525 = vpack.c.b16 %v1149, %v1145
        %v1526 = vpack.c.b16 %v1150, %v1146
        %v1527 = vpack.c.b16 %v1151, %v1147
        %v1528 = vpack.c.b16 %v1152, %v1148
        %v1529 = vpack.c.b16 %v1157, %v1153
        %v1530 = vpack.c.b16 %v1158, %v1154
        %v1531 = vpack.c.b16 %v1159, %v1155
        %v1532 = vpack.c.b16 %v1160, %v1156
        %v1533 = vpack.c.b16 %v1165, %v1161
        %v1534 = vpack.c.b16 %v1166, %v1162
        %v1535 = vpack.c.b16 %v1167, %v1163
        %v1536 = vpack.c.b16 %v1168, %v1164
        %v1537 = vpack.c.b16 %v1173, %v1169
        %v1538 = vpack.c.b16 %v1174, %v1170
        %v1539 = vpack.c.b16 %v1175, %v1171
        %v1540 = vpack.c.b16 %v1176, %v1172
        %v1541 = vpack.c.b16 %v1181, %v1177
        %v1542 = vpack.c.b16 %v1182, %v1178
        %v1543 = vpack.c.b16 %v1183, %v1179
        %v1544 = vpack.c.b16 %v1184, %v1180
        %v1545 = vpack.c.b16 %v1189, %v1185
        %v1546 = vpack.c.b16 %v1190, %v1186
        %v1547 = vpack.c.b16 %v1191, %v1187
        %v1548 = vpack.c.b16 %v1192, %v1188
        %v1549 = vpack.c.b16 %v1197, %v1193
        %v1550 = vpack.c.b16 %v1198, %v1194
        %v1551 = vpack.c.b16 %v1199, %v1195
        %v1552 = vpack.c.b16 %v1200, %v1196
        %v1553 = vpack.c.b16 %v1205, %v1201
        %v1554 = vpack.c.b16 %v1206, %v1202
        %v1555 = vpack.c.b16 %v1207, %v1203
        %v1556 = vpack.c.b16 %v1208, %v1204
        %v1557 = vpack.c.b16 %v1213, %v1209
        %v1558 = vpack.c.b16 %v1214, %v1210
        %v1559 = vpack.c.b16 %v1215, %v1211
        %v1560 = vpack.c.b16 %v1216, %v1212
        %v1561 = vpack.c.b16 %v1221, %v1217
        %v1562 = vpack.c.b16 %v1222, %v1218
        %v1563 = vpack.c.b16 %v1223, %v1219
        %v1564 = vpack.c.b16 %v1224, %v1220
        %v1565 = vpack.c.b16 %v1229, %v1225
        %v1566 = vpack.c.b16 %v1230, %v1226
        %v1567 = vpack.c.b16 %v1231, %v1227
        %v1568 = vpack.c.b16 %v1232, %v1228
        %v1569 = vpack.c.b16 %v1237, %v1233
        %v1570 = vpack.c.b16 %v1238, %v1234
        %v1571 = vpack.c.b16 %v1239, %v1235
        %v1572 = vpack.c.b16 %v1240, %v1236
        %v1573 = vpack.c.b16 %v1245, %v1241
        %v1574 = vpack.c.b16 %v1246, %v1242
        %v1575 = vpack.c.b16 %v1247, %v1243
        %v1576 = vpack.c.b16 %v1248, %v1244
        %v1577 = vpack.c.b16 %v1253, %v1249
        %v1578 = vpack.c.b16 %v1254, %v1250
        %v1579 = vpack.c.b16 %v1255, %v1251
        %v1580 = vpack.c.b16 %v1256, %v1252
        %v1581 = vpack.c.b16 %v1261, %v1257
        %v1582 = vpack.c.b16 %v1262, %v1258
        %v1583 = vpack.c.b16 %v1263, %v1259
        %v1584 = vpack.c.b16 %v1264, %v1260
        %v1585 = vpack.c.b16 %v1269, %v1265
        %v1586 = vpack.c.b16 %v1270, %v1266
        %v1587 = vpack.c.b16 %v1271, %v1267
        %v1588 = vpack.c.b16 %v1272, %v1268
        %v1589 = vpack.c.b16 %v1277, %v1273
        %v1590 = vpack.c.b16 %v1278, %v1274
        %v1591 = vpack.c.b16 %v1279, %v1275
        %v1592 = vpack.c.b16 %v1280, %v1276
        %v1593 = vpack.c.b16 %v1285, %v1281
        %v1594 = vpack.c.b16 %v1286, %v1282
        %v1595 = vpack.c.b16 %v1287, %v1283
        %v1596 = vpack.c.b16 %v1288, %v1284
        %v1597 = vpack.c.b16 %v1293, %v1289
        %v1598 = vpack.c.b16 %v1294, %v1290
        %v1599 = vpack.c.b16 %v1295, %v1291
        %v1600 = vpack.c.b16 %v1296, %v1292
        %v1601 = vpack.c.b16 %v1301, %v1297
        %v1602 = vpack.c.b16 %v1302, %v1298
        %v1603 = vpack.c.b16 %v1303, %v1299
        %v1604 = vpack.c.b16 %v1304, %v1300
        %v1605 = vpack.c.b16 %v1309, %v1305
        %v1606 = vpack.c.b16 %v1310, %v1306
        %v1607 = vpack.c.b16 %v1311, %v1307
        %v1608 = vpack.c.b16 %v1312, %v1308
        %v1609 = vpack.c.b16 %v1317, %v1313
        %v1610 = vpack.c.b16 %v1318, %v1314
        %v1611 = vpack.c.b16 %v1319, %v1315
        %v1612 = vpack.c.b16 %v1320, %v1316
        %v1613 = vpack.c.b16 %v1325, %v1321
        %v1614 = vpack.c.b16 %v1326, %v1322
        %v1615 = vpack.c.b16 %v1327, %v1323
        %v1616 = vpack.c.b16 %v1328, %v1324
        %v1617 = vpack.c.b16 %v1333, %v1329
        %v1618 = vpack.c.b16 %v1334, %v1330
        %v1619 = vpack.c.b16 %v1335, %v1331
        %v1620 = vpack.c.b16 %v1336, %v1332
        %v1621 = vpack.c.b16 %v1341, %v1337
        %v1622 = vpack.c.b16 %v1342, %v1338
        %v1623 = vpack.c.b16 %v1343, %v1339
        %v1624 = vpack.c.b16 %v1344, %v1340
        %v1625 = vpack.c.b16 %v1349, %v1345
        %v1626 = vpack.c.b16 %v1350, %v1346
        %v1627 = vpack.c.b16 %v1351, %v1347
        %v1628 = vpack.c.b16 %v1352, %v1348
        %v1629 = vpack.c.b16 %v1357, %v1353
        %v1630 = vpack.c.b16 %v1358, %v1354
        %v1631 = vpack.c.b16 %v1359, %v1355
        %v1632 = vpack.c.b16 %v1360, %v1356
        %v1633 = vpack.c.b16 %v1365, %v1361
        %v1634 = vpack.c.b16 %v1366, %v1362
        %v1635 = vpack.c.b16 %v1367, %v1363
        %v1636 = vpack.c.b16 %v1368, %v1364
        %v1637 = vpack.c.b16 %v1373, %v1369
        %v1638 = vpack.c.b16 %v1374, %v1370
        %v1639 = vpack.c.b16 %v1375, %v1371
        %v1640 = vpack.c.b16 %v1376, %v1372
        %v1641 = vpack.c.b16 %v1381, %v1377
        %v1642 = vpack.c.b16 %v1382, %v1378
        %v1643 = vpack.c.b16 %v1383, %v1379
        %v1644 = vpack.c.b16 %v1384, %v1380
        %v1645 = vpack.c.b16 %v1389, %v1385
        %v1646 = vpack.c.b16 %v1390, %v1386
        %v1647 = vpack.c.b16 %v1391, %v1387
        %v1648 = vpack.c.b16 %v1392, %v1388
        %v1649 = vpack.c.b16 %v1397, %v1393
        %v1650 = vpack.c.b16 %v1398, %v1394
        %v1651 = vpack.c.b16 %v1399, %v1395
        %v1652 = vpack.c.b16 %v1400, %v1396
        %v1653 = vpack.c.b16 %v1405, %v1401
        %v1654 = vpack.c.b16 %v1406, %v1402
        %v1655 = vpack.c.b16 %v1407, %v1403
        %v1656 = vpack.c.b16 %v1408, %v1404
        %v1657 = vpack.c.b16 %v1413, %v1409
        %v1658 = vpack.c.b16 %v1414, %v1410
        %v1659 = vpack.c.b16 %v1415, %v1411
        %v1660 = vpack.c.b16 %v1416, %v1412
        %v1661 = vpack.c.b16 %v1421, %v1417
        %v1662 = vpack.c.b16 %v1422, %v1418
        %v1663 = vpack.c.b16 %v1423, %v1419
        %v1664 = vpack.c.b16 %v1424, %v1420
        %v1665 = vpack.c.b16 %v1429, %v1425
        %v1666 = vpack.c.b16 %v1430, %v1426
        %v1667 = vpack.c.b16 %v1431, %v1427
        %v1668 = vpack.c.b16 %v1432, %v1428
        %v1669 = vpack.c.b16 %v1437, %v1433
        %v1670 = vpack.c.b16 %v1438, %v1434
        %v1671 = vpack.c.b16 %v1439, %v1435
        %v1672 = vpack.c.b16 %v1440, %v1436
        %v1673 = vpack.c.b16 %v1445, %v1441
        %v1674 = vpack.c.b16 %v1446, %v1442
        %v1675 = vpack.c.b16 %v1447, %v1443
        %v1676 = vpack.c.b16 %v1448, %v1444
        %v1677 = vpack.c.b16 %v1453, %v1449
        %v1678 = vpack.c.b16 %v1454, %v1450
        %v1679 = vpack.c.b16 %v1455, %v1451
        %v1680 = vpack.c.b16 %v1456, %v1452
        %1905 = vmatprep.subr.bf16.mxu0 %v1458
        %1906 = vmatpush1.bf16.msra.mxu0 %v1457
        %1907 = vmatprep.subr.bf16.mxu0 %v1462
        %1908 = vmatpush1.bf16.msra.mxu0 %v1461
        %1909 = vmatprep.subr.bf16.mxu0 %v1466
        %1910 = vmatpush1.bf16.msra.mxu0 %v1465
        %1911 = vmatprep.subr.bf16.mxu0 %v1470
        %1912 = vmatpush1.bf16.msra.mxu0 %v1469
        %1913 = vmatprep.subr.bf16.mxu0 %v1474
        %1914 = vmatpush1.bf16.msra.mxu0 %v1473
        %1915 = vmatprep.subr.bf16.mxu0 %v1478
        %1916 = vmatpush1.bf16.msra.mxu0 %v1477
        %1917 = vmatprep.subr.bf16.mxu0 %v1482
        %1918 = vmatpush1.bf16.msra.mxu0 %v1481
        %1919 = vmatprep.subr.bf16.mxu0 %v1486
        %1920 = vmatpush1.bf16.msra.mxu0 %v1485
        %1921 = vmatprep.subr.bf16.mxu0 %v1490
        %1922 = vmatpush1.bf16.msra.mxu0 %v1489
        %1923 = vmatprep.subr.bf16.mxu0 %v1494
        %1924 = vmatpush1.bf16.msra.mxu0 %v1493
        %1925 = vmatprep.subr.bf16.mxu0 %v1498
        %1926 = vmatpush1.bf16.msra.mxu0 %v1497
        %1927 = vmatprep.subr.bf16.mxu0 %v1502
        %1928 = vmatpush1.bf16.msra.mxu0 %v1501
        %1929 = vmatprep.subr.bf16.mxu0 %v1506
        %1930 = vmatpush1.bf16.msra.mxu0 %v1505
        %1931 = vmatprep.subr.bf16.mxu0 %v1510
        %1932 = vmatpush1.bf16.msra.mxu0 %v1509
        %1933 = vmatprep.subr.bf16.mxu0 %v1514
        %1934 = vmatpush1.bf16.msra.mxu0 %v1513
        %1935 = vmatprep.subr.bf16.mxu0 %v1518
        %1936 = vmatpush1.bf16.msra.mxu0 %v1517
        %1937 = vmatprep.mubr.bf16.mxu0 %v772
        %1938 = vmatmul.mubr.bf16.gmra.mrb[0].mxu0 %v771
        %v1939 = vpop.f32.mrb[0].mxu0
        %v1940 = vadd.f32 %v743, %v1939
        %v1941 = vpop.f32.mrb[0].mxu0
        %v1942 = vadd.f32 %v747, %v1941
        %v1943 = vpop.f32.mrb[0].mxu0
        %v1944 = vpop.f32.mrb[0].mxu0
        %1945 = vdwg.mxu0
        %1946 = vmatprep.subr.bf16.mxu0 %v1522
        %1947 = vmatpush1.bf16.msra.mxu0 %v1521
        %1948 = vmatprep.subr.bf16.mxu0 %v1526
        %1949 = vmatpush1.bf16.msra.mxu0 %v1525
        %1950 = vmatprep.subr.bf16.mxu0 %v1530
        %1951 = vmatpush1.bf16.msra.mxu0 %v1529
        %1952 = vmatprep.subr.bf16.mxu0 %v1534
        %1953 = vmatpush1.bf16.msra.mxu0 %v1533
        %1954 = vmatprep.subr.bf16.mxu0 %v1538
        %1955 = vmatpush1.bf16.msra.mxu0 %v1537
        %1956 = vmatprep.subr.bf16.mxu0 %v1542
        %1957 = vmatpush1.bf16.msra.mxu0 %v1541
        %1958 = vmatprep.subr.bf16.mxu0 %v1546
        %1959 = vmatpush1.bf16.msra.mxu0 %v1545
        %1960 = vmatprep.subr.bf16.mxu0 %v1550
        %1961 = vmatpush1.bf16.msra.mxu0 %v1549
        %1962 = vmatprep.subr.bf16.mxu0 %v1554
        %1963 = vmatpush1.bf16.msra.mxu0 %v1553
        %1964 = vmatprep.subr.bf16.mxu0 %v1558
        %1965 = vmatpush1.bf16.msra.mxu0 %v1557
        %1966 = vmatprep.subr.bf16.mxu0 %v1562
        %1967 = vmatpush1.bf16.msra.mxu0 %v1561
        %1968 = vmatprep.subr.bf16.mxu0 %v1566
        %1969 = vmatpush1.bf16.msra.mxu0 %v1565
        %1970 = vmatprep.subr.bf16.mxu0 %v1570
        %1971 = vmatpush1.bf16.msra.mxu0 %v1569
        %1972 = vmatprep.subr.bf16.mxu0 %v1574
        %1973 = vmatpush1.bf16.msra.mxu0 %v1573
        %1974 = vmatprep.subr.bf16.mxu0 %v1578
        %1975 = vmatpush1.bf16.msra.mxu0 %v1577
        %1976 = vmatprep.subr.bf16.mxu0 %v1582
        %1977 = vmatpush1.bf16.msra.mxu0 %v1581
        %1978 = vmatprep.mubr.bf16.mxu0 %v774
        %1979 = vmatmul.mubr.bf16.gmra.mrb[0].mxu0 %v773
        %v1980 = vpop.f32.mrb[0].mxu0
        %v1981 = vadd.f32 %v1940, %v1980
        %v1982 = vpop.f32.mrb[0].mxu0
        %v1983 = vadd.f32 %v1942, %v1982
        %v1984 = vpop.f32.mrb[0].mxu0
        %v1985 = vpop.f32.mrb[0].mxu0
        %1986 = vdwg.mxu0
        %1987 = vmatprep.subr.bf16.mxu0 %v1586
        %1988 = vmatpush1.bf16.msra.mxu0 %v1585
        %1989 = vmatprep.subr.bf16.mxu0 %v1590
        %1990 = vmatpush1.bf16.msra.mxu0 %v1589
        %1991 = vmatprep.subr.bf16.mxu0 %v1594
        %1992 = vmatpush1.bf16.msra.mxu0 %v1593
        %1993 = vmatprep.subr.bf16.mxu0 %v1598
        %1994 = vmatpush1.bf16.msra.mxu0 %v1597
        %1995 = vmatprep.subr.bf16.mxu0 %v1602
        %1996 = vmatpush1.bf16.msra.mxu0 %v1601
        %1997 = vmatprep.subr.bf16.mxu0 %v1606
        %1998 = vmatpush1.bf16.msra.mxu0 %v1605
        %1999 = vmatprep.subr.bf16.mxu0 %v1610
        %2000 = vmatpush1.bf16.msra.mxu0 %v1609
        %2001 = vmatprep.subr.bf16.mxu0 %v1614
        %2002 = vmatpush1.bf16.msra.mxu0 %v1613
        %2003 = vmatprep.subr.bf16.mxu0 %v1618
        %2004 = vmatpush1.bf16.msra.mxu0 %v1617
        %2005 = vmatprep.subr.bf16.mxu0 %v1622
        %2006 = vmatpush1.bf16.msra.mxu0 %v1621
        %2007 = vmatprep.subr.bf16.mxu0 %v1626
        %2008 = vmatpush1.bf16.msra.mxu0 %v1625
        %2009 = vmatprep.subr.bf16.mxu0 %v1630
        %2010 = vmatpush1.bf16.msra.mxu0 %v1629
        %2011 = vmatprep.subr.bf16.mxu0 %v1634
        %2012 = vmatpush1.bf16.msra.mxu0 %v1633
        %2013 = vmatprep.subr.bf16.mxu0 %v1638
        %2014 = vmatpush1.bf16.msra.mxu0 %v1637
        %2015 = vmatprep.subr.bf16.mxu0 %v1642
        %2016 = vmatpush1.bf16.msra.mxu0 %v1641
        %2017 = vmatprep.subr.bf16.mxu0 %v1646
        %2018 = vmatpush1.bf16.msra.mxu0 %v1645
        %2019 = vmatprep.mubr.bf16.mxu0 %v776
        %2020 = vmatmul.mubr.bf16.gmra.mrb[0].mxu0 %v775
        %v2021 = vpop.f32.mrb[0].mxu0
        %v2022 = vadd.f32 %v1981, %v2021
        %v2023 = vpop.f32.mrb[0].mxu0
        %v2024 = vadd.f32 %v1983, %v2023
        %v2025 = vpop.f32.mrb[0].mxu0
        %v2026 = vpop.f32.mrb[0].mxu0
        %2027 = vdwg.mxu0
        %2028 = vmatprep.subr.bf16.mxu0 %v1650
        %2029 = vmatpush1.bf16.msra.mxu0 %v1649
        %2030 = vmatprep.subr.bf16.mxu0 %v1654
        %2031 = vmatpush1.bf16.msra.mxu0 %v1653
        %2032 = vmatprep.subr.bf16.mxu0 %v1658
        %2033 = vmatpush1.bf16.msra.mxu0 %v1657
        %2034 = vmatprep.subr.bf16.mxu0 %v1662
        %2035 = vmatpush1.bf16.msra.mxu0 %v1661
        %2036 = vmatprep.subr.bf16.mxu0 %v1666
        %2037 = vmatpush1.bf16.msra.mxu0 %v1665
        %2038 = vmatprep.subr.bf16.mxu0 %v1670
        %2039 = vmatpush1.bf16.msra.mxu0 %v1669
        %2040 = vmatprep.subr.bf16.mxu0 %v1674
        %2041 = vmatpush1.bf16.msra.mxu0 %v1673
        %2042 = vmatprep.subr.bf16.mxu0 %v1678
        %2043 = vmatpush1.bf16.msra.mxu0 %v1677
        %2044 = vmatprep.subr.bf16.mxu0 0
        %2045 = vmatpush1.bf16.msra.mxu0 0
        %2046 = vmatprep.subr.bf16.mxu0 0
        %2047 = vmatpush1.bf16.msra.mxu0 0
        %2048 = vmatprep.subr.bf16.mxu0 0
        %2049 = vmatpush1.bf16.msra.mxu0 0
        %2050 = vmatprep.subr.bf16.mxu0 0
        %2051 = vmatpush1.bf16.msra.mxu0 0
        %2052 = vmatprep.subr.bf16.mxu0 0
        %2053 = vmatpush1.bf16.msra.mxu0 0
        %2054 = vmatprep.subr.bf16.mxu0 0
        %2055 = vmatpush1.bf16.msra.mxu0 0
        %2056 = vmatprep.subr.bf16.mxu0 0
        %2057 = vmatpush1.bf16.msra.mxu0 0
        %2058 = vmatprep.subr.bf16.mxu0 0
        %2059 = vmatpush1.bf16.msra.mxu0 0
        %2060 = vmatprep.mubr.bf16.mxu0 0
        %2061 = vmatmul.mubr.bf16.gmra.mrb[0].mxu0 %v777
        %v2062 = vpop.f32.mrb[0].mxu0
        %v2063 = vadd.f32 %v2022, %v2062
        %v2064 = vpop.f32.mrb[0].mxu0
        %v2065 = vadd.f32 %v2024, %v2064
        %v2066 = vpop.f32.mrb[0].mxu0
        %v2067 = vpop.f32.mrb[0].mxu0
        %2068 = vdwg.mxu0
        %2069 = vmatprep.subr.bf16.mxu0 %v1460
        %2070 = vmatpush1.bf16.msra.mxu0 %v1459
        %2071 = vmatprep.subr.bf16.mxu0 %v1464
        %2072 = vmatpush1.bf16.msra.mxu0 %v1463
        %2073 = vmatprep.subr.bf16.mxu0 %v1468
        %2074 = vmatpush1.bf16.msra.mxu0 %v1467
        %2075 = vmatprep.subr.bf16.mxu0 %v1472
        %2076 = vmatpush1.bf16.msra.mxu0 %v1471
        %2077 = vmatprep.subr.bf16.mxu0 %v1476
        %2078 = vmatpush1.bf16.msra.mxu0 %v1475
        %2079 = vmatprep.subr.bf16.mxu0 %v1480
        %2080 = vmatpush1.bf16.msra.mxu0 %v1479
        %2081 = vmatprep.subr.bf16.mxu0 %v1484
        %2082 = vmatpush1.bf16.msra.mxu0 %v1483
        %2083 = vmatprep.subr.bf16.mxu0 %v1488
        %2084 = vmatpush1.bf16.msra.mxu0 %v1487
        %2085 = vmatprep.subr.bf16.mxu0 %v1492
        %2086 = vmatpush1.bf16.msra.mxu0 %v1491
        %2087 = vmatprep.subr.bf16.mxu0 %v1496
        %2088 = vmatpush1.bf16.msra.mxu0 %v1495
        %2089 = vmatprep.subr.bf16.mxu0 %v1500
        %2090 = vmatpush1.bf16.msra.mxu0 %v1499
        %2091 = vmatprep.subr.bf16.mxu0 %v1504
        %2092 = vmatpush1.bf16.msra.mxu0 %v1503
        %2093 = vmatprep.subr.bf16.mxu0 %v1508
        %2094 = vmatpush1.bf16.msra.mxu0 %v1507
        %2095 = vmatprep.subr.bf16.mxu0 %v1512
        %2096 = vmatpush1.bf16.msra.mxu0 %v1511
        %2097 = vmatprep.subr.bf16.mxu0 %v1516
        %2098 = vmatpush1.bf16.msra.mxu0 %v1515
        %2099 = vmatprep.subr.bf16.mxu0 %v1520
        %2100 = vmatpush1.bf16.msra.mxu0 %v1519
        %2101 = vmatprep.mubr.bf16.mxu0 %v772
        %2102 = vmatmul.mubr.bf16.gmra.mrb[0].mxu0 %v771
        %v2103 = vpop.f32.mrb[0].mxu0
        %v2104 = vadd.f32 %v751, %v2103
        %v2105 = vpop.f32.mrb[0].mxu0
        %v2106 = vadd.f32 %v755, %v2105
        %v2107 = vpop.f32.mrb[0].mxu0
        %v2108 = vpop.f32.mrb[0].mxu0
        %2109 = vdwg.mxu0
        %2110 = vmatprep.subr.bf16.mxu0 %v1524
        %2111 = vmatpush1.bf16.msra.mxu0 %v1523
        %2112 = vmatprep.subr.bf16.mxu0 %v1528
        %2113 = vmatpush1.bf16.msra.mxu0 %v1527
        %2114 = vmatprep.subr.bf16.mxu0 %v1532
        %2115 = vmatpush1.bf16.msra.mxu0 %v1531
        %2116 = vmatprep.subr.bf16.mxu0 %v1536
        %2117 = vmatpush1.bf16.msra.mxu0 %v1535
        %2118 = vmatprep.subr.bf16.mxu0 %v1540
        %2119 = vmatpush1.bf16.msra.mxu0 %v1539
        %2120 = vmatprep.subr.bf16.mxu0 %v1544
        %2121 = vmatpush1.bf16.msra.mxu0 %v1543
        %2122 = vmatprep.subr.bf16.mxu0 %v1548
        %2123 = vmatpush1.bf16.msra.mxu0 %v1547
        %2124 = vmatprep.subr.bf16.mxu0 %v1552
        %2125 = vmatpush1.bf16.msra.mxu0 %v1551
        %2126 = vmatprep.subr.bf16.mxu0 %v1556
        %2127 = vmatpush1.bf16.msra.mxu0 %v1555
        %2128 = vmatprep.subr.bf16.mxu0 %v1560
        %2129 = vmatpush1.bf16.msra.mxu0 %v1559
        %2130 = vmatprep.subr.bf16.mxu0 %v1564
        %2131 = vmatpush1.bf16.msra.mxu0 %v1563
        %2132 = vmatprep.subr.bf16.mxu0 %v1568
        %2133 = vmatpush1.bf16.msra.mxu0 %v1567
        %2134 = vmatprep.subr.bf16.mxu0 %v1572
        %2135 = vmatpush1.bf16.msra.mxu0 %v1571
        %2136 = vmatprep.subr.bf16.mxu0 %v1576
        %2137 = vmatpush1.bf16.msra.mxu0 %v1575
        %2138 = vmatprep.subr.bf16.mxu0 %v1580
        %2139 = vmatpush1.bf16.msra.mxu0 %v1579
        %2140 = vmatprep.subr.bf16.mxu0 %v1584
        %2141 = vmatpush1.bf16.msra.mxu0 %v1583
        %2142 = vmatprep.mubr.bf16.mxu0 %v774
        %2143 = vmatmul.mubr.bf16.gmra.mrb[0].mxu0 %v773
        %v2144 = vpop.f32.mrb[0].mxu0
        %v2145 = vadd.f32 %v2104, %v2144
        %v2146 = vpop.f32.mrb[0].mxu0
        %v2147 = vadd.f32 %v2106, %v2146
        %v2148 = vpop.f32.mrb[0].mxu0
        %v2149 = vpop.f32.mrb[0].mxu0
        %2150 = vdwg.mxu0
        %2151 = vmatprep.subr.bf16.mxu0 %v1588
        %2152 = vmatpush1.bf16.msra.mxu0 %v1587
        %2153 = vmatprep.subr.bf16.mxu0 %v1592
        %2154 = vmatpush1.bf16.msra.mxu0 %v1591
        %2155 = vmatprep.subr.bf16.mxu0 %v1596
        %2156 = vmatpush1.bf16.msra.mxu0 %v1595
        %2157 = vmatprep.subr.bf16.mxu0 %v1600
        %2158 = vmatpush1.bf16.msra.mxu0 %v1599
        %2159 = vmatprep.subr.bf16.mxu0 %v1604
        %2160 = vmatpush1.bf16.msra.mxu0 %v1603
        %2161 = vmatprep.subr.bf16.mxu0 %v1608
        %2162 = vmatpush1.bf16.msra.mxu0 %v1607
        %2163 = vmatprep.subr.bf16.mxu0 %v1612
        %2164 = vmatpush1.bf16.msra.mxu0 %v1611
        %2165 = vmatprep.subr.bf16.mxu0 %v1616
        %2166 = vmatpush1.bf16.msra.mxu0 %v1615
        %2167 = vmatprep.subr.bf16.mxu0 %v1620
        %2168 = vmatpush1.bf16.msra.mxu0 %v1619
        %2169 = vmatprep.subr.bf16.mxu0 %v1624
        %2170 = vmatpush1.bf16.msra.mxu0 %v1623
        %2171 = vmatprep.subr.bf16.mxu0 %v1628
        %2172 = vmatpush1.bf16.msra.mxu0 %v1627
        %2173 = vmatprep.subr.bf16.mxu0 %v1632
        %2174 = vmatpush1.bf16.msra.mxu0 %v1631
        %2175 = vmatprep.subr.bf16.mxu0 %v1636
        %2176 = vmatpush1.bf16.msra.mxu0 %v1635
        %2177 = vmatprep.subr.bf16.mxu0 %v1640
        %2178 = vmatpush1.bf16.msra.mxu0 %v1639
        %2179 = vmatprep.subr.bf16.mxu0 %v1644
        %2180 = vmatpush1.bf16.msra.mxu0 %v1643
        %2181 = vmatprep.subr.bf16.mxu0 %v1648
        %2182 = vmatpush1.bf16.msra.mxu0 %v1647
        %2183 = vmatprep.mubr.bf16.mxu0 %v776
        %2184 = vmatmul.mubr.bf16.gmra.mrb[0].mxu0 %v775
        %v2185 = vpop.f32.mrb[0].mxu0
        %v2186 = vadd.f32 %v2145, %v2185
        %v2187 = vpop.f32.mrb[0].mxu0
        %v2188 = vadd.f32 %v2147, %v2187
        %v2189 = vpop.f32.mrb[0].mxu0
        %v2190 = vpop.f32.mrb[0].mxu0
        %2191 = vdwg.mxu0
        %2192 = vmatprep.subr.bf16.mxu0 %v1652
        %2193 = vmatpush1.bf16.msra.mxu0 %v1651
        %2194 = vmatprep.subr.bf16.mxu0 %v1656
        %2195 = vmatpush1.bf16.msra.mxu0 %v1655
        %2196 = vmatprep.subr.bf16.mxu0 %v1660
        %2197 = vmatpush1.bf16.msra.mxu0 %v1659
        %2198 = vmatprep.subr.bf16.mxu0 %v1664
        %2199 = vmatpush1.bf16.msra.mxu0 %v1663
        %2200 = vmatprep.subr.bf16.mxu0 %v1668
        %2201 = vmatpush1.bf16.msra.mxu0 %v1667
        %2202 = vmatprep.subr.bf16.mxu0 %v1672
        %2203 = vmatpush1.bf16.msra.mxu0 %v1671
        %2204 = vmatprep.subr.bf16.mxu0 %v1676
        %2205 = vmatpush1.bf16.msra.mxu0 %v1675
        %2206 = vmatprep.subr.bf16.mxu0 %v1680
        %2207 = vmatpush1.bf16.msra.mxu0 %v1679
        %2208 = vmatprep.subr.bf16.mxu0 0
        %2209 = vmatpush1.bf16.msra.mxu0 0
        %2210 = vmatprep.subr.bf16.mxu0 0
        %2211 = vmatpush1.bf16.msra.mxu0 0
        %2212 = vmatprep.subr.bf16.mxu0 0
        %2213 = vmatpush1.bf16.msra.mxu0 0
        %2214 = vmatprep.subr.bf16.mxu0 0
        %2215 = vmatpush1.bf16.msra.mxu0 0
        %2216 = vmatprep.subr.bf16.mxu0 0
        %2217 = vmatpush1.bf16.msra.mxu0 0
        %2218 = vmatprep.subr.bf16.mxu0 0
        %2219 = vmatpush1.bf16.msra.mxu0 0
        %2220 = vmatprep.subr.bf16.mxu0 0
        %2221 = vmatpush1.bf16.msra.mxu0 0
        %2222 = vmatprep.subr.bf16.mxu0 0
        %2223 = vmatpush1.bf16.msra.mxu0 0
        %2224 = vmatprep.mubr.bf16.mxu0 0
        %2225 = vmatmul.mubr.bf16.gmra.mrb[0].mxu0 %v777
        %v2226 = vpop.f32.mrb[0].mxu0
        %v2227 = vadd.f32 %v2186, %v2226
        %v2228 = vpop.f32.mrb[0].mxu0
        %v2229 = vadd.f32 %v2188, %v2228
        %v2230 = vpop.f32.mrb[0].mxu0
        %v2231 = vpop.f32.mrb[0].mxu0
        %2232 = vdwg.mxu0
        %v2233 = vmax.f32 %v2063, 0.0
        %v2234 = vmax.f32 %v2065, 0.0
        %v2235 = vmax.f32 %v2227, 0.0
        %v2236 = vmax.f32 %v2229, 0.0
        %v2237 = vpack.c.bf16 %v2233, %v2233
        %v2238 = vpack.c.bf16 %v2234, %v2234
        %v2239 = vpack.c.bf16 %v2235, %v2235
        %v2240 = vpack.c.bf16 %v2236, %v2236
        %v2241 = vld [vmem:[#allocation8] sm:$0xf]
        %v2242 = vld [vmem:[#allocation8 + $0x4] sm:$0xf]
        %v2243 = vld [vmem:[#allocation8 + $0x8] sm:$0xf]
        %v2244 = vld [vmem:[#allocation8 + $0xc] sm:$0xf]
        %v2245 = vld [vmem:[#allocation8 + $0x10] sm:$0xf]
        %v2246 = vld [vmem:[#allocation8 + $0x14] sm:$0xf]
        %v2247 = vld [vmem:[#allocation8 + $0x18] sm:$0xf]
        %v2248 = vld [vmem:[#allocation8 + $0x1c] sm:$0xf]
        %v2249 = vld [vmem:[#allocation8 + $0x20] sm:$0xf]
        %v2250 = vld [vmem:[#allocation8 + $0x24] sm:$0xf]
        %v2251 = vld [vmem:[#allocation8 + $0x28] sm:$0xf]
        %v2252 = vld [vmem:[#allocation8 + $0x2c] sm:$0xf]
        %v2253 = vld [vmem:[#allocation8 + $0x30] sm:$0xf]
        %v2254 = vld [vmem:[#allocation8 + $0x34] sm:$0xf]
        %v2255 = vld [vmem:[#allocation8 + $0x38] sm:$0xf]
        %v2256 = vld [vmem:[#allocation8 + $0x3c] sm:$0xf]
        %v2257 = vld [vmem:[#allocation8 + $0x40] sm:$0xf]
        %v2258 = vld [vmem:[#allocation8 + $0x44] sm:$0xf]
        %v2259 = vld [vmem:[#allocation8 + $0x48] sm:$0xf]
        %v2260 = vld [vmem:[#allocation8 + $0x4c] sm:$0xf]
        %v2261 = vld [vmem:[#allocation8 + $0x50] sm:$0xf]
        %v2262 = vld [vmem:[#allocation8 + $0x54] sm:$0xf]
        %v2263 = vld [vmem:[#allocation8 + $0x58] sm:$0xf]
        %v2264 = vld [vmem:[#allocation8 + $0x5c] sm:$0xf]
        %v2265 = vld [vmem:[#allocation8 + $0x60] sm:$0xf]
        %v2266 = vld [vmem:[#allocation8 + $0x64] sm:$0xf]
        %v2267 = vld [vmem:[#allocation8 + $0x68] sm:$0xf]
        %v2268 = vld [vmem:[#allocation8 + $0x6c] sm:$0xf]
        %v2269 = vld [vmem:[#allocation8 + $0x70] sm:$0xf]
        %v2270 = vld [vmem:[#allocation8 + $0x74] sm:$0xf]
        %v2271 = vld [vmem:[#allocation8 + $0x78] sm:$0xf]
        %v2272 = vld [vmem:[#allocation8 + $0x7c] sm:$0xf]
        %v2273 = vld [vmem:[#allocation8 + $0x80] sm:$0xf]
        %v2274 = vld [vmem:[#allocation8 + $0x84] sm:$0xf]
        %v2275 = vld [vmem:[#allocation8 + $0x88] sm:$0xf]
        %v2276 = vld [vmem:[#allocation8 + $0x8c] sm:$0xf]
        %v2277 = vld [vmem:[#allocation8 + $0x90] sm:$0xf]
        %v2278 = vld [vmem:[#allocation8 + $0x94] sm:$0xf]
        %v2279 = vld [vmem:[#allocation8 + $0x98] sm:$0xf]
        %v2280 = vld [vmem:[#allocation8 + $0x9c] sm:$0xf]
        %v2281 = vld [vmem:[#allocation8 + $0xa0] sm:$0xf]
        %v2282 = vld [vmem:[#allocation8 + $0xa4] sm:$0xf]
        %v2283 = vld [vmem:[#allocation8 + $0xa8] sm:$0xf]
        %v2284 = vld [vmem:[#allocation8 + $0xac] sm:$0xf]
        %v2285 = vld [vmem:[#allocation8 + $0xb0] sm:$0xf]
        %v2286 = vld [vmem:[#allocation8 + $0xb4] sm:$0xf]
        %v2287 = vld [vmem:[#allocation8 + $0xb8] sm:$0xf]
        %v2288 = vld [vmem:[#allocation8 + $0xbc] sm:$0xf]
        %v2289 = vld [vmem:[#allocation8 + $0xc0] sm:$0xf]
        %v2290 = vld [vmem:[#allocation8 + $0xc4] sm:$0xf]
        %v2291 = vld [vmem:[#allocation8 + $0xc8] sm:$0xf]
        %v2292 = vld [vmem:[#allocation8 + $0xcc] sm:$0xf]
        %v2293 = vld [vmem:[#allocation8 + $0xd0] sm:$0xf]
        %v2294 = vld [vmem:[#allocation8 + $0xd4] sm:$0xf]
        %v2295 = vld [vmem:[#allocation8 + $0xd8] sm:$0xf]
        %v2296 = vld [vmem:[#allocation8 + $0xdc] sm:$0xf]
        %v2297 = vld [vmem:[#allocation8 + $0xe0] sm:$0xf]
        %v2298 = vld [vmem:[#allocation8 + $0xe4] sm:$0xf]
        %v2299 = vld [vmem:[#allocation8 + $0xe8] sm:$0xf]
        %v2300 = vld [vmem:[#allocation8 + $0xec] sm:$0xf]
        %v2301 = vld [vmem:[#allocation8 + $0xf0] sm:$0xf]
        %v2302 = vld [vmem:[#allocation8 + $0xf4] sm:$0xf]
        %v2303 = vld [vmem:[#allocation8 + $0xf8] sm:$0xf]
        %v2304 = vld [vmem:[#allocation8 + $0xfc] sm:$0xf]
        %v2305 = vld [vmem:[%s5] sm:$0x1]
        %v2307 = vlaneseq
        %v2308 = vshrl.u32 %v2307, 7
        %v2309 = vsub.s32 0, %v2308
        %v2310 = vrot.slane %v2305, %v2309
        %v2376 = vunpack.c.l.b16 %v2241
        %v2377 = vunpack.c.l.b16 %v2242
        %v2378 = vunpack.c.l.b16 %v2243
        %v2379 = vunpack.c.l.b16 %v2244
        %v2380 = vunpack.c.l.b16 %v2245
        %v2381 = vunpack.c.l.b16 %v2246
        %v2382 = vunpack.c.l.b16 %v2247
        %v2383 = vunpack.c.l.b16 %v2248
        %v2384 = vunpack.c.l.b16 %v2249
        %v2385 = vunpack.c.l.b16 %v2250
        %v2386 = vunpack.c.l.b16 %v2251
        %v2387 = vunpack.c.l.b16 %v2252
        %v2388 = vunpack.c.l.b16 %v2253
        %v2389 = vunpack.c.l.b16 %v2254
        %v2390 = vunpack.c.l.b16 %v2255
        %v2391 = vunpack.c.l.b16 %v2256
        %v2392 = vunpack.c.l.b16 %v2257
        %v2393 = vunpack.c.l.b16 %v2258
        %v2394 = vunpack.c.l.b16 %v2259
        %v2395 = vunpack.c.l.b16 %v2260
        %v2396 = vunpack.c.l.b16 %v2261
        %v2397 = vunpack.c.l.b16 %v2262
        %v2398 = vunpack.c.l.b16 %v2263
        %v2399 = vunpack.c.l.b16 %v2264
        %v2400 = vunpack.c.l.b16 %v2265
        %v2401 = vunpack.c.l.b16 %v2266
        %v2402 = vunpack.c.l.b16 %v2267
        %v2403 = vunpack.c.l.b16 %v2268
        %v2404 = vunpack.c.l.b16 %v2269
        %v2405 = vunpack.c.l.b16 %v2270
        %v2406 = vunpack.c.l.b16 %v2271
        %v2407 = vunpack.c.l.b16 %v2272
        %v2408 = vunpack.c.l.b16 %v2273
        %v2409 = vunpack.c.l.b16 %v2274
        %v2410 = vunpack.c.l.b16 %v2275
        %v2411 = vunpack.c.l.b16 %v2276
        %v2412 = vunpack.c.l.b16 %v2277
        %v2413 = vunpack.c.l.b16 %v2278
        %v2414 = vunpack.c.l.b16 %v2279
        %v2415 = vunpack.c.l.b16 %v2280
        %v2416 = vunpack.c.l.b16 %v2281
        %v2417 = vunpack.c.l.b16 %v2282
        %v2418 = vunpack.c.l.b16 %v2283
        %v2419 = vunpack.c.l.b16 %v2284
        %v2420 = vunpack.c.l.b16 %v2285
        %v2421 = vunpack.c.l.b16 %v2286
        %v2422 = vunpack.c.l.b16 %v2287
        %v2423 = vunpack.c.l.b16 %v2288
        %v2424 = vunpack.c.l.b16 %v2289
        %v2425 = vunpack.c.l.b16 %v2290
        %v2426 = vunpack.c.l.b16 %v2291
        %v2427 = vunpack.c.l.b16 %v2292
        %v2428 = vunpack.c.l.b16 %v2293
        %v2429 = vunpack.c.l.b16 %v2294
        %v2430 = vunpack.c.l.b16 %v2295
        %v2431 = vunpack.c.l.b16 %v2296
        %v2432 = vunpack.c.l.b16 %v2297
        %v2433 = vunpack.c.l.b16 %v2298
        %v2434 = vunpack.c.l.b16 %v2299
        %v2435 = vunpack.c.l.b16 %v2300
        %v2436 = vunpack.c.l.b16 %v2301
        %v2437 = vunpack.c.l.b16 %v2302
        %v2438 = vunpack.c.l.b16 %v2303
        %v2439 = vunpack.c.l.b16 %v2304
        %v2440 = vpack.c.b16 %v2377, %v2376
        %v2441 = vpack.c.b16 %v2379, %v2378
        %v2442 = vpack.c.b16 %v2381, %v2380
        %v2443 = vpack.c.b16 %v2383, %v2382
        %v2444 = vpack.c.b16 %v2385, %v2384
        %v2445 = vpack.c.b16 %v2387, %v2386
        %v2446 = vpack.c.b16 %v2389, %v2388
        %v2447 = vpack.c.b16 %v2391, %v2390
        %v2448 = vpack.c.b16 %v2393, %v2392
        %v2449 = vpack.c.b16 %v2395, %v2394
        %v2450 = vpack.c.b16 %v2397, %v2396
        %v2451 = vpack.c.b16 %v2399, %v2398
        %v2452 = vpack.c.b16 %v2401, %v2400
        %v2453 = vpack.c.b16 %v2403, %v2402
        %v2454 = vpack.c.b16 %v2405, %v2404
        %v2455 = vpack.c.b16 %v2407, %v2406
        %v2456 = vpack.c.b16 %v2409, %v2408
        %v2457 = vpack.c.b16 %v2411, %v2410
        %v2458 = vpack.c.b16 %v2413, %v2412
        %v2459 = vpack.c.b16 %v2415, %v2414
        %v2460 = vpack.c.b16 %v2417, %v2416
        %v2461 = vpack.c.b16 %v2419, %v2418
        %v2462 = vpack.c.b16 %v2421, %v2420
        %v2463 = vpack.c.b16 %v2423, %v2422
        %v2464 = vpack.c.b16 %v2425, %v2424
        %v2465 = vpack.c.b16 %v2427, %v2426
        %v2466 = vpack.c.b16 %v2429, %v2428
        %v2467 = vpack.c.b16 %v2431, %v2430
        %v2468 = vpack.c.b16 %v2433, %v2432
        %v2469 = vpack.c.b16 %v2435, %v2434
        %v2470 = vpack.c.b16 %v2437, %v2436
        %v2471 = vpack.c.b16 %v2439, %v2438
        %2504 = vmatprep.subr.bf16.mxu0 0
        %2505 = vmatpush1.bf16.msra.mxu0 %v2440
        %2506 = vmatprep.subr.bf16.mxu0 0
        %2507 = vmatpush1.bf16.msra.mxu0 %v2441
        %2508 = vmatprep.subr.bf16.mxu0 0
        %2509 = vmatpush1.bf16.msra.mxu0 %v2442
        %2510 = vmatprep.subr.bf16.mxu0 0
        %2511 = vmatpush1.bf16.msra.mxu0 %v2443
        %2512 = vmatprep.subr.bf16.mxu0 0
        %2513 = vmatpush1.bf16.msra.mxu0 %v2444
        %2514 = vmatprep.subr.bf16.mxu0 0
        %2515 = vmatpush1.bf16.msra.mxu0 %v2445
        %2516 = vmatprep.subr.bf16.mxu0 0
        %2517 = vmatpush1.bf16.msra.mxu0 %v2446
        %2518 = vmatprep.subr.bf16.mxu0 0
        %2519 = vmatpush1.bf16.msra.mxu0 %v2447
        %2520 = vmatprep.subr.bf16.mxu0 0
        %2521 = vmatpush1.bf16.msra.mxu0 %v2448
        %2522 = vmatprep.subr.bf16.mxu0 0
        %2523 = vmatpush1.bf16.msra.mxu0 %v2449
        %2524 = vmatprep.subr.bf16.mxu0 0
        %2525 = vmatpush1.bf16.msra.mxu0 %v2450
        %2526 = vmatprep.subr.bf16.mxu0 0
        %2527 = vmatpush1.bf16.msra.mxu0 %v2451
        %2528 = vmatprep.subr.bf16.mxu0 0
        %2529 = vmatpush1.bf16.msra.mxu0 %v2452
        %2530 = vmatprep.subr.bf16.mxu0 0
        %2531 = vmatpush1.bf16.msra.mxu0 %v2453
        %2532 = vmatprep.subr.bf16.mxu0 0
        %2533 = vmatpush1.bf16.msra.mxu0 %v2454
        %2534 = vmatprep.subr.bf16.mxu0 0
        %2535 = vmatpush1.bf16.msra.mxu0 %v2455
        %2536 = vmatprep.mubr.bf16.mxu0 %v2238
        %2537 = vmatmul.mubr.bf16.gmra.mrb[0].mxu0 %v2237
        %v2538 = vpop.f32.mrb[0].mxu0
        %v2539 = vadd.f32 %v2310, %v2538
        %v2540 = vpop.f32.mrb[0].mxu0
        %v2541 = vpop.f32.mrb[0].mxu0
        %v2542 = vpop.f32.mrb[0].mxu0
        %2543 = vdwg.mxu0
        %2544 = vmatprep.subr.bf16.mxu0 0
        %2545 = vmatpush1.bf16.msra.mxu0 %v2456
        %2546 = vmatprep.subr.bf16.mxu0 0
        %2547 = vmatpush1.bf16.msra.mxu0 %v2457
        %2548 = vmatprep.subr.bf16.mxu0 0
        %2549 = vmatpush1.bf16.msra.mxu0 %v2458
        %2550 = vmatprep.subr.bf16.mxu0 0
        %2551 = vmatpush1.bf16.msra.mxu0 %v2459
        %2552 = vmatprep.subr.bf16.mxu0 0
        %2553 = vmatpush1.bf16.msra.mxu0 %v2460
        %2554 = vmatprep.subr.bf16.mxu0 0
        %2555 = vmatpush1.bf16.msra.mxu0 %v2461
        %2556 = vmatprep.subr.bf16.mxu0 0
        %2557 = vmatpush1.bf16.msra.mxu0 %v2462
        %2558 = vmatprep.subr.bf16.mxu0 0
        %2559 = vmatpush1.bf16.msra.mxu0 %v2463
        %2560 = vmatprep.subr.bf16.mxu0 0
        %2561 = vmatpush1.bf16.msra.mxu0 %v2464
        %2562 = vmatprep.subr.bf16.mxu0 0
        %2563 = vmatpush1.bf16.msra.mxu0 %v2465
        %2564 = vmatprep.subr.bf16.mxu0 0
        %2565 = vmatpush1.bf16.msra.mxu0 %v2466
        %2566 = vmatprep.subr.bf16.mxu0 0
        %2567 = vmatpush1.bf16.msra.mxu0 %v2467
        %2568 = vmatprep.subr.bf16.mxu0 0
        %2569 = vmatpush1.bf16.msra.mxu0 %v2468
        %2570 = vmatprep.subr.bf16.mxu0 0
        %2571 = vmatpush1.bf16.msra.mxu0 %v2469
        %2572 = vmatprep.subr.bf16.mxu0 0
        %2573 = vmatpush1.bf16.msra.mxu0 %v2470
        %2574 = vmatprep.subr.bf16.mxu0 0
        %2575 = vmatpush1.bf16.msra.mxu0 %v2471
        %2576 = vmatprep.mubr.bf16.mxu0 %v2240
        %2577 = vmatmul.mubr.bf16.gmra.mrb[0].mxu0 %v2239
        %v2578 = vpop.f32.mrb[0].mxu0
        %v2579 = vadd.f32 %v2539, %v2578
        %v2580 = vpop.f32.mrb[0].mxu0
        %v2581 = vpop.f32.mrb[0].mxu0
        %v2582 = vpop.f32.mrb[0].mxu0
        %2583 = vdwg.mxu0
        %2584 = vst [vmem:[%s508] sm:$0xff] %v2579
        %v2585 = vld [vmem:[%s444] sm:$0xf]
        %v2586 = vunpack.c.l.bf16 %v2585
        %v2587 = vadd.f32 %v2579, %v2586
        %2588 = vrot.lane.b32.xlu0 %v2587, 32
        %v2589 = vpop.permute.xlu0 %2588
        %v2590 = vmax.f32 %v2587, %v2589
        %2591 = vrot.lane.b32.xlu0 %v2590, 64
        %v2592 = vpop.permute.xlu0 %2591
        %v2593 = vmax.f32 %v2590, %v2592
        %v2594 = vsub.f32 %v2587, %v2593
        %v2595 = vmul.f32 %v2594, 1.442695
        %v2596 = vpow.pop %v2595
        %2597 = vrot.lane.b32.xlu0 %v2596, 32
        %v2598 = vpop.permute.xlu0 %2597
        %v2599 = vadd.f32 %v2596, %v2598
        %2600 = vrot.lane.b32.xlu0 %v2599, 64
        %v2601 = vpop.permute.xlu0 %2600
        %v2602 = vadd.f32 %v2599, %v2601
        %v2603 = vrcp.pop %v2602
        %v2604 = vmul.f32 %v2596, %v2603
        %v2605 = vpack.c.bf16 %v2604, %v2604
        %v2606 = vld [vmem:[#allocation10] sm:$0xff]
        %v2607 = vld [vmem:[#allocation10 + $0x8] sm:$0xff]
        %v2608 = vld [vmem:[#allocation10 + $0x10] sm:$0xff]
        %v2609 = vld [vmem:[#allocation10 + $0x18] sm:$0xff]
        %v2610 = vld [vmem:[#allocation10 + $0x20] sm:$0xff]
        %v2611 = vld [vmem:[#allocation10 + $0x28] sm:$0xff]
        %v2612 = vld [vmem:[#allocation10 + $0x30] sm:$0xff]
        %v2613 = vld [vmem:[#allocation10 + $0x38] sm:$0xff]
        %v2614 = vld [vmem:[#allocation10 + $0x40] sm:$0xff]
        %v2615 = vld [vmem:[#allocation10 + $0x48] sm:$0xff]
        %v2616 = vld [vmem:[#allocation10 + $0x50] sm:$0xff]
        %v2617 = vld [vmem:[#allocation10 + $0x58] sm:$0xff]
        %v2618 = vld [vmem:[#allocation10 + $0x60] sm:$0xff]
        %v2619 = vld [vmem:[#allocation10 + $0x68] sm:$0xff]
        %v2620 = vld [vmem:[#allocation10 + $0x70] sm:$0xff]
        %v2621 = vld [vmem:[#allocation10 + $0x78] sm:$0xff]
        %v2622 = vld [vmem:[#allocation10 + $0x80] sm:$0xff]
        %v2623 = vld [vmem:[#allocation10 + $0x88] sm:$0xff]
        %v2624 = vld [vmem:[#allocation10 + $0x90] sm:$0xff]
        %v2625 = vld [vmem:[#allocation10 + $0x98] sm:$0xff]
        %v2626 = vld [vmem:[#allocation10 + $0xa0] sm:$0xff]
        %v2627 = vld [vmem:[#allocation10 + $0xa8] sm:$0xff]
        %v2628 = vld [vmem:[#allocation10 + $0xb0] sm:$0xff]
        %v2629 = vld [vmem:[#allocation10 + $0xb8] sm:$0xff]
        %v2630 = vld [vmem:[#allocation10 + $0xc0] sm:$0xff]
        %v2631 = vld [vmem:[#allocation10 + $0xc8] sm:$0xff]
        %v2632 = vld [vmem:[#allocation10 + $0xd0] sm:$0xff]
        %v2633 = vld [vmem:[#allocation10 + $0xd8] sm:$0xff]
        %v2634 = vld [vmem:[#allocation10 + $0xe0] sm:$0xff]
        %v2635 = vld [vmem:[#allocation10 + $0xe8] sm:$0xff]
        %v2636 = vld [vmem:[#allocation10 + $0xf0] sm:$0xff]
        %v2637 = vld [vmem:[#allocation10 + $0xf8] sm:$0xff]
        %v2638 = vld [vmem:[%s7] sm:$0xf]
        %v2640 = vlaneseq
        %v2641 = vshrl.u32 %v2640, 7
        %v2642 = vsub.s32 0, %v2641
        %v2643 = vrot.slane %v2638, %v2642
        %v2644 = vlaneseq
        %v2645 = vshrl.u32 %v2644, 7
        %v2646 = vsub.s32 1, %v2645
        %v2647 = vrot.slane %v2638, %v2646
        %v2648 = vlaneseq
        %v2649 = vshrl.u32 %v2648, 7
        %v2650 = vsub.s32 2, %v2649
        %v2651 = vrot.slane %v2638, %v2650
        %v2652 = vlaneseq
        %v2653 = vshrl.u32 %v2652, 7
        %v2654 = vsub.s32 3, %v2653
        %v2655 = vrot.slane %v2638, %v2654
        %v2692 = vunpack.c.l.b16 %v2606
        %v2693 = vunpack.c.h.b16 %v2606
        %v2694 = vunpack.c.l.b16 %v2607
        %v2695 = vunpack.c.h.b16 %v2607
        %v2696 = vunpack.c.l.b16 %v2608
        %v2697 = vunpack.c.h.b16 %v2608
        %v2698 = vunpack.c.l.b16 %v2609
        %v2699 = vunpack.c.h.b16 %v2609
        %v2700 = vunpack.c.l.b16 %v2610
        %v2701 = vunpack.c.h.b16 %v2610
        %v2702 = vunpack.c.l.b16 %v2611
        %v2703 = vunpack.c.h.b16 %v2611
        %v2704 = vunpack.c.l.b16 %v2612
        %v2705 = vunpack.c.h.b16 %v2612
        %v2706 = vunpack.c.l.b16 %v2613
        %v2707 = vunpack.c.h.b16 %v2613
        %v2708 = vunpack.c.l.b16 %v2614
        %v2709 = vunpack.c.h.b16 %v2614
        %v2710 = vunpack.c.l.b16 %v2615
        %v2711 = vunpack.c.h.b16 %v2615
        %v2712 = vunpack.c.l.b16 %v2616
        %v2713 = vunpack.c.h.b16 %v2616
        %v2714 = vunpack.c.l.b16 %v2617
        %v2715 = vunpack.c.h.b16 %v2617
        %v2716 = vunpack.c.l.b16 %v2618
        %v2717 = vunpack.c.h.b16 %v2618
        %v2718 = vunpack.c.l.b16 %v2619
        %v2719 = vunpack.c.h.b16 %v2619
        %v2720 = vunpack.c.l.b16 %v2620
        %v2721 = vunpack.c.h.b16 %v2620
        %v2722 = vunpack.c.l.b16 %v2621
        %v2723 = vunpack.c.h.b16 %v2621
        %v2724 = vunpack.c.l.b16 %v2622
        %v2725 = vunpack.c.h.b16 %v2622
        %v2726 = vunpack.c.l.b16 %v2623
        %v2727 = vunpack.c.h.b16 %v2623
        %v2728 = vunpack.c.l.b16 %v2624
        %v2729 = vunpack.c.h.b16 %v2624
        %v2730 = vunpack.c.l.b16 %v2625
        %v2731 = vunpack.c.h.b16 %v2625
        %v2732 = vunpack.c.l.b16 %v2626
        %v2733 = vunpack.c.h.b16 %v2626
        %v2734 = vunpack.c.l.b16 %v2627
        %v2735 = vunpack.c.h.b16 %v2627
        %v2736 = vunpack.c.l.b16 %v2628
        %v2737 = vunpack.c.h.b16 %v2628
        %v2738 = vunpack.c.l.b16 %v2629
        %v2739 = vunpack.c.h.b16 %v2629
        %v2740 = vunpack.c.l.b16 %v2630
        %v2741 = vunpack.c.h.b16 %v2630
        %v2742 = vunpack.c.l.b16 %v2631
        %v2743 = vunpack.c.h.b16 %v2631
        %v2744 = vunpack.c.l.b16 %v2632
        %v2745 = vunpack.c.h.b16 %v2632
        %v2746 = vunpack.c.l.b16 %v2633
        %v2747 = vunpack.c.h.b16 %v2633
        %v2748 = vunpack.c.l.b16 %v2634
        %v2749 = vunpack.c.h.b16 %v2634
        %v2750 = vunpack.c.l.b16 %v2635
        %v2751 = vunpack.c.h.b16 %v2635
        %v2752 = vunpack.c.l.b16 %v2636
        %v2753 = vunpack.c.h.b16 %v2636
        %v2754 = vunpack.c.l.b16 %v2637
        %v2755 = vunpack.c.h.b16 %v2637
        %v2756 = vpack.c.b16 %v2696, %v2692
        %v2757 = vpack.c.b16 %v2697, %v2693
        %v2758 = vpack.c.b16 %v2698, %v2694
        %v2759 = vpack.c.b16 %v2699, %v2695
        %v2760 = vpack.c.b16 %v2704, %v2700
        %v2761 = vpack.c.b16 %v2705, %v2701
        %v2762 = vpack.c.b16 %v2706, %v2702
        %v2763 = vpack.c.b16 %v2707, %v2703
        %v2764 = vpack.c.b16 %v2712, %v2708
        %v2765 = vpack.c.b16 %v2713, %v2709
        %v2766 = vpack.c.b16 %v2714, %v2710
        %v2767 = vpack.c.b16 %v2715, %v2711
        %v2768 = vpack.c.b16 %v2720, %v2716
        %v2769 = vpack.c.b16 %v2721, %v2717
        %v2770 = vpack.c.b16 %v2722, %v2718
        %v2771 = vpack.c.b16 %v2723, %v2719
        %v2772 = vpack.c.b16 %v2728, %v2724
        %v2773 = vpack.c.b16 %v2729, %v2725
        %v2774 = vpack.c.b16 %v2730, %v2726
        %v2775 = vpack.c.b16 %v2731, %v2727
        %v2776 = vpack.c.b16 %v2736, %v2732
        %v2777 = vpack.c.b16 %v2737, %v2733
        %v2778 = vpack.c.b16 %v2738, %v2734
        %v2779 = vpack.c.b16 %v2739, %v2735
        %v2780 = vpack.c.b16 %v2744, %v2740
        %v2781 = vpack.c.b16 %v2745, %v2741
        %v2782 = vpack.c.b16 %v2746, %v2742
        %v2783 = vpack.c.b16 %v2747, %v2743
        %v2784 = vpack.c.b16 %v2752, %v2748
        %v2785 = vpack.c.b16 %v2753, %v2749
        %v2786 = vpack.c.b16 %v2754, %v2750
        %v2787 = vpack.c.b16 %v2755, %v2751
        %2820 = vmatprep.subr.bf16.mxu0 %v2757
        %2821 = vmatpush1.bf16.msra.mxu0 %v2756
        %2822 = vmatprep.subr.bf16.mxu0 %v2761
        %2823 = vmatpush1.bf16.msra.mxu0 %v2760
        %2824 = vmatprep.subr.bf16.mxu0 %v2765
        %2825 = vmatpush1.bf16.msra.mxu0 %v2764
        %2826 = vmatprep.subr.bf16.mxu0 %v2769
        %2827 = vmatpush1.bf16.msra.mxu0 %v2768
        %2828 = vmatprep.subr.bf16.mxu0 %v2773
        %2829 = vmatpush1.bf16.msra.mxu0 %v2772
        %2830 = vmatprep.subr.bf16.mxu0 %v2777
        %2831 = vmatpush1.bf16.msra.mxu0 %v2776
        %2832 = vmatprep.subr.bf16.mxu0 %v2781
        %2833 = vmatpush1.bf16.msra.mxu0 %v2780
        %2834 = vmatprep.subr.bf16.mxu0 %v2785
        %2835 = vmatpush1.bf16.msra.mxu0 %v2784
        %2836 = vmatprep.subr.bf16.mxu0 0
        %2837 = vmatpush1.bf16.msra.mxu0 0
        %2838 = vmatprep.subr.bf16.mxu0 0
        %2839 = vmatpush1.bf16.msra.mxu0 0
        %2840 = vmatprep.subr.bf16.mxu0 0
        %2841 = vmatpush1.bf16.msra.mxu0 0
        %2842 = vmatprep.subr.bf16.mxu0 0
        %2843 = vmatpush1.bf16.msra.mxu0 0
        %2844 = vmatprep.subr.bf16.mxu0 0
        %2845 = vmatpush1.bf16.msra.mxu0 0
        %2846 = vmatprep.subr.bf16.mxu0 0
        %2847 = vmatpush1.bf16.msra.mxu0 0
        %2848 = vmatprep.subr.bf16.mxu0 0
        %2849 = vmatpush1.bf16.msra.mxu0 0
        %2850 = vmatprep.subr.bf16.mxu0 0
        %2851 = vmatpush1.bf16.msra.mxu0 0
        %2852 = vmatprep.mubr.bf16.mxu0 0
        %2853 = vmatmul.mubr.bf16.gmra.mrb[0].mxu0 %v2605
        %v2854 = vpop.f32.mrb[0].mxu0
        %v2855 = vadd.f32 %v2643, %v2854
        %v2856 = vpop.f32.mrb[0].mxu0
        %v2857 = vadd.f32 %v2647, %v2856
        %v2858 = vpop.f32.mrb[0].mxu0
        %v2859 = vpop.f32.mrb[0].mxu0
        %2860 = vdwg.mxu0
        %2861 = vmatprep.subr.bf16.mxu0 %v2759
        %2862 = vmatpush1.bf16.msra.mxu0 %v2758
        %2863 = vmatprep.subr.bf16.mxu0 %v2763
        %2864 = vmatpush1.bf16.msra.mxu0 %v2762
        %2865 = vmatprep.subr.bf16.mxu0 %v2767
        %2866 = vmatpush1.bf16.msra.mxu0 %v2766
        %2867 = vmatprep.subr.bf16.mxu0 %v2771
        %2868 = vmatpush1.bf16.msra.mxu0 %v2770
        %2869 = vmatprep.subr.bf16.mxu0 %v2775
        %2870 = vmatpush1.bf16.msra.mxu0 %v2774
        %2871 = vmatprep.subr.bf16.mxu0 %v2779
        %2872 = vmatpush1.bf16.msra.mxu0 %v2778
        %2873 = vmatprep.subr.bf16.mxu0 %v2783
        %2874 = vmatpush1.bf16.msra.mxu0 %v2782
        %2875 = vmatprep.subr.bf16.mxu0 %v2787
        %2876 = vmatpush1.bf16.msra.mxu0 %v2786
        %2877 = vmatprep.subr.bf16.mxu0 0
        %2878 = vmatpush1.bf16.msra.mxu0 0
        %2879 = vmatprep.subr.bf16.mxu0 0
        %2880 = vmatpush1.bf16.msra.mxu0 0
        %2881 = vmatprep.subr.bf16.mxu0 0
        %2882 = vmatpush1.bf16.msra.mxu0 0
        %2883 = vmatprep.subr.bf16.mxu0 0
        %2884 = vmatpush1.bf16.msra.mxu0 0
        %2885 = vmatprep.subr.bf16.mxu0 0
        %2886 = vmatpush1.bf16.msra.mxu0 0
        %2887 = vmatprep.subr.bf16.mxu0 0
        %2888 = vmatpush1.bf16.msra.mxu0 0
        %2889 = vmatprep.subr.bf16.mxu0 0
        %2890 = vmatpush1.bf16.msra.mxu0 0
        %2891 = vmatprep.subr.bf16.mxu0 0
        %2892 = vmatpush1.bf16.msra.mxu0 0
        %2893 = vmatprep.mubr.bf16.mxu0 0
        %2894 = vmatmul.mubr.bf16.gmra.mrb[0].mxu0 %v2605
        %v2895 = vpop.f32.mrb[0].mxu0
        %v2896 = vadd.f32 %v2651, %v2895
        %v2897 = vpop.f32.mrb[0].mxu0
        %v2898 = vadd.f32 %v2655, %v2897
        %v2899 = vpop.f32.mrb[0].mxu0
        %v2900 = vpop.f32.mrb[0].mxu0
        %2901 = vdwg.mxu0
        %v2902 = vmax.f32 %v2855, 0.0
        %v2903 = vmax.f32 %v2857, 0.0
        %v2904 = vmax.f32 %v2896, 0.0
        %v2905 = vmax.f32 %v2898, 0.0
        %v2906 = vpack.c.bf16 %v2902, %v2902
        %v2907 = vpack.c.bf16 %v2903, %v2903
        %v2908 = vpack.c.bf16 %v2904, %v2904
        %v2909 = vpack.c.bf16 %v2905, %v2905
        %v2910 = vld [vmem:[#allocation11] sm:$0xff]
        %v2911 = vld [vmem:[#allocation11 + $0x8] sm:$0xff]
        %v2912 = vld [vmem:[#allocation11 + $0x10] sm:$0xff]
        %v2913 = vld [vmem:[#allocation11 + $0x18] sm:$0xf]
        %v2914 = vld [vmem:[#allocation11 + $0x1c] sm:$0xff]
        %v2915 = vld [vmem:[#allocation11 + $0x24] sm:$0xff]
        %v2916 = vld [vmem:[#allocation11 + $0x2c] sm:$0xff]
        %v2917 = vld [vmem:[#allocation11 + $0x34] sm:$0xf]
        %v2918 = vld [vmem:[#allocation11 + $0x38] sm:$0xff]
        %v2919 = vld [vmem:[#allocation11 + $0x40] sm:$0xff]
        %v2920 = vld [vmem:[#allocation11 + $0x48] sm:$0xff]
        %v2921 = vld [vmem:[#allocation11 + $0x50] sm:$0xf]
        %v2922 = vld [vmem:[#allocation11 + $0x54] sm:$0xff]
        %v2923 = vld [vmem:[#allocation11 + $0x5c] sm:$0xff]
        %v2924 = vld [vmem:[#allocation11 + $0x64] sm:$0xff]
        %v2925 = vld [vmem:[#allocation11 + $0x6c] sm:$0xf]
        %v2926 = vld [vmem:[#allocation11 + $0x70] sm:$0xff]
        %v2927 = vld [vmem:[#allocation11 + $0x78] sm:$0xff]
        %v2928 = vld [vmem:[#allocation11 + $0x80] sm:$0xff]
        %v2929 = vld [vmem:[#allocation11 + $0x88] sm:$0xf]
        %v2930 = vld [vmem:[#allocation11 + $0x8c] sm:$0xff]
        %v2931 = vld [vmem:[#allocation11 + $0x94] sm:$0xff]
        %v2932 = vld [vmem:[#allocation11 + $0x9c] sm:$0xff]
        %v2933 = vld [vmem:[#allocation11 + $0xa4] sm:$0xf]
        %v2934 = vld [vmem:[#allocation11 + $0xa8] sm:$0xff]
        %v2935 = vld [vmem:[#allocation11 + $0xb0] sm:$0xff]
        %v2936 = vld [vmem:[#allocation11 + $0xb8] sm:$0xff]
        %v2937 = vld [vmem:[#allocation11 + $0xc0] sm:$0xf]
        %v2938 = vld [vmem:[#allocation11 + $0xc4] sm:$0xff]
        %v2939 = vld [vmem:[#allocation11 + $0xcc] sm:$0xff]
        %v2940 = vld [vmem:[#allocation11 + $0xd4] sm:$0xff]
        %v2941 = vld [vmem:[#allocation11 + $0xdc] sm:$0xf]
        %v2942 = vld [vmem:[#allocation11 + $0xe0] sm:$0xff]
        %v2943 = vld [vmem:[#allocation11 + $0xe8] sm:$0xff]
        %v2944 = vld [vmem:[#allocation11 + $0xf0] sm:$0xff]
        %v2945 = vld [vmem:[#allocation11 + $0xf8] sm:$0xf]
        %v2946 = vld [vmem:[#allocation11 + $0xfc] sm:$0xff]
        %v2947 = vld [vmem:[#allocation11 + $0x104] sm:$0xff]
        %v2948 = vld [vmem:[#allocation11 + $0x10c] sm:$0xff]
        %v2949 = vld [vmem:[#allocation11 + $0x114] sm:$0xf]
        %v2950 = vld [vmem:[#allocation11 + $0x118] sm:$0xff]
        %v2951 = vld [vmem:[#allocation11 + $0x120] sm:$0xff]
        %v2952 = vld [vmem:[#allocation11 + $0x128] sm:$0xff]
        %v2953 = vld [vmem:[#allocation11 + $0x130] sm:$0xf]
        %v2954 = vld [vmem:[#allocation11 + $0x134] sm:$0xff]
        %v2955 = vld [vmem:[#allocation11 + $0x13c] sm:$0xff]
        %v2956 = vld [vmem:[#allocation11 + $0x144] sm:$0xff]
        %v2957 = vld [vmem:[#allocation11 + $0x14c] sm:$0xf]
        %v2958 = vld [vmem:[#allocation11 + $0x150] sm:$0xff]
        %v2959 = vld [vmem:[#allocation11 + $0x158] sm:$0xff]
        %v2960 = vld [vmem:[#allocation11 + $0x160] sm:$0xff]
        %v2961 = vld [vmem:[#allocation11 + $0x168] sm:$0xf]
        %v2962 = vld [vmem:[#allocation11 + $0x16c] sm:$0xff]
        %v2963 = vld [vmem:[#allocation11 + $0x174] sm:$0xff]
        %v2964 = vld [vmem:[#allocation11 + $0x17c] sm:$0xff]
        %v2965 = vld [vmem:[#allocation11 + $0x184] sm:$0xf]
        %v2966 = vld [vmem:[#allocation11 + $0x188] sm:$0xff]
        %v2967 = vld [vmem:[#allocation11 + $0x190] sm:$0xff]
        %v2968 = vld [vmem:[#allocation11 + $0x198] sm:$0xff]
        %v2969 = vld [vmem:[#allocation11 + $0x1a0] sm:$0xf]
        %v2970 = vld [vmem:[#allocation11 + $0x1a4] sm:$0xff]
        %v2971 = vld [vmem:[#allocation11 + $0x1ac] sm:$0xff]
        %v2972 = vld [vmem:[#allocation11 + $0x1b4] sm:$0xff]
        %v2973 = vld [vmem:[#allocation11 + $0x1bc] sm:$0xf]
        %v2974 = vld [vmem:[#allocation11 + $0x1c0] sm:$0xff]
        %v2975 = vld [vmem:[#allocation11 + $0x1c8] sm:$0xff]
        %v2976 = vld [vmem:[#allocation11 + $0x1d0] sm:$0xff]
        %v2977 = vld [vmem:[#allocation11 + $0x1d8] sm:$0xf]
        %v2978 = vld [vmem:[#allocation11 + $0x1dc] sm:$0xff]
        %v2979 = vld [vmem:[#allocation11 + $0x1e4] sm:$0xff]
        %v2980 = vld [vmem:[#allocation11 + $0x1ec] sm:$0xff]
        %v2981 = vld [vmem:[#allocation11 + $0x1f4] sm:$0xf]
        %v2982 = vld [vmem:[#allocation11 + $0x1f8] sm:$0xff]
        %v2983 = vld [vmem:[#allocation11 + $0x200] sm:$0xff]
        %v2984 = vld [vmem:[#allocation11 + $0x208] sm:$0xff]
        %v2985 = vld [vmem:[#allocation11 + $0x210] sm:$0xf]
        %v2986 = vld [vmem:[#allocation11 + $0x214] sm:$0xff]
        %v2987 = vld [vmem:[#allocation11 + $0x21c] sm:$0xff]
        %v2988 = vld [vmem:[#allocation11 + $0x224] sm:$0xff]
        %v2989 = vld [vmem:[#allocation11 + $0x22c] sm:$0xf]
        %v2990 = vld [vmem:[#allocation11 + $0x230] sm:$0xff]
        %v2991 = vld [vmem:[#allocation11 + $0x238] sm:$0xff]
        %v2992 = vld [vmem:[#allocation11 + $0x240] sm:$0xff]
        %v2993 = vld [vmem:[#allocation11 + $0x248] sm:$0xf]
        %v2994 = vld [vmem:[#allocation11 + $0x24c] sm:$0xff]
        %v2995 = vld [vmem:[#allocation11 + $0x254] sm:$0xff]
        %v2996 = vld [vmem:[#allocation11 + $0x25c] sm:$0xff]
        %v2997 = vld [vmem:[#allocation11 + $0x264] sm:$0xf]
        %v2998 = vld [vmem:[#allocation11 + $0x268] sm:$0xff]
        %v2999 = vld [vmem:[#allocation11 + $0x270] sm:$0xff]
        %v3000 = vld [vmem:[#allocation11 + $0x278] sm:$0xff]
        %v3001 = vld [vmem:[#allocation11 + $0x280] sm:$0xf]
        %v3002 = vld [vmem:[#allocation11 + $0x284] sm:$0xff]
        %v3003 = vld [vmem:[#allocation11 + $0x28c] sm:$0xff]
        %v3004 = vld [vmem:[#allocation11 + $0x294] sm:$0xff]
        %v3005 = vld [vmem:[#allocation11 + $0x29c] sm:$0xf]
        %v3006 = vld [vmem:[#allocation11 + $0x2a0] sm:$0xff]
        %v3007 = vld [vmem:[#allocation11 + $0x2a8] sm:$0xff]
        %v3008 = vld [vmem:[#allocation11 + $0x2b0] sm:$0xff]
        %v3009 = vld [vmem:[#allocation11 + $0x2b8] sm:$0xf]
        %v3010 = vld [vmem:[#allocation11 + $0x2bc] sm:$0xff]
        %v3011 = vld [vmem:[#allocation11 + $0x2c4] sm:$0xff]
        %v3012 = vld [vmem:[#allocation11 + $0x2cc] sm:$0xff]
        %v3013 = vld [vmem:[#allocation11 + $0x2d4] sm:$0xf]
        %v3014 = vld [vmem:[#allocation11 + $0x2d8] sm:$0xff]
        %v3015 = vld [vmem:[#allocation11 + $0x2e0] sm:$0xff]
        %v3016 = vld [vmem:[#allocation11 + $0x2e8] sm:$0xff]
        %v3017 = vld [vmem:[#allocation11 + $0x2f0] sm:$0xf]
        %v3018 = vld [vmem:[#allocation11 + $0x2f4] sm:$0xff]
        %v3019 = vld [vmem:[#allocation11 + $0x2fc] sm:$0xff]
        %v3020 = vld [vmem:[#allocation11 + $0x304] sm:$0xff]
        %v3021 = vld [vmem:[#allocation11 + $0x30c] sm:$0xf]
        %v3022 = vld [vmem:[#allocation11 + $0x310] sm:$0xff]
        %v3023 = vld [vmem:[#allocation11 + $0x318] sm:$0xff]
        %v3024 = vld [vmem:[#allocation11 + $0x320] sm:$0xff]
        %v3025 = vld [vmem:[#allocation11 + $0x328] sm:$0xf]
        %v3026 = vld [vmem:[#allocation11 + $0x32c] sm:$0xff]
        %v3027 = vld [vmem:[#allocation11 + $0x334] sm:$0xff]
        %v3028 = vld [vmem:[#allocation11 + $0x33c] sm:$0xff]
        %v3029 = vld [vmem:[#allocation11 + $0x344] sm:$0xf]
        %v3030 = vld [vmem:[#allocation11 + $0x348] sm:$0xff]
        %v3031 = vld [vmem:[#allocation11 + $0x350] sm:$0xff]
        %v3032 = vld [vmem:[#allocation11 + $0x358] sm:$0xff]
        %v3033 = vld [vmem:[#allocation11 + $0x360] sm:$0xf]
        %v3034 = vld [vmem:[#allocation11 + $0x364] sm:$0xff]
        %v3035 = vld [vmem:[#allocation11 + $0x36c] sm:$0xff]
        %v3036 = vld [vmem:[#allocation11 + $0x374] sm:$0xff]
        %v3037 = vld [vmem:[#allocation11 + $0x37c] sm:$0xf]
        %v3038 = vld [vmem:[#allocation11 + $0x380] sm:$0xff]
        %v3039 = vld [vmem:[#allocation11 + $0x388] sm:$0xff]
        %v3040 = vld [vmem:[#allocation11 + $0x390] sm:$0xff]
        %v3041 = vld [vmem:[#allocation11 + $0x398] sm:$0xf]
        %v3042 = vld [vmem:[#allocation11 + $0x39c] sm:$0xff]
        %v3043 = vld [vmem:[#allocation11 + $0x3a4] sm:$0xff]
        %v3044 = vld [vmem:[#allocation11 + $0x3ac] sm:$0xff]
        %v3045 = vld [vmem:[#allocation11 + $0x3b4] sm:$0xf]
        %v3046 = vld [vmem:[#allocation11 + $0x3b8] sm:$0xff]
        %v3047 = vld [vmem:[#allocation11 + $0x3c0] sm:$0xff]
        %v3048 = vld [vmem:[#allocation11 + $0x3c8] sm:$0xff]
        %v3049 = vld [vmem:[#allocation11 + $0x3d0] sm:$0xf]
        %v3050 = vld [vmem:[#allocation11 + $0x3d4] sm:$0xff]
        %v3051 = vld [vmem:[#allocation11 + $0x3dc] sm:$0xff]
        %v3052 = vld [vmem:[#allocation11 + $0x3e4] sm:$0xff]
        %v3053 = vld [vmem:[#allocation11 + $0x3ec] sm:$0xf]
        %v3054 = vld [vmem:[#allocation11 + $0x3f0] sm:$0xff]
        %v3055 = vld [vmem:[#allocation11 + $0x3f8] sm:$0xff]
        %v3056 = vld [vmem:[#allocation11 + $0x400] sm:$0xff]
        %v3057 = vld [vmem:[#allocation11 + $0x408] sm:$0xf]
        %v3058 = vld [vmem:[#allocation11 + $0x40c] sm:$0xff]
        %v3059 = vld [vmem:[#allocation11 + $0x414] sm:$0xff]
        %v3060 = vld [vmem:[#allocation11 + $0x41c] sm:$0xff]
        %v3061 = vld [vmem:[#allocation11 + $0x424] sm:$0xf]
        %v3062 = vld [vmem:[#allocation11 + $0x428] sm:$0xff]
        %v3063 = vld [vmem:[#allocation11 + $0x430] sm:$0xff]
        %v3064 = vld [vmem:[#allocation11 + $0x438] sm:$0xff]
        %v3065 = vld [vmem:[#allocation11 + $0x440] sm:$0xf]
        %v3066 = vld [vmem:[#allocation11 + $0x444] sm:$0xff]
        %v3067 = vld [vmem:[#allocation11 + $0x44c] sm:$0xff]
        %v3068 = vld [vmem:[#allocation11 + $0x454] sm:$0xff]
        %v3069 = vld [vmem:[#allocation11 + $0x45c] sm:$0xf]
        %v3070 = vld [vmem:[#allocation11 + $0x460] sm:$0xff]
        %v3071 = vld [vmem:[#allocation11 + $0x468] sm:$0xff]
        %v3072 = vld [vmem:[#allocation11 + $0x470] sm:$0xff]
        %v3073 = vld [vmem:[#allocation11 + $0x478] sm:$0xf]
        %v3074 = vld [vmem:[#allocation11 + $0x47c] sm:$0xff]
        %v3075 = vld [vmem:[#allocation11 + $0x484] sm:$0xff]
        %v3076 = vld [vmem:[#allocation11 + $0x48c] sm:$0xff]
        %v3077 = vld [vmem:[#allocation11 + $0x494] sm:$0xf]
        %v3078 = vld [vmem:[#allocation11 + $0x498] sm:$0xff]
        %v3079 = vld [vmem:[#allocation11 + $0x4a0] sm:$0xff]
        %v3080 = vld [vmem:[#allocation11 + $0x4a8] sm:$0xff]
        %v3081 = vld [vmem:[#allocation11 + $0x4b0] sm:$0xf]
        %v3082 = vld [vmem:[#allocation11 + $0x4b4] sm:$0xff]
        %v3083 = vld [vmem:[#allocation11 + $0x4bc] sm:$0xff]
        %v3084 = vld [vmem:[#allocation11 + $0x4c4] sm:$0xff]
        %v3085 = vld [vmem:[#allocation11 + $0x4cc] sm:$0xf]
        %v3086 = vld [vmem:[#allocation11 + $0x4d0] sm:$0xff]
        %v3087 = vld [vmem:[#allocation11 + $0x4d8] sm:$0xff]
        %v3088 = vld [vmem:[#allocation11 + $0x4e0] sm:$0xff]
        %v3089 = vld [vmem:[#allocation11 + $0x4e8] sm:$0xf]
        %v3090 = vld [vmem:[#allocation11 + $0x4ec] sm:$0xff]
        %v3091 = vld [vmem:[#allocation11 + $0x4f4] sm:$0xff]
        %v3092 = vld [vmem:[#allocation11 + $0x4fc] sm:$0xff]
        %v3093 = vld [vmem:[#allocation11 + $0x504] sm:$0xf]
        %v3094 = vld [vmem:[#allocation11 + $0x508] sm:$0xff]
        %v3095 = vld [vmem:[#allocation11 + $0x510] sm:$0xff]
        %v3096 = vld [vmem:[#allocation11 + $0x518] sm:$0xff]
        %v3097 = vld [vmem:[#allocation11 + $0x520] sm:$0xf]
        %v3098 = vld [vmem:[#allocation11 + $0x524] sm:$0xff]
        %v3099 = vld [vmem:[#allocation11 + $0x52c] sm:$0xff]
        %v3100 = vld [vmem:[#allocation11 + $0x534] sm:$0xff]
        %v3101 = vld [vmem:[#allocation11 + $0x53c] sm:$0xf]
        %v3102 = vld [vmem:[#allocation11 + $0x540] sm:$0xff]
        %v3103 = vld [vmem:[#allocation11 + $0x548] sm:$0xff]
        %v3104 = vld [vmem:[#allocation11 + $0x550] sm:$0xff]
        %v3105 = vld [vmem:[#allocation11 + $0x558] sm:$0xf]
        %v3106 = vld [vmem:[#allocation11 + $0x55c] sm:$0xff]
        %v3107 = vld [vmem:[#allocation11 + $0x564] sm:$0xff]
        %v3108 = vld [vmem:[#allocation11 + $0x56c] sm:$0xff]
        %v3109 = vld [vmem:[#allocation11 + $0x574] sm:$0xf]
        %v3110 = vld [vmem:[#allocation11 + $0x578] sm:$0xff]
        %v3111 = vld [vmem:[#allocation11 + $0x580] sm:$0xff]
        %v3112 = vld [vmem:[#allocation11 + $0x588] sm:$0xff]
        %v3113 = vld [vmem:[#allocation11 + $0x590] sm:$0xf]
        %v3114 = vld [vmem:[#allocation11 + $0x594] sm:$0xff]
        %v3115 = vld [vmem:[#allocation11 + $0x59c] sm:$0xff]
        %v3116 = vld [vmem:[#allocation11 + $0x5a4] sm:$0xff]
        %v3117 = vld [vmem:[#allocation11 + $0x5ac] sm:$0xf]
        %v3118 = vld [vmem:[#allocation11 + $0x5b0] sm:$0xff]
        %v3119 = vld [vmem:[#allocation11 + $0x5b8] sm:$0xff]
        %v3120 = vld [vmem:[#allocation11 + $0x5c0] sm:$0xff]
        %v3121 = vld [vmem:[#allocation11 + $0x5c8] sm:$0xf]
        %v3122 = vld [vmem:[#allocation11 + $0x5cc] sm:$0xff]
        %v3123 = vld [vmem:[#allocation11 + $0x5d4] sm:$0xff]
        %v3124 = vld [vmem:[#allocation11 + $0x5dc] sm:$0xff]
        %v3125 = vld [vmem:[#allocation11 + $0x5e4] sm:$0xf]
        %v3126 = vld [vmem:[#allocation11 + $0x5e8] sm:$0xff]
        %v3127 = vld [vmem:[#allocation11 + $0x5f0] sm:$0xff]
        %v3128 = vld [vmem:[#allocation11 + $0x5f8] sm:$0xff]
        %v3129 = vld [vmem:[#allocation11 + $0x600] sm:$0xf]
        %v3130 = vld [vmem:[#allocation11 + $0x604] sm:$0xff]
        %v3131 = vld [vmem:[#allocation11 + $0x60c] sm:$0xff]
        %v3132 = vld [vmem:[#allocation11 + $0x614] sm:$0xff]
        %v3133 = vld [vmem:[#allocation11 + $0x61c] sm:$0xf]
        %v3134 = vld [vmem:[#allocation11 + $0x620] sm:$0xff]
        %v3135 = vld [vmem:[#allocation11 + $0x628] sm:$0xff]
        %v3136 = vld [vmem:[#allocation11 + $0x630] sm:$0xff]
        %v3137 = vld [vmem:[#allocation11 + $0x638] sm:$0xf]
        %v3138 = vld [vmem:[#allocation11 + $0x63c] sm:$0xff]
        %v3139 = vld [vmem:[#allocation11 + $0x644] sm:$0xff]
        %v3140 = vld [vmem:[#allocation11 + $0x64c] sm:$0xff]
        %v3141 = vld [vmem:[#allocation11 + $0x654] sm:$0xf]
        %v3142 = vld [vmem:[#allocation11 + $0x658] sm:$0xff]
        %v3143 = vld [vmem:[#allocation11 + $0x660] sm:$0xff]
        %v3144 = vld [vmem:[#allocation11 + $0x668] sm:$0xff]
        %v3145 = vld [vmem:[#allocation11 + $0x670] sm:$0xf]
        %v3146 = vld [vmem:[#allocation11 + $0x674] sm:$0xff]
        %v3147 = vld [vmem:[#allocation11 + $0x67c] sm:$0xff]
        %v3148 = vld [vmem:[#allocation11 + $0x684] sm:$0xff]
        %v3149 = vld [vmem:[#allocation11 + $0x68c] sm:$0xf]
        %v3150 = vld [vmem:[#allocation11 + $0x690] sm:$0xff]
        %v3151 = vld [vmem:[#allocation11 + $0x698] sm:$0xff]
        %v3152 = vld [vmem:[#allocation11 + $0x6a0] sm:$0xff]
        %v3153 = vld [vmem:[#allocation11 + $0x6a8] sm:$0xf]
        %v3154 = vld [vmem:[#allocation11 + $0x6ac] sm:$0xff]
        %v3155 = vld [vmem:[#allocation11 + $0x6b4] sm:$0xff]
        %v3156 = vld [vmem:[#allocation11 + $0x6bc] sm:$0xff]
        %v3157 = vld [vmem:[#allocation11 + $0x6c4] sm:$0xf]
        %v3158 = vld [vmem:[#allocation11 + $0x6c8] sm:$0xff]
        %v3159 = vld [vmem:[#allocation11 + $0x6d0] sm:$0xff]
        %v3160 = vld [vmem:[#allocation11 + $0x6d8] sm:$0xff]
        %v3161 = vld [vmem:[#allocation11 + $0x6e0] sm:$0xf]
        %v3162 = vld [vmem:[#allocation11 + $0x6e4] sm:$0xff]
        %v3163 = vld [vmem:[#allocation11 + $0x6ec] sm:$0xff]
        %v3164 = vld [vmem:[#allocation11 + $0x6f4] sm:$0xff]
        %v3165 = vld [vmem:[#allocation11 + $0x6fc] sm:$0xf]
        %v3166 = vld [vmem:[%s9] sm:$0xff]
        %v3168 = vlaneseq
        %v3169 = vshrl.u32 %v3168, 7
        %v3170 = vsub.s32 0, %v3169
        %v3171 = vrot.slane %v3166, %v3170
        %v3172 = vlaneseq
        %v3173 = vshrl.u32 %v3172, 7
        %v3174 = vsub.s32 1, %v3173
        %v3175 = vrot.slane %v3166, %v3174
        %v3176 = vlaneseq
        %v3177 = vshrl.u32 %v3176, 7
        %v3178 = vsub.s32 2, %v3177
        %v3179 = vrot.slane %v3166, %v3178
        %v3180 = vlaneseq
        %v3181 = vshrl.u32 %v3180, 7
        %v3182 = vsub.s32 3, %v3181
        %v3183 = vrot.slane %v3166, %v3182
        %v3184 = vlaneseq
        %v3185 = vshrl.u32 %v3184, 7
        %v3186 = vsub.s32 4, %v3185
        %v3187 = vrot.slane %v3166, %v3186
        %v3188 = vlaneseq
        %v3189 = vshrl.u32 %v3188, 7
        %v3190 = vsub.s32 5, %v3189
        %v3191 = vrot.slane %v3166, %v3190
        %v3192 = vlaneseq
        %v3193 = vshrl.u32 %v3192, 7
        %v3194 = vsub.s32 6, %v3193
        %v3195 = vrot.slane %v3166, %v3194
        %v3459 = vunpack.c.l.b16 %v2910
        %v3460 = vunpack.c.h.b16 %v2910
        %v3461 = vunpack.c.l.b16 %v2911
        %v3462 = vunpack.c.h.b16 %v2911
        %v3463 = vunpack.c.l.b16 %v2912
        %v3464 = vunpack.c.h.b16 %v2912
        %v3465 = vunpack.c.l.b16 %v2913
        %v3466 = vunpack.c.l.b16 %v2914
        %v3467 = vunpack.c.h.b16 %v2914
        %v3468 = vunpack.c.l.b16 %v2915
        %v3469 = vunpack.c.h.b16 %v2915
        %v3470 = vunpack.c.l.b16 %v2916
        %v3471 = vunpack.c.h.b16 %v2916
        %v3472 = vunpack.c.l.b16 %v2917
        %v3473 = vunpack.c.l.b16 %v2918
        %v3474 = vunpack.c.h.b16 %v2918
        %v3475 = vunpack.c.l.b16 %v2919
        %v3476 = vunpack.c.h.b16 %v2919
        %v3477 = vunpack.c.l.b16 %v2920
        %v3478 = vunpack.c.h.b16 %v2920
        %v3479 = vunpack.c.l.b16 %v2921
        %v3480 = vunpack.c.l.b16 %v2922
        %v3481 = vunpack.c.h.b16 %v2922
        %v3482 = vunpack.c.l.b16 %v2923
        %v3483 = vunpack.c.h.b16 %v2923
        %v3484 = vunpack.c.l.b16 %v2924
        %v3485 = vunpack.c.h.b16 %v2924
        %v3486 = vunpack.c.l.b16 %v2925
        %v3487 = vunpack.c.l.b16 %v2926
        %v3488 = vunpack.c.h.b16 %v2926
        %v3489 = vunpack.c.l.b16 %v2927
        %v3490 = vunpack.c.h.b16 %v2927
        %v3491 = vunpack.c.l.b16 %v2928
        %v3492 = vunpack.c.h.b16 %v2928
        %v3493 = vunpack.c.l.b16 %v2929
        %v3494 = vunpack.c.l.b16 %v2930
        %v3495 = vunpack.c.h.b16 %v2930
        %v3496 = vunpack.c.l.b16 %v2931
        %v3497 = vunpack.c.h.b16 %v2931
        %v3498 = vunpack.c.l.b16 %v2932
        %v3499 = vunpack.c.h.b16 %v2932
        %v3500 = vunpack.c.l.b16 %v2933
        %v3501 = vunpack.c.l.b16 %v2934
        %v3502 = vunpack.c.h.b16 %v2934
        %v3503 = vunpack.c.l.b16 %v2935
        %v3504 = vunpack.c.h.b16 %v2935
        %v3505 = vunpack.c.l.b16 %v2936
        %v3506 = vunpack.c.h.b16 %v2936
        %v3507 = vunpack.c.l.b16 %v2937
        %v3508 = vunpack.c.l.b16 %v2938
        %v3509 = vunpack.c.h.b16 %v2938
        %v3510 = vunpack.c.l.b16 %v2939
        %v3511 = vunpack.c.h.b16 %v2939
        %v3512 = vunpack.c.l.b16 %v2940
        %v3513 = vunpack.c.h.b16 %v2940
        %v3514 = vunpack.c.l.b16 %v2941
        %v3515 = vunpack.c.l.b16 %v2942
        %v3516 = vunpack.c.h.b16 %v2942
        %v3517 = vunpack.c.l.b16 %v2943
        %v3518 = vunpack.c.h.b16 %v2943
        %v3519 = vunpack.c.l.b16 %v2944
        %v3520 = vunpack.c.h.b16 %v2944
        %v3521 = vunpack.c.l.b16 %v2945
        %v3522 = vunpack.c.l.b16 %v2946
        %v3523 = vunpack.c.h.b16 %v2946
        %v3524 = vunpack.c.l.b16 %v2947
        %v3525 = vunpack.c.h.b16 %v2947
        %v3526 = vunpack.c.l.b16 %v2948
        %v3527 = vunpack.c.h.b16 %v2948
        %v3528 = vunpack.c.l.b16 %v2949
        %v3529 = vunpack.c.l.b16 %v2950
        %v3530 = vunpack.c.h.b16 %v2950
        %v3531 = vunpack.c.l.b16 %v2951
        %v3532 = vunpack.c.h.b16 %v2951
        %v3533 = vunpack.c.l.b16 %v2952
        %v3534 = vunpack.c.h.b16 %v2952
        %v3535 = vunpack.c.l.b16 %v2953
        %v3536 = vunpack.c.l.b16 %v2954
        %v3537 = vunpack.c.h.b16 %v2954
        %v3538 = vunpack.c.l.b16 %v2955
        %v3539 = vunpack.c.h.b16 %v2955
        %v3540 = vunpack.c.l.b16 %v2956
        %v3541 = vunpack.c.h.b16 %v2956
        %v3542 = vunpack.c.l.b16 %v2957
        %v3543 = vunpack.c.l.b16 %v2958
        %v3544 = vunpack.c.h.b16 %v2958
        %v3545 = vunpack.c.l.b16 %v2959
        %v3546 = vunpack.c.h.b16 %v2959
        %v3547 = vunpack.c.l.b16 %v2960
        %v3548 = vunpack.c.h.b16 %v2960
        %v3549 = vunpack.c.l.b16 %v2961
        %v3550 = vunpack.c.l.b16 %v2962
        %v3551 = vunpack.c.h.b16 %v2962
        %v3552 = vunpack.c.l.b16 %v2963
        %v3553 = vunpack.c.h.b16 %v2963
        %v3554 = vunpack.c.l.b16 %v2964
        %v3555 = vunpack.c.h.b16 %v2964
        %v3556 = vunpack.c.l.b16 %v2965
        %v3557 = vunpack.c.l.b16 %v2966
        %v3558 = vunpack.c.h.b16 %v2966
        %v3559 = vunpack.c.l.b16 %v2967
        %v3560 = vunpack.c.h.b16 %v2967
        %v3561 = vunpack.c.l.b16 %v2968
        %v3562 = vunpack.c.h.b16 %v2968
        %v3563 = vunpack.c.l.b16 %v2969
        %v3564 = vunpack.c.l.b16 %v2970
        %v3565 = vunpack.c.h.b16 %v2970
        %v3566 = vunpack.c.l.b16 %v2971
        %v3567 = vunpack.c.h.b16 %v2971
        %v3568 = vunpack.c.l.b16 %v2972
        %v3569 = vunpack.c.h.b16 %v2972
        %v3570 = vunpack.c.l.b16 %v2973
        %v3571 = vunpack.c.l.b16 %v2974
        %v3572 = vunpack.c.h.b16 %v2974
        %v3573 = vunpack.c.l.b16 %v2975
        %v3574 = vunpack.c.h.b16 %v2975
        %v3575 = vunpack.c.l.b16 %v2976
        %v3576 = vunpack.c.h.b16 %v2976
        %v3577 = vunpack.c.l.b16 %v2977
        %v3578 = vunpack.c.l.b16 %v2978
        %v3579 = vunpack.c.h.b16 %v2978
        %v3580 = vunpack.c.l.b16 %v2979
        %v3581 = vunpack.c.h.b16 %v2979
        %v3582 = vunpack.c.l.b16 %v2980
        %v3583 = vunpack.c.h.b16 %v2980
        %v3584 = vunpack.c.l.b16 %v2981
        %v3585 = vunpack.c.l.b16 %v2982
        %v3586 = vunpack.c.h.b16 %v2982
        %v3587 = vunpack.c.l.b16 %v2983
        %v3588 = vunpack.c.h.b16 %v2983
        %v3589 = vunpack.c.l.b16 %v2984
        %v3590 = vunpack.c.h.b16 %v2984
        %v3591 = vunpack.c.l.b16 %v2985
        %v3592 = vunpack.c.l.b16 %v2986
        %v3593 = vunpack.c.h.b16 %v2986
        %v3594 = vunpack.c.l.b16 %v2987
        %v3595 = vunpack.c.h.b16 %v2987
        %v3596 = vunpack.c.l.b16 %v2988
        %v3597 = vunpack.c.h.b16 %v2988
        %v3598 = vunpack.c.l.b16 %v2989
        %v3599 = vunpack.c.l.b16 %v2990
        %v3600 = vunpack.c.h.b16 %v2990
        %v3601 = vunpack.c.l.b16 %v2991
        %v3602 = vunpack.c.h.b16 %v2991
        %v3603 = vunpack.c.l.b16 %v2992
        %v3604 = vunpack.c.h.b16 %v2992
        %v3605 = vunpack.c.l.b16 %v2993
        %v3606 = vunpack.c.l.b16 %v2994
        %v3607 = vunpack.c.h.b16 %v2994
        %v3608 = vunpack.c.l.b16 %v2995
        %v3609 = vunpack.c.h.b16 %v2995
        %v3610 = vunpack.c.l.b16 %v2996
        %v3611 = vunpack.c.h.b16 %v2996
        %v3612 = vunpack.c.l.b16 %v2997
        %v3613 = vunpack.c.l.b16 %v2998
        %v3614 = vunpack.c.h.b16 %v2998
        %v3615 = vunpack.c.l.b16 %v2999
        %v3616 = vunpack.c.h.b16 %v2999
        %v3617 = vunpack.c.l.b16 %v3000
        %v3618 = vunpack.c.h.b16 %v3000
        %v3619 = vunpack.c.l.b16 %v3001
        %v3620 = vunpack.c.l.b16 %v3002
        %v3621 = vunpack.c.h.b16 %v3002
        %v3622 = vunpack.c.l.b16 %v3003
        %v3623 = vunpack.c.h.b16 %v3003
        %v3624 = vunpack.c.l.b16 %v3004
        %v3625 = vunpack.c.h.b16 %v3004
        %v3626 = vunpack.c.l.b16 %v3005
        %v3627 = vunpack.c.l.b16 %v3006
        %v3628 = vunpack.c.h.b16 %v3006
        %v3629 = vunpack.c.l.b16 %v3007
        %v3630 = vunpack.c.h.b16 %v3007
        %v3631 = vunpack.c.l.b16 %v3008
        %v3632 = vunpack.c.h.b16 %v3008
        %v3633 = vunpack.c.l.b16 %v3009
        %v3634 = vunpack.c.l.b16 %v3010
        %v3635 = vunpack.c.h.b16 %v3010
        %v3636 = vunpack.c.l.b16 %v3011
        %v3637 = vunpack.c.h.b16 %v3011
        %v3638 = vunpack.c.l.b16 %v3012
        %v3639 = vunpack.c.h.b16 %v3012
        %v3640 = vunpack.c.l.b16 %v3013
        %v3641 = vunpack.c.l.b16 %v3014
        %v3642 = vunpack.c.h.b16 %v3014
        %v3643 = vunpack.c.l.b16 %v3015
        %v3644 = vunpack.c.h.b16 %v3015
        %v3645 = vunpack.c.l.b16 %v3016
        %v3646 = vunpack.c.h.b16 %v3016
        %v3647 = vunpack.c.l.b16 %v3017
        %v3648 = vunpack.c.l.b16 %v3018
        %v3649 = vunpack.c.h.b16 %v3018
        %v3650 = vunpack.c.l.b16 %v3019
        %v3651 = vunpack.c.h.b16 %v3019
        %v3652 = vunpack.c.l.b16 %v3020
        %v3653 = vunpack.c.h.b16 %v3020
        %v3654 = vunpack.c.l.b16 %v3021
        %v3655 = vunpack.c.l.b16 %v3022
        %v3656 = vunpack.c.h.b16 %v3022
        %v3657 = vunpack.c.l.b16 %v3023
        %v3658 = vunpack.c.h.b16 %v3023
        %v3659 = vunpack.c.l.b16 %v3024
        %v3660 = vunpack.c.h.b16 %v3024
        %v3661 = vunpack.c.l.b16 %v3025
        %v3662 = vunpack.c.l.b16 %v3026
        %v3663 = vunpack.c.h.b16 %v3026
        %v3664 = vunpack.c.l.b16 %v3027
        %v3665 = vunpack.c.h.b16 %v3027
        %v3666 = vunpack.c.l.b16 %v3028
        %v3667 = vunpack.c.h.b16 %v3028
        %v3668 = vunpack.c.l.b16 %v3029
        %v3669 = vunpack.c.l.b16 %v3030
        %v3670 = vunpack.c.h.b16 %v3030
        %v3671 = vunpack.c.l.b16 %v3031
        %v3672 = vunpack.c.h.b16 %v3031
        %v3673 = vunpack.c.l.b16 %v3032
        %v3674 = vunpack.c.h.b16 %v3032
        %v3675 = vunpack.c.l.b16 %v3033
        %v3676 = vunpack.c.l.b16 %v3034
        %v3677 = vunpack.c.h.b16 %v3034
        %v3678 = vunpack.c.l.b16 %v3035
        %v3679 = vunpack.c.h.b16 %v3035
        %v3680 = vunpack.c.l.b16 %v3036
        %v3681 = vunpack.c.h.b16 %v3036
        %v3682 = vunpack.c.l.b16 %v3037
        %v3683 = vunpack.c.l.b16 %v3038
        %v3684 = vunpack.c.h.b16 %v3038
        %v3685 = vunpack.c.l.b16 %v3039
        %v3686 = vunpack.c.h.b16 %v3039
        %v3687 = vunpack.c.l.b16 %v3040
        %v3688 = vunpack.c.h.b16 %v3040
        %v3689 = vunpack.c.l.b16 %v3041
        %v3690 = vunpack.c.l.b16 %v3042
        %v3691 = vunpack.c.h.b16 %v3042
        %v3692 = vunpack.c.l.b16 %v3043
        %v3693 = vunpack.c.h.b16 %v3043
        %v3694 = vunpack.c.l.b16 %v3044
        %v3695 = vunpack.c.h.b16 %v3044
        %v3696 = vunpack.c.l.b16 %v3045
        %v3697 = vunpack.c.l.b16 %v3046
        %v3698 = vunpack.c.h.b16 %v3046
        %v3699 = vunpack.c.l.b16 %v3047
        %v3700 = vunpack.c.h.b16 %v3047
        %v3701 = vunpack.c.l.b16 %v3048
        %v3702 = vunpack.c.h.b16 %v3048
        %v3703 = vunpack.c.l.b16 %v3049
        %v3704 = vunpack.c.l.b16 %v3050
        %v3705 = vunpack.c.h.b16 %v3050
        %v3706 = vunpack.c.l.b16 %v3051
        %v3707 = vunpack.c.h.b16 %v3051
        %v3708 = vunpack.c.l.b16 %v3052
        %v3709 = vunpack.c.h.b16 %v3052
        %v3710 = vunpack.c.l.b16 %v3053
        %v3711 = vunpack.c.l.b16 %v3054
        %v3712 = vunpack.c.h.b16 %v3054
        %v3713 = vunpack.c.l.b16 %v3055
        %v3714 = vunpack.c.h.b16 %v3055
        %v3715 = vunpack.c.l.b16 %v3056
        %v3716 = vunpack.c.h.b16 %v3056
        %v3717 = vunpack.c.l.b16 %v3057
        %v3718 = vunpack.c.l.b16 %v3058
        %v3719 = vunpack.c.h.b16 %v3058
        %v3720 = vunpack.c.l.b16 %v3059
        %v3721 = vunpack.c.h.b16 %v3059
        %v3722 = vunpack.c.l.b16 %v3060
        %v3723 = vunpack.c.h.b16 %v3060
        %v3724 = vunpack.c.l.b16 %v3061
        %v3725 = vunpack.c.l.b16 %v3062
        %v3726 = vunpack.c.h.b16 %v3062
        %v3727 = vunpack.c.l.b16 %v3063
        %v3728 = vunpack.c.h.b16 %v3063
        %v3729 = vunpack.c.l.b16 %v3064
        %v3730 = vunpack.c.h.b16 %v3064
        %v3731 = vunpack.c.l.b16 %v3065
        %v3732 = vunpack.c.l.b16 %v3066
        %v3733 = vunpack.c.h.b16 %v3066
        %v3734 = vunpack.c.l.b16 %v3067
        %v3735 = vunpack.c.h.b16 %v3067
        %v3736 = vunpack.c.l.b16 %v3068
        %v3737 = vunpack.c.h.b16 %v3068
        %v3738 = vunpack.c.l.b16 %v3069
        %v3739 = vunpack.c.l.b16 %v3070
        %v3740 = vunpack.c.h.b16 %v3070
        %v3741 = vunpack.c.l.b16 %v3071
        %v3742 = vunpack.c.h.b16 %v3071
        %v3743 = vunpack.c.l.b16 %v3072
        %v3744 = vunpack.c.h.b16 %v3072
        %v3745 = vunpack.c.l.b16 %v3073
        %v3746 = vunpack.c.l.b16 %v3074
        %v3747 = vunpack.c.h.b16 %v3074
        %v3748 = vunpack.c.l.b16 %v3075
        %v3749 = vunpack.c.h.b16 %v3075
        %v3750 = vunpack.c.l.b16 %v3076
        %v3751 = vunpack.c.h.b16 %v3076
        %v3752 = vunpack.c.l.b16 %v3077
        %v3753 = vunpack.c.l.b16 %v3078
        %v3754 = vunpack.c.h.b16 %v3078
        %v3755 = vunpack.c.l.b16 %v3079
        %v3756 = vunpack.c.h.b16 %v3079
        %v3757 = vunpack.c.l.b16 %v3080
        %v3758 = vunpack.c.h.b16 %v3080
        %v3759 = vunpack.c.l.b16 %v3081
        %v3760 = vunpack.c.l.b16 %v3082
        %v3761 = vunpack.c.h.b16 %v3082
        %v3762 = vunpack.c.l.b16 %v3083
        %v3763 = vunpack.c.h.b16 %v3083
        %v3764 = vunpack.c.l.b16 %v3084
        %v3765 = vunpack.c.h.b16 %v3084
        %v3766 = vunpack.c.l.b16 %v3085
        %v3767 = vunpack.c.l.b16 %v3086
        %v3768 = vunpack.c.h.b16 %v3086
        %v3769 = vunpack.c.l.b16 %v3087
        %v3770 = vunpack.c.h.b16 %v3087
        %v3771 = vunpack.c.l.b16 %v3088
        %v3772 = vunpack.c.h.b16 %v3088
        %v3773 = vunpack.c.l.b16 %v3089
        %v3774 = vunpack.c.l.b16 %v3090
        %v3775 = vunpack.c.h.b16 %v3090
        %v3776 = vunpack.c.l.b16 %v3091
        %v3777 = vunpack.c.h.b16 %v3091
        %v3778 = vunpack.c.l.b16 %v3092
        %v3779 = vunpack.c.h.b16 %v3092
        %v3780 = vunpack.c.l.b16 %v3093
        %v3781 = vunpack.c.l.b16 %v3094
        %v3782 = vunpack.c.h.b16 %v3094
        %v3783 = vunpack.c.l.b16 %v3095
        %v3784 = vunpack.c.h.b16 %v3095
        %v3785 = vunpack.c.l.b16 %v3096
        %v3786 = vunpack.c.h.b16 %v3096
        %v3787 = vunpack.c.l.b16 %v3097
        %v3788 = vunpack.c.l.b16 %v3098
        %v3789 = vunpack.c.h.b16 %v3098
        %v3790 = vunpack.c.l.b16 %v3099
        %v3791 = vunpack.c.h.b16 %v3099
        %v3792 = vunpack.c.l.b16 %v3100
        %v3793 = vunpack.c.h.b16 %v3100
        %v3794 = vunpack.c.l.b16 %v3101
        %v3795 = vunpack.c.l.b16 %v3102
        %v3796 = vunpack.c.h.b16 %v3102
        %v3797 = vunpack.c.l.b16 %v3103
        %v3798 = vunpack.c.h.b16 %v3103
        %v3799 = vunpack.c.l.b16 %v3104
        %v3800 = vunpack.c.h.b16 %v3104
        %v3801 = vunpack.c.l.b16 %v3105
        %v3802 = vunpack.c.l.b16 %v3106
        %v3803 = vunpack.c.h.b16 %v3106
        %v3804 = vunpack.c.l.b16 %v3107
        %v3805 = vunpack.c.h.b16 %v3107
        %v3806 = vunpack.c.l.b16 %v3108
        %v3807 = vunpack.c.h.b16 %v3108
        %v3808 = vunpack.c.l.b16 %v3109
        %v3809 = vunpack.c.l.b16 %v3110
        %v3810 = vunpack.c.h.b16 %v3110
        %v3811 = vunpack.c.l.b16 %v3111
        %v3812 = vunpack.c.h.b16 %v3111
        %v3813 = vunpack.c.l.b16 %v3112
        %v3814 = vunpack.c.h.b16 %v3112
        %v3815 = vunpack.c.l.b16 %v3113
        %v3816 = vunpack.c.l.b16 %v3114
        %v3817 = vunpack.c.h.b16 %v3114
        %v3818 = vunpack.c.l.b16 %v3115
        %v3819 = vunpack.c.h.b16 %v3115
        %v3820 = vunpack.c.l.b16 %v3116
        %v3821 = vunpack.c.h.b16 %v3116
        %v3822 = vunpack.c.l.b16 %v3117
        %v3823 = vunpack.c.l.b16 %v3118
        %v3824 = vunpack.c.h.b16 %v3118
        %v3825 = vunpack.c.l.b16 %v3119
        %v3826 = vunpack.c.h.b16 %v3119
        %v3827 = vunpack.c.l.b16 %v3120
        %v3828 = vunpack.c.h.b16 %v3120
        %v3829 = vunpack.c.l.b16 %v3121
        %v3830 = vunpack.c.l.b16 %v3122
        %v3831 = vunpack.c.h.b16 %v3122
        %v3832 = vunpack.c.l.b16 %v3123
        %v3833 = vunpack.c.h.b16 %v3123
        %v3834 = vunpack.c.l.b16 %v3124
        %v3835 = vunpack.c.h.b16 %v3124
        %v3836 = vunpack.c.l.b16 %v3125
        %v3837 = vunpack.c.l.b16 %v3126
        %v3838 = vunpack.c.h.b16 %v3126
        %v3839 = vunpack.c.l.b16 %v3127
        %v3840 = vunpack.c.h.b16 %v3127
        %v3841 = vunpack.c.l.b16 %v3128
        %v3842 = vunpack.c.h.b16 %v3128
        %v3843 = vunpack.c.l.b16 %v3129
        %v3844 = vunpack.c.l.b16 %v3130
        %v3845 = vunpack.c.h.b16 %v3130
        %v3846 = vunpack.c.l.b16 %v3131
        %v3847 = vunpack.c.h.b16 %v3131
        %v3848 = vunpack.c.l.b16 %v3132
        %v3849 = vunpack.c.h.b16 %v3132
        %v3850 = vunpack.c.l.b16 %v3133
        %v3851 = vunpack.c.l.b16 %v3134
        %v3852 = vunpack.c.h.b16 %v3134
        %v3853 = vunpack.c.l.b16 %v3135
        %v3854 = vunpack.c.h.b16 %v3135
        %v3855 = vunpack.c.l.b16 %v3136
        %v3856 = vunpack.c.h.b16 %v3136
        %v3857 = vunpack.c.l.b16 %v3137
        %v3858 = vunpack.c.l.b16 %v3138
        %v3859 = vunpack.c.h.b16 %v3138
        %v3860 = vunpack.c.l.b16 %v3139
        %v3861 = vunpack.c.h.b16 %v3139
        %v3862 = vunpack.c.l.b16 %v3140
        %v3863 = vunpack.c.h.b16 %v3140
        %v3864 = vunpack.c.l.b16 %v3141
        %v3865 = vunpack.c.l.b16 %v3142
        %v3866 = vunpack.c.h.b16 %v3142
        %v3867 = vunpack.c.l.b16 %v3143
        %v3868 = vunpack.c.h.b16 %v3143
        %v3869 = vunpack.c.l.b16 %v3144
        %v3870 = vunpack.c.h.b16 %v3144
        %v3871 = vunpack.c.l.b16 %v3145
        %v3872 = vunpack.c.l.b16 %v3146
        %v3873 = vunpack.c.h.b16 %v3146
        %v3874 = vunpack.c.l.b16 %v3147
        %v3875 = vunpack.c.h.b16 %v3147
        %v3876 = vunpack.c.l.b16 %v3148
        %v3877 = vunpack.c.h.b16 %v3148
        %v3878 = vunpack.c.l.b16 %v3149
        %v3879 = vunpack.c.l.b16 %v3150
        %v3880 = vunpack.c.h.b16 %v3150
        %v3881 = vunpack.c.l.b16 %v3151
        %v3882 = vunpack.c.h.b16 %v3151
        %v3883 = vunpack.c.l.b16 %v3152
        %v3884 = vunpack.c.h.b16 %v3152
        %v3885 = vunpack.c.l.b16 %v3153
        %v3886 = vunpack.c.l.b16 %v3154
        %v3887 = vunpack.c.h.b16 %v3154
        %v3888 = vunpack.c.l.b16 %v3155
        %v3889 = vunpack.c.h.b16 %v3155
        %v3890 = vunpack.c.l.b16 %v3156
        %v3891 = vunpack.c.h.b16 %v3156
        %v3892 = vunpack.c.l.b16 %v3157
        %v3893 = vunpack.c.l.b16 %v3158
        %v3894 = vunpack.c.h.b16 %v3158
        %v3895 = vunpack.c.l.b16 %v3159
        %v3896 = vunpack.c.h.b16 %v3159
        %v3897 = vunpack.c.l.b16 %v3160
        %v3898 = vunpack.c.h.b16 %v3160
        %v3899 = vunpack.c.l.b16 %v3161
        %v3900 = vunpack.c.l.b16 %v3162
        %v3901 = vunpack.c.h.b16 %v3162
        %v3902 = vunpack.c.l.b16 %v3163
        %v3903 = vunpack.c.h.b16 %v3163
        %v3904 = vunpack.c.l.b16 %v3164
        %v3905 = vunpack.c.h.b16 %v3164
        %v3906 = vunpack.c.l.b16 %v3165
        %v3907 = vpack.c.b16 %v3466, %v3459
        %v3908 = vpack.c.b16 %v3467, %v3460
        %v3909 = vpack.c.b16 %v3468, %v3461
        %v3910 = vpack.c.b16 %v3469, %v3462
        %v3911 = vpack.c.b16 %v3470, %v3463
        %v3912 = vpack.c.b16 %v3471, %v3464
        %v3913 = vpack.c.b16 %v3472, %v3465
        %v3914 = vpack.c.b16 %v3480, %v3473
        %v3915 = vpack.c.b16 %v3481, %v3474
        %v3916 = vpack.c.b16 %v3482, %v3475
        %v3917 = vpack.c.b16 %v3483, %v3476
        %v3918 = vpack.c.b16 %v3484, %v3477
        %v3919 = vpack.c.b16 %v3485, %v3478
        %v3920 = vpack.c.b16 %v3486, %v3479
        %v3921 = vpack.c.b16 %v3494, %v3487
        %v3922 = vpack.c.b16 %v3495, %v3488
        %v3923 = vpack.c.b16 %v3496, %v3489
        %v3924 = vpack.c.b16 %v3497, %v3490
        %v3925 = vpack.c.b16 %v3498, %v3491
        %v3926 = vpack.c.b16 %v3499, %v3492
        %v3927 = vpack.c.b16 %v3500, %v3493
        %v3928 = vpack.c.b16 %v3508, %v3501
        %v3929 = vpack.c.b16 %v3509, %v3502
        %v3930 = vpack.c.b16 %v3510, %v3503
        %v3931 = vpack.c.b16 %v3511, %v3504
        %v3932 = vpack.c.b16 %v3512, %v3505
        %v3933 = vpack.c.b16 %v3513, %v3506
        %v3934 = vpack.c.b16 %v3514, %v3507
        %v3935 = vpack.c.b16 %v3522, %v3515
        %v3936 = vpack.c.b16 %v3523, %v3516
        %v3937 = vpack.c.b16 %v3524, %v3517
        %v3938 = vpack.c.b16 %v3525, %v3518
        %v3939 = vpack.c.b16 %v3526, %v3519
        %v3940 = vpack.c.b16 %v3527, %v3520
        %v3941 = vpack.c.b16 %v3528, %v3521
        %v3942 = vpack.c.b16 %v3536, %v3529
        %v3943 = vpack.c.b16 %v3537, %v3530
        %v3944 = vpack.c.b16 %v3538, %v3531
        %v3945 = vpack.c.b16 %v3539, %v3532
        %v3946 = vpack.c.b16 %v3540, %v3533
        %v3947 = vpack.c.b16 %v3541, %v3534
        %v3948 = vpack.c.b16 %v3542, %v3535
        %v3949 = vpack.c.b16 %v3550, %v3543
        %v3950 = vpack.c.b16 %v3551, %v3544
        %v3951 = vpack.c.b16 %v3552, %v3545
        %v3952 = vpack.c.b16 %v3553, %v3546
        %v3953 = vpack.c.b16 %v3554, %v3547
        %v3954 = vpack.c.b16 %v3555, %v3548
        %v3955 = vpack.c.b16 %v3556, %v3549
        %v3956 = vpack.c.b16 %v3564, %v3557
        %v3957 = vpack.c.b16 %v3565, %v3558
        %v3958 = vpack.c.b16 %v3566, %v3559
        %v3959 = vpack.c.b16 %v3567, %v3560
        %v3960 = vpack.c.b16 %v3568, %v3561
        %v3961 = vpack.c.b16 %v3569, %v3562
        %v3962 = vpack.c.b16 %v3570, %v3563
        %v3963 = vpack.c.b16 %v3578, %v3571
        %v3964 = vpack.c.b16 %v3579, %v3572
        %v3965 = vpack.c.b16 %v3580, %v3573
        %v3966 = vpack.c.b16 %v3581, %v3574
        %v3967 = vpack.c.b16 %v3582, %v3575
        %v3968 = vpack.c.b16 %v3583, %v3576
        %v3969 = vpack.c.b16 %v3584, %v3577
        %v3970 = vpack.c.b16 %v3592, %v3585
        %v3971 = vpack.c.b16 %v3593, %v3586
        %v3972 = vpack.c.b16 %v3594, %v3587
        %v3973 = vpack.c.b16 %v3595, %v3588
        %v3974 = vpack.c.b16 %v3596, %v3589
        %v3975 = vpack.c.b16 %v3597, %v3590
        %v3976 = vpack.c.b16 %v3598, %v3591
        %v3977 = vpack.c.b16 %v3606, %v3599
        %v3978 = vpack.c.b16 %v3607, %v3600
        %v3979 = vpack.c.b16 %v3608, %v3601
        %v3980 = vpack.c.b16 %v3609, %v3602
        %v3981 = vpack.c.b16 %v3610, %v3603
        %v3982 = vpack.c.b16 %v3611, %v3604
        %v3983 = vpack.c.b16 %v3612, %v3605
        %v3984 = vpack.c.b16 %v3620, %v3613
        %v3985 = vpack.c.b16 %v3621, %v3614
        %v3986 = vpack.c.b16 %v3622, %v3615
        %v3987 = vpack.c.b16 %v3623, %v3616
        %v3988 = vpack.c.b16 %v3624, %v3617
        %v3989 = vpack.c.b16 %v3625, %v3618
        %v3990 = vpack.c.b16 %v3626, %v3619
        %v3991 = vpack.c.b16 %v3634, %v3627
        %v3992 = vpack.c.b16 %v3635, %v3628
        %v3993 = vpack.c.b16 %v3636, %v3629
        %v3994 = vpack.c.b16 %v3637, %v3630
        %v3995 = vpack.c.b16 %v3638, %v3631
        %v3996 = vpack.c.b16 %v3639, %v3632
        %v3997 = vpack.c.b16 %v3640, %v3633
        %v3998 = vpack.c.b16 %v3648, %v3641
        %v3999 = vpack.c.b16 %v3649, %v3642
        %v4000 = vpack.c.b16 %v3650, %v3643
        %v4001 = vpack.c.b16 %v3651, %v3644
        %v4002 = vpack.c.b16 %v3652, %v3645
        %v4003 = vpack.c.b16 %v3653, %v3646
        %v4004 = vpack.c.b16 %v3654, %v3647
        %v4005 = vpack.c.b16 %v3662, %v3655
        %v4006 = vpack.c.b16 %v3663, %v3656
        %v4007 = vpack.c.b16 %v3664, %v3657
        %v4008 = vpack.c.b16 %v3665, %v3658
        %v4009 = vpack.c.b16 %v3666, %v3659
        %v4010 = vpack.c.b16 %v3667, %v3660
        %v4011 = vpack.c.b16 %v3668, %v3661
        %v4012 = vpack.c.b16 %v3676, %v3669
        %v4013 = vpack.c.b16 %v3677, %v3670
        %v4014 = vpack.c.b16 %v3678, %v3671
        %v4015 = vpack.c.b16 %v3679, %v3672
        %v4016 = vpack.c.b16 %v3680, %v3673
        %v4017 = vpack.c.b16 %v3681, %v3674
        %v4018 = vpack.c.b16 %v3682, %v3675
        %v4019 = vpack.c.b16 %v3690, %v3683
        %v4020 = vpack.c.b16 %v3691, %v3684
        %v4021 = vpack.c.b16 %v3692, %v3685
        %v4022 = vpack.c.b16 %v3693, %v3686
        %v4023 = vpack.c.b16 %v3694, %v3687
        %v4024 = vpack.c.b16 %v3695, %v3688
        %v4025 = vpack.c.b16 %v3696, %v3689
        %v4026 = vpack.c.b16 %v3704, %v3697
        %v4027 = vpack.c.b16 %v3705, %v3698
        %v4028 = vpack.c.b16 %v3706, %v3699
        %v4029 = vpack.c.b16 %v3707, %v3700
        %v4030 = vpack.c.b16 %v3708, %v3701
        %v4031 = vpack.c.b16 %v3709, %v3702
        %v4032 = vpack.c.b16 %v3710, %v3703
        %v4033 = vpack.c.b16 %v3718, %v3711
        %v4034 = vpack.c.b16 %v3719, %v3712
        %v4035 = vpack.c.b16 %v3720, %v3713
        %v4036 = vpack.c.b16 %v3721, %v3714
        %v4037 = vpack.c.b16 %v3722, %v3715
        %v4038 = vpack.c.b16 %v3723, %v3716
        %v4039 = vpack.c.b16 %v3724, %v3717
        %v4040 = vpack.c.b16 %v3732, %v3725
        %v4041 = vpack.c.b16 %v3733, %v3726
        %v4042 = vpack.c.b16 %v3734, %v3727
        %v4043 = vpack.c.b16 %v3735, %v3728
        %v4044 = vpack.c.b16 %v3736, %v3729
        %v4045 = vpack.c.b16 %v3737, %v3730
        %v4046 = vpack.c.b16 %v3738, %v3731
        %v4047 = vpack.c.b16 %v3746, %v3739
        %v4048 = vpack.c.b16 %v3747, %v3740
        %v4049 = vpack.c.b16 %v3748, %v3741
        %v4050 = vpack.c.b16 %v3749, %v3742
        %v4051 = vpack.c.b16 %v3750, %v3743
        %v4052 = vpack.c.b16 %v3751, %v3744
        %v4053 = vpack.c.b16 %v3752, %v3745
        %v4054 = vpack.c.b16 %v3760, %v3753
        %v4055 = vpack.c.b16 %v3761, %v3754
        %v4056 = vpack.c.b16 %v3762, %v3755
        %v4057 = vpack.c.b16 %v3763, %v3756
        %v4058 = vpack.c.b16 %v3764, %v3757
        %v4059 = vpack.c.b16 %v3765, %v3758
        %v4060 = vpack.c.b16 %v3766, %v3759
        %v4061 = vpack.c.b16 %v3774, %v3767
        %v4062 = vpack.c.b16 %v3775, %v3768
        %v4063 = vpack.c.b16 %v3776, %v3769
        %v4064 = vpack.c.b16 %v3777, %v3770
        %v4065 = vpack.c.b16 %v3778, %v3771
        %v4066 = vpack.c.b16 %v3779, %v3772
        %v4067 = vpack.c.b16 %v3780, %v3773
        %v4068 = vpack.c.b16 %v3788, %v3781
        %v4069 = vpack.c.b16 %v3789, %v3782
        %v4070 = vpack.c.b16 %v3790, %v3783
        %v4071 = vpack.c.b16 %v3791, %v3784
        %v4072 = vpack.c.b16 %v3792, %v3785
        %v4073 = vpack.c.b16 %v3793, %v3786
        %v4074 = vpack.c.b16 %v3794, %v3787
        %v4075 = vpack.c.b16 %v3802, %v3795
        %v4076 = vpack.c.b16 %v3803, %v3796
        %v4077 = vpack.c.b16 %v3804, %v3797
        %v4078 = vpack.c.b16 %v3805, %v3798
        %v4079 = vpack.c.b16 %v3806, %v3799
        %v4080 = vpack.c.b16 %v3807, %v3800
        %v4081 = vpack.c.b16 %v3808, %v3801
        %v4082 = vpack.c.b16 %v3816, %v3809
        %v4083 = vpack.c.b16 %v3817, %v3810
        %v4084 = vpack.c.b16 %v3818, %v3811
        %v4085 = vpack.c.b16 %v3819, %v3812
        %v4086 = vpack.c.b16 %v3820, %v3813
        %v4087 = vpack.c.b16 %v3821, %v3814
        %v4088 = vpack.c.b16 %v3822, %v3815
        %v4089 = vpack.c.b16 %v3830, %v3823
        %v4090 = vpack.c.b16 %v3831, %v3824
        %v4091 = vpack.c.b16 %v3832, %v3825
        %v4092 = vpack.c.b16 %v3833, %v3826
        %v4093 = vpack.c.b16 %v3834, %v3827
        %v4094 = vpack.c.b16 %v3835, %v3828
        %v4095 = vpack.c.b16 %v3836, %v3829
        %v4096 = vpack.c.b16 %v3844, %v3837
        %v4097 = vpack.c.b16 %v3845, %v3838
        %v4098 = vpack.c.b16 %v3846, %v3839
        %v4099 = vpack.c.b16 %v3847, %v3840
        %v4100 = vpack.c.b16 %v3848, %v3841
        %v4101 = vpack.c.b16 %v3849, %v3842
        %v4102 = vpack.c.b16 %v3850, %v3843
        %v4103 = vpack.c.b16 %v3858, %v3851
        %v4104 = vpack.c.b16 %v3859, %v3852
        %v4105 = vpack.c.b16 %v3860, %v3853
        %v4106 = vpack.c.b16 %v3861, %v3854
        %v4107 = vpack.c.b16 %v3862, %v3855
        %v4108 = vpack.c.b16 %v3863, %v3856
        %v4109 = vpack.c.b16 %v3864, %v3857
        %v4110 = vpack.c.b16 %v3872, %v3865
        %v4111 = vpack.c.b16 %v3873, %v3866
        %v4112 = vpack.c.b16 %v3874, %v3867
        %v4113 = vpack.c.b16 %v3875, %v3868
        %v4114 = vpack.c.b16 %v3876, %v3869
        %v4115 = vpack.c.b16 %v3877, %v3870
        %v4116 = vpack.c.b16 %v3878, %v3871
        %v4117 = vpack.c.b16 %v3886, %v3879
        %v4118 = vpack.c.b16 %v3887, %v3880
        %v4119 = vpack.c.b16 %v3888, %v3881
        %v4120 = vpack.c.b16 %v3889, %v3882
        %v4121 = vpack.c.b16 %v3890, %v3883
        %v4122 = vpack.c.b16 %v3891, %v3884
        %v4123 = vpack.c.b16 %v3892, %v3885
        %v4124 = vpack.c.b16 %v3900, %v3893
        %v4125 = vpack.c.b16 %v3901, %v3894
        %v4126 = vpack.c.b16 %v3902, %v3895
        %v4127 = vpack.c.b16 %v3903, %v3896
        %v4128 = vpack.c.b16 %v3904, %v3897
        %v4129 = vpack.c.b16 %v3905, %v3898
        %v4130 = vpack.c.b16 %v3906, %v3899
        %4355 = vmatprep.subr.bf16.mxu0 %v3908
        %4356 = vmatpush1.bf16.msra.mxu0 %v3907
        %4357 = vmatprep.subr.bf16.mxu0 %v3915
        %4358 = vmatpush1.bf16.msra.mxu0 %v3914
        %4359 = vmatprep.subr.bf16.mxu0 %v3922
        %4360 = vmatpush1.bf16.msra.mxu0 %v3921
        %4361 = vmatprep.subr.bf16.mxu0 %v3929
        %4362 = vmatpush1.bf16.msra.mxu0 %v3928
        %4363 = vmatprep.subr.bf16.mxu0 %v3936
        %4364 = vmatpush1.bf16.msra.mxu0 %v3935
        %4365 = vmatprep.subr.bf16.mxu0 %v3943
        %4366 = vmatpush1.bf16.msra.mxu0 %v3942
        %4367 = vmatprep.subr.bf16.mxu0 %v3950
        %4368 = vmatpush1.bf16.msra.mxu0 %v3949
        %4369 = vmatprep.subr.bf16.mxu0 %v3957
        %4370 = vmatpush1.bf16.msra.mxu0 %v3956
        %4371 = vmatprep.subr.bf16.mxu0 %v3964
        %4372 = vmatpush1.bf16.msra.mxu0 %v3963
        %4373 = vmatprep.subr.bf16.mxu0 %v3971
        %4374 = vmatpush1.bf16.msra.mxu0 %v3970
        %4375 = vmatprep.subr.bf16.mxu0 %v3978
        %4376 = vmatpush1.bf16.msra.mxu0 %v3977
        %4377 = vmatprep.subr.bf16.mxu0 %v3985
        %4378 = vmatpush1.bf16.msra.mxu0 %v3984
        %4379 = vmatprep.subr.bf16.mxu0 %v3992
        %4380 = vmatpush1.bf16.msra.mxu0 %v3991
        %4381 = vmatprep.subr.bf16.mxu0 %v3999
        %4382 = vmatpush1.bf16.msra.mxu0 %v3998
        %4383 = vmatprep.subr.bf16.mxu0 %v4006
        %4384 = vmatpush1.bf16.msra.mxu0 %v4005
        %4385 = vmatprep.subr.bf16.mxu0 %v4013
        %4386 = vmatpush1.bf16.msra.mxu0 %v4012
        %4387 = vmatprep.mubr.bf16.mxu0 %v2907
        %4388 = vmatmul.mubr.bf16.gmra.mrb[0].mxu0 %v2906
        %v4389 = vpop.f32.mrb[0].mxu0
        %v4390 = vadd.f32 %v3171, %v4389
        %v4391 = vpop.f32.mrb[0].mxu0
        %v4392 = vadd.f32 %v3175, %v4391
        %v4393 = vpop.f32.mrb[0].mxu0
        %v4394 = vpop.f32.mrb[0].mxu0
        %4395 = vdwg.mxu0
        %4396 = vmatprep.subr.bf16.mxu0 %v4020
        %4397 = vmatpush1.bf16.msra.mxu0 %v4019
        %4398 = vmatprep.subr.bf16.mxu0 %v4027
        %4399 = vmatpush1.bf16.msra.mxu0 %v4026
        %4400 = vmatprep.subr.bf16.mxu0 %v4034
        %4401 = vmatpush1.bf16.msra.mxu0 %v4033
        %4402 = vmatprep.subr.bf16.mxu0 %v4041
        %4403 = vmatpush1.bf16.msra.mxu0 %v4040
        %4404 = vmatprep.subr.bf16.mxu0 %v4048
        %4405 = vmatpush1.bf16.msra.mxu0 %v4047
        %4406 = vmatprep.subr.bf16.mxu0 %v4055
        %4407 = vmatpush1.bf16.msra.mxu0 %v4054
        %4408 = vmatprep.subr.bf16.mxu0 %v4062
        %4409 = vmatpush1.bf16.msra.mxu0 %v4061
        %4410 = vmatprep.subr.bf16.mxu0 %v4069
        %4411 = vmatpush1.bf16.msra.mxu0 %v4068
        %4412 = vmatprep.subr.bf16.mxu0 %v4076
        %4413 = vmatpush1.bf16.msra.mxu0 %v4075
        %4414 = vmatprep.subr.bf16.mxu0 %v4083
        %4415 = vmatpush1.bf16.msra.mxu0 %v4082
        %4416 = vmatprep.subr.bf16.mxu0 %v4090
        %4417 = vmatpush1.bf16.msra.mxu0 %v4089
        %4418 = vmatprep.subr.bf16.mxu0 %v4097
        %4419 = vmatpush1.bf16.msra.mxu0 %v4096
        %4420 = vmatprep.subr.bf16.mxu0 %v4104
        %4421 = vmatpush1.bf16.msra.mxu0 %v4103
        %4422 = vmatprep.subr.bf16.mxu0 %v4111
        %4423 = vmatpush1.bf16.msra.mxu0 %v4110
        %4424 = vmatprep.subr.bf16.mxu0 %v4118
        %4425 = vmatpush1.bf16.msra.mxu0 %v4117
        %4426 = vmatprep.subr.bf16.mxu0 %v4125
        %4427 = vmatpush1.bf16.msra.mxu0 %v4124
        %4428 = vmatprep.mubr.bf16.mxu0 %v2909
        %4429 = vmatmul.mubr.bf16.gmra.mrb[0].mxu0 %v2908
        %v4430 = vpop.f32.mrb[0].mxu0
        %v4431 = vadd.f32 %v4390, %v4430
        %v4432 = vpop.f32.mrb[0].mxu0
        %v4433 = vadd.f32 %v4392, %v4432
        %v4434 = vpop.f32.mrb[0].mxu0
        %v4435 = vpop.f32.mrb[0].mxu0
        %4436 = vdwg.mxu0
        %4437 = vmatprep.subr.bf16.mxu0 %v3910
        %4438 = vmatpush1.bf16.msra.mxu0 %v3909
        %4439 = vmatprep.subr.bf16.mxu0 %v3917
        %4440 = vmatpush1.bf16.msra.mxu0 %v3916
        %4441 = vmatprep.subr.bf16.mxu0 %v3924
        %4442 = vmatpush1.bf16.msra.mxu0 %v3923
        %4443 = vmatprep.subr.bf16.mxu0 %v3931
        %4444 = vmatpush1.bf16.msra.mxu0 %v3930
        %4445 = vmatprep.subr.bf16.mxu0 %v3938
        %4446 = vmatpush1.bf16.msra.mxu0 %v3937
        %4447 = vmatprep.subr.bf16.mxu0 %v3945
        %4448 = vmatpush1.bf16.msra.mxu0 %v3944
        %4449 = vmatprep.subr.bf16.mxu0 %v3952
        %4450 = vmatpush1.bf16.msra.mxu0 %v3951
        %4451 = vmatprep.subr.bf16.mxu0 %v3959
        %4452 = vmatpush1.bf16.msra.mxu0 %v3958
        %4453 = vmatprep.subr.bf16.mxu0 %v3966
        %4454 = vmatpush1.bf16.msra.mxu0 %v3965
        %4455 = vmatprep.subr.bf16.mxu0 %v3973
        %4456 = vmatpush1.bf16.msra.mxu0 %v3972
        %4457 = vmatprep.subr.bf16.mxu0 %v3980
        %4458 = vmatpush1.bf16.msra.mxu0 %v3979
        %4459 = vmatprep.subr.bf16.mxu0 %v3987
        %4460 = vmatpush1.bf16.msra.mxu0 %v3986
        %4461 = vmatprep.subr.bf16.mxu0 %v3994
        %4462 = vmatpush1.bf16.msra.mxu0 %v3993
        %4463 = vmatprep.subr.bf16.mxu0 %v4001
        %4464 = vmatpush1.bf16.msra.mxu0 %v4000
        %4465 = vmatprep.subr.bf16.mxu0 %v4008
        %4466 = vmatpush1.bf16.msra.mxu0 %v4007
        %4467 = vmatprep.subr.bf16.mxu0 %v4015
        %4468 = vmatpush1.bf16.msra.mxu0 %v4014
        %4469 = vmatprep.mubr.bf16.mxu0 %v2907
        %4470 = vmatmul.mubr.bf16.gmra.mrb[0].mxu0 %v2906
        %v4471 = vpop.f32.mrb[0].mxu0
        %v4472 = vadd.f32 %v3179, %v4471
        %v4473 = vpop.f32.mrb[0].mxu0
        %v4474 = vadd.f32 %v3183, %v4473
        %v4475 = vpop.f32.mrb[0].mxu0
        %v4476 = vpop.f32.mrb[0].mxu0
        %4477 = vdwg.mxu0
        %4478 = vmatprep.subr.bf16.mxu0 %v4022
        %4479 = vmatpush1.bf16.msra.mxu0 %v4021
        %4480 = vmatprep.subr.bf16.mxu0 %v4029
        %4481 = vmatpush1.bf16.msra.mxu0 %v4028
        %4482 = vmatprep.subr.bf16.mxu0 %v4036
        %4483 = vmatpush1.bf16.msra.mxu0 %v4035
        %4484 = vmatprep.subr.bf16.mxu0 %v4043
        %4485 = vmatpush1.bf16.msra.mxu0 %v4042
        %4486 = vmatprep.subr.bf16.mxu0 %v4050
        %4487 = vmatpush1.bf16.msra.mxu0 %v4049
        %4488 = vmatprep.subr.bf16.mxu0 %v4057
        %4489 = vmatpush1.bf16.msra.mxu0 %v4056
        %4490 = vmatprep.subr.bf16.mxu0 %v4064
        %4491 = vmatpush1.bf16.msra.mxu0 %v4063
        %4492 = vmatprep.subr.bf16.mxu0 %v4071
        %4493 = vmatpush1.bf16.msra.mxu0 %v4070
        %4494 = vmatprep.subr.bf16.mxu0 %v4078
        %4495 = vmatpush1.bf16.msra.mxu0 %v4077
        %4496 = vmatprep.subr.bf16.mxu0 %v4085
        %4497 = vmatpush1.bf16.msra.mxu0 %v4084
        %4498 = vmatprep.subr.bf16.mxu0 %v4092
        %4499 = vmatpush1.bf16.msra.mxu0 %v4091
        %4500 = vmatprep.subr.bf16.mxu0 %v4099
        %4501 = vmatpush1.bf16.msra.mxu0 %v4098
        %4502 = vmatprep.subr.bf16.mxu0 %v4106
        %4503 = vmatpush1.bf16.msra.mxu0 %v4105
        %4504 = vmatprep.subr.bf16.mxu0 %v4113
        %4505 = vmatpush1.bf16.msra.mxu0 %v4112
        %4506 = vmatprep.subr.bf16.mxu0 %v4120
        %4507 = vmatpush1.bf16.msra.mxu0 %v4119
        %4508 = vmatprep.subr.bf16.mxu0 %v4127
        %4509 = vmatpush1.bf16.msra.mxu0 %v4126
        %4510 = vmatprep.mubr.bf16.mxu0 %v2909
        %4511 = vmatmul.mubr.bf16.gmra.mrb[0].mxu0 %v2908
        %v4512 = vpop.f32.mrb[0].mxu0
        %v4513 = vadd.f32 %v4472, %v4512
        %v4514 = vpop.f32.mrb[0].mxu0
        %v4515 = vadd.f32 %v4474, %v4514
        %v4516 = vpop.f32.mrb[0].mxu0
        %v4517 = vpop.f32.mrb[0].mxu0
        %4518 = vdwg.mxu0
        %4519 = vmatprep.subr.bf16.mxu0 %v3912
        %4520 = vmatpush1.bf16.msra.mxu0 %v3911
        %4521 = vmatprep.subr.bf16.mxu0 %v3919
        %4522 = vmatpush1.bf16.msra.mxu0 %v3918
        %4523 = vmatprep.subr.bf16.mxu0 %v3926
        %4524 = vmatpush1.bf16.msra.mxu0 %v3925
        %4525 = vmatprep.subr.bf16.mxu0 %v3933
        %4526 = vmatpush1.bf16.msra.mxu0 %v3932
        %4527 = vmatprep.subr.bf16.mxu0 %v3940
        %4528 = vmatpush1.bf16.msra.mxu0 %v3939
        %4529 = vmatprep.subr.bf16.mxu0 %v3947
        %4530 = vmatpush1.bf16.msra.mxu0 %v3946
        %4531 = vmatprep.subr.bf16.mxu0 %v3954
        %4532 = vmatpush1.bf16.msra.mxu0 %v3953
        %4533 = vmatprep.subr.bf16.mxu0 %v3961
        %4534 = vmatpush1.bf16.msra.mxu0 %v3960
        %4535 = vmatprep.subr.bf16.mxu0 %v3968
        %4536 = vmatpush1.bf16.msra.mxu0 %v3967
        %4537 = vmatprep.subr.bf16.mxu0 %v3975
        %4538 = vmatpush1.bf16.msra.mxu0 %v3974
        %4539 = vmatprep.subr.bf16.mxu0 %v3982
        %4540 = vmatpush1.bf16.msra.mxu0 %v3981
        %4541 = vmatprep.subr.bf16.mxu0 %v3989
        %4542 = vmatpush1.bf16.msra.mxu0 %v3988
        %4543 = vmatprep.subr.bf16.mxu0 %v3996
        %4544 = vmatpush1.bf16.msra.mxu0 %v3995
        %4545 = vmatprep.subr.bf16.mxu0 %v4003
        %4546 = vmatpush1.bf16.msra.mxu0 %v4002
        %4547 = vmatprep.subr.bf16.mxu0 %v4010
        %4548 = vmatpush1.bf16.msra.mxu0 %v4009
        %4549 = vmatprep.subr.bf16.mxu0 %v4017
        %4550 = vmatpush1.bf16.msra.mxu0 %v4016
        %4551 = vmatprep.mubr.bf16.mxu0 %v2907
        %4552 = vmatmul.mubr.bf16.gmra.mrb[0].mxu0 %v2906
        %v4553 = vpop.f32.mrb[0].mxu0
        %v4554 = vadd.f32 %v3187, %v4553
        %v4555 = vpop.f32.mrb[0].mxu0
        %v4556 = vadd.f32 %v3191, %v4555
        %v4557 = vpop.f32.mrb[0].mxu0
        %v4558 = vpop.f32.mrb[0].mxu0
        %4559 = vdwg.mxu0
        %4560 = vmatprep.subr.bf16.mxu0 %v4024
        %4561 = vmatpush1.bf16.msra.mxu0 %v4023
        %4562 = vmatprep.subr.bf16.mxu0 %v4031
        %4563 = vmatpush1.bf16.msra.mxu0 %v4030
        %4564 = vmatprep.subr.bf16.mxu0 %v4038
        %4565 = vmatpush1.bf16.msra.mxu0 %v4037
        %4566 = vmatprep.subr.bf16.mxu0 %v4045
        %4567 = vmatpush1.bf16.msra.mxu0 %v4044
        %4568 = vmatprep.subr.bf16.mxu0 %v4052
        %4569 = vmatpush1.bf16.msra.mxu0 %v4051
        %4570 = vmatprep.subr.bf16.mxu0 %v4059
        %4571 = vmatpush1.bf16.msra.mxu0 %v4058
        %4572 = vmatprep.subr.bf16.mxu0 %v4066
        %4573 = vmatpush1.bf16.msra.mxu0 %v4065
        %4574 = vmatprep.subr.bf16.mxu0 %v4073
        %4575 = vmatpush1.bf16.msra.mxu0 %v4072
        %4576 = vmatprep.subr.bf16.mxu0 %v4080
        %4577 = vmatpush1.bf16.msra.mxu0 %v4079
        %4578 = vmatprep.subr.bf16.mxu0 %v4087
        %4579 = vmatpush1.bf16.msra.mxu0 %v4086
        %4580 = vmatprep.subr.bf16.mxu0 %v4094
        %4581 = vmatpush1.bf16.msra.mxu0 %v4093
        %4582 = vmatprep.subr.bf16.mxu0 %v4101
        %4583 = vmatpush1.bf16.msra.mxu0 %v4100
        %4584 = vmatprep.subr.bf16.mxu0 %v4108
        %4585 = vmatpush1.bf16.msra.mxu0 %v4107
        %4586 = vmatprep.subr.bf16.mxu0 %v4115
        %4587 = vmatpush1.bf16.msra.mxu0 %v4114
        %4588 = vmatprep.subr.bf16.mxu0 %v4122
        %4589 = vmatpush1.bf16.msra.mxu0 %v4121
        %4590 = vmatprep.subr.bf16.mxu0 %v4129
        %4591 = vmatpush1.bf16.msra.mxu0 %v4128
        %4592 = vmatprep.mubr.bf16.mxu0 %v2909
        %4593 = vmatmul.mubr.bf16.gmra.mrb[0].mxu0 %v2908
        %v4594 = vpop.f32.mrb[0].mxu0
        %v4595 = vadd.f32 %v4554, %v4594
        %v4596 = vpop.f32.mrb[0].mxu0
        %v4597 = vadd.f32 %v4556, %v4596
        %v4598 = vpop.f32.mrb[0].mxu0
        %v4599 = vpop.f32.mrb[0].mxu0
        %4600 = vdwg.mxu0
        %4601 = vmatprep.subr.bf16.mxu0 0
        %4602 = vmatpush1.bf16.msra.mxu0 %v3913
        %4603 = vmatprep.subr.bf16.mxu0 0
        %4604 = vmatpush1.bf16.msra.mxu0 %v3920
        %4605 = vmatprep.subr.bf16.mxu0 0
        %4606 = vmatpush1.bf16.msra.mxu0 %v3927
        %4607 = vmatprep.subr.bf16.mxu0 0
        %4608 = vmatpush1.bf16.msra.mxu0 %v3934
        %4609 = vmatprep.subr.bf16.mxu0 0
        %4610 = vmatpush1.bf16.msra.mxu0 %v3941
        %4611 = vmatprep.subr.bf16.mxu0 0
        %4612 = vmatpush1.bf16.msra.mxu0 %v3948
        %4613 = vmatprep.subr.bf16.mxu0 0
        %4614 = vmatpush1.bf16.msra.mxu0 %v3955
        %4615 = vmatprep.subr.bf16.mxu0 0
        %4616 = vmatpush1.bf16.msra.mxu0 %v3962
        %4617 = vmatprep.subr.bf16.mxu0 0
        %4618 = vmatpush1.bf16.msra.mxu0 %v3969
        %4619 = vmatprep.subr.bf16.mxu0 0
        %4620 = vmatpush1.bf16.msra.mxu0 %v3976
        %4621 = vmatprep.subr.bf16.mxu0 0
        %4622 = vmatpush1.bf16.msra.mxu0 %v3983
        %4623 = vmatprep.subr.bf16.mxu0 0
        %4624 = vmatpush1.bf16.msra.mxu0 %v3990
        %4625 = vmatprep.subr.bf16.mxu0 0
        %4626 = vmatpush1.bf16.msra.mxu0 %v3997
        %4627 = vmatprep.subr.bf16.mxu0 0
        %4628 = vmatpush1.bf16.msra.mxu0 %v4004
        %4629 = vmatprep.subr.bf16.mxu0 0
        %4630 = vmatpush1.bf16.msra.mxu0 %v4011
        %4631 = vmatprep.subr.bf16.mxu0 0
        %4632 = vmatpush1.bf16.msra.mxu0 %v4018
        %4633 = vmatprep.mubr.bf16.mxu0 %v2907
        %4634 = vmatmul.mubr.bf16.gmra.mrb[0].mxu0 %v2906
        %v4635 = vpop.f32.mrb[0].mxu0
        %v4636 = vadd.f32 %v3195, %v4635
        %v4637 = vpop.f32.mrb[0].mxu0
        %v4638 = vpop.f32.mrb[0].mxu0
        %v4639 = vpop.f32.mrb[0].mxu0
        %4640 = vdwg.mxu0
        %4641 = vmatprep.subr.bf16.mxu0 0
        %4642 = vmatpush1.bf16.msra.mxu0 %v4025
        %4643 = vmatprep.subr.bf16.mxu0 0
        %4644 = vmatpush1.bf16.msra.mxu0 %v4032
        %4645 = vmatprep.subr.bf16.mxu0 0
        %4646 = vmatpush1.bf16.msra.mxu0 %v4039
        %4647 = vmatprep.subr.bf16.mxu0 0
        %4648 = vmatpush1.bf16.msra.mxu0 %v4046
        %4649 = vmatprep.subr.bf16.mxu0 0
        %4650 = vmatpush1.bf16.msra.mxu0 %v4053
        %4651 = vmatprep.subr.bf16.mxu0 0
        %4652 = vmatpush1.bf16.msra.mxu0 %v4060
        %4653 = vmatprep.subr.bf16.mxu0 0
        %4654 = vmatpush1.bf16.msra.mxu0 %v4067
        %4655 = vmatprep.subr.bf16.mxu0 0
        %4656 = vmatpush1.bf16.msra.mxu0 %v4074
        %4657 = vmatprep.subr.bf16.mxu0 0
        %4658 = vmatpush1.bf16.msra.mxu0 %v4081
        %4659 = vmatprep.subr.bf16.mxu0 0
        %4660 = vmatpush1.bf16.msra.mxu0 %v4088
        %4661 = vmatprep.subr.bf16.mxu0 0
        %4662 = vmatpush1.bf16.msra.mxu0 %v4095
        %4663 = vmatprep.subr.bf16.mxu0 0
        %4664 = vmatpush1.bf16.msra.mxu0 %v4102
        %4665 = vmatprep.subr.bf16.mxu0 0
        %4666 = vmatpush1.bf16.msra.mxu0 %v4109
        %4667 = vmatprep.subr.bf16.mxu0 0
        %4668 = vmatpush1.bf16.msra.mxu0 %v4116
        %4669 = vmatprep.subr.bf16.mxu0 0
        %4670 = vmatpush1.bf16.msra.mxu0 %v4123
        %4671 = vmatprep.subr.bf16.mxu0 0
        %4672 = vmatpush1.bf16.msra.mxu0 %v4130
        %4673 = vmatprep.mubr.bf16.mxu0 %v2909
        %4674 = vmatmul.mubr.bf16.gmra.mrb[0].mxu0 %v2908
        %v4675 = vpop.f32.mrb[0].mxu0
        %v4676 = vadd.f32 %v4636, %v4675
        %v4677 = vpop.f32.mrb[0].mxu0
        %v4678 = vpop.f32.mrb[0].mxu0
        %v4679 = vpop.f32.mrb[0].mxu0
        %4680 = vdwg.mxu0
        %v4681 = vsub.f32 0.0, %v4431
        %v4682 = vsub.f32 0.0, %v4433
        %v4683 = vsub.f32 0.0, %v4513
        %v4684 = vsub.f32 0.0, %v4515
        %v4685 = vsub.f32 0.0, %v4595
        %v4686 = vsub.f32 0.0, %v4597
        %v4687 = vsub.f32 0.0, %v4676
        %v4688 = vmul.f32 %v4681, 1.442695
        %v4689 = vpow.pop %v4688
        %v4690 = vmul.f32 %v4682, 1.442695
        %v4691 = vpow.pop %v4690
        %v4692 = vmul.f32 %v4683, 1.442695
        %v4693 = vpow.pop %v4692
        %v4694 = vmul.f32 %v4684, 1.442695
        %v4695 = vpow.pop %v4694
        %v4696 = vmul.f32 %v4685, 1.442695
        %v4697 = vpow.pop %v4696
        %v4698 = vmul.f32 %v4686, 1.442695
        %v4699 = vpow.pop %v4698
        %v4700 = vmul.f32 %v4687, 1.442695
        %v4701 = vpow.pop %v4700
        %v4702 = vadd.f32 %v4689, 1.0
        %v4703 = vadd.f32 %v4691, 1.0
        %v4704 = vadd.f32 %v4693, 1.0
        %v4705 = vadd.f32 %v4695, 1.0
        %v4706 = vadd.f32 %v4697, 1.0
        %v4707 = vadd.f32 %v4699, 1.0
        %v4708 = vadd.f32 %v4701, 1.0
        %v4709 = vrcp.pop %v4702
        %v4710 = vrcp.pop %v4703
        %v4711 = vrcp.pop %v4704
        %v4712 = vrcp.pop %v4705
        %v4713 = vrcp.pop %v4706
        %v4714 = vrcp.pop %v4707
        %v4715 = vrcp.pop %v4708
        %v4716 = vpack.c.bf16 %v4709, %v4709
        %v4717 = vpack.c.bf16 %v4710, %v4710
        %v4718 = vpack.c.bf16 %v4711, %v4711
        %v4719 = vpack.c.bf16 %v4712, %v4712
        %v4720 = vpack.c.bf16 %v4713, %v4713
        %v4721 = vpack.c.bf16 %v4714, %v4714
        %v4722 = vpack.c.bf16 %v4715, %v4715
        %v4730 = vunpack.c.l.b16 %v4716
        %v4731 = vunpack.c.l.b16 %v4717
        %v4732 = vunpack.c.l.b16 %v4718
        %v4733 = vunpack.c.l.b16 %v4719
        %v4734 = vunpack.c.l.b16 %v4720
        %v4735 = vunpack.c.l.b16 %v4721
        %v4736 = vunpack.c.l.b16 %v4722
        %v4737 = vpack.c.b16 %v4731, %v4730
        %v4738 = vpack.c.b16 %v4733, %v4732
        %v4739 = vpack.c.b16 %v4735, %v4734
        %v4740 = vpack.c.b16 %v4736, %v4736
        %4745 = vst [vmem:[%s501] sm:$0xff] %v4737
        %4746 = vst [vmem:[%s501 + $0x8] sm:$0xff] %v4738
        %4747 = vst [vmem:[%s501 + $0x10] sm:$0xff] %v4739
        %4748 = vst [vmem:[%s501 + $0x18] sm:$0xf] %v4740
        %s4749 = sand.u32 %s265, 1
        %s4750 = scalar_lea.sflag [#allocation4], %s4749
        %s4751 = sand.u32 %s265, 1
        %s4752 = smul.addr %s4751, 28
        %s4753 = scalar_lea.vmem [#allocation13], %s4752
        %s4754 = sand.u32 %s291, 1
        %s4755 = scalar_lea.sflag [#allocation15], %s4754
        %s4756 = sand.u32 %s291, 1
        %s4757 = smul.addr %s4756, 8
        %s4758 = scalar_lea.vmem [#allocation14], %s4757
        // Predicated region
        $region85: #{tpu_custom_call.1} parent=59 // pred_check
          %p4759 = pneg %p275
        $region86: #{tpu_custom_call.1} parent=59 // pred_check_branch
          %4761 = sbr.rel (%p4759) target = $region88
        $region87: #{tpu_custom_call.1} parent=59 // pred_region
          %s4763 = ssub.s32 448, 448
          %4764 = vsyncadd %s4750, %s4763
          %s4765 = smul.addr %s37, 7
          %s4766 = smul.addr %s4765, 64
          %s4767 = scalar_lea.hbm %s10, %s4766
          %s4769 = sshll.u32 %s4753, 4
          %s4770 = int_to_ptr.vmem [resolvable:$true] %s4769
          %4772 = dma.vmem_to_hbm [thread:$0]  %s4770, 448, %s4767, %s4750
        $region88: #{tpu_custom_call.1} parent=59 // pred_fallthru
          _
        // Predicated region
        $region89: #{tpu_custom_call.1} parent=59 // pred_check
          %p4773 = pneg %p301
        $region90: #{tpu_custom_call.1} parent=59 // pred_check_branch
          %4775 = sbr.rel (%p4773) target = $region92
        $region91: #{tpu_custom_call.1} parent=59 // pred_region
          %s4777 = ssub.s32 128, 128
          %4778 = vsyncadd %s4755, %s4777
          %s4779 = smul.addr %s37, 128
          %s4780 = scalar_lea.hbm %s11, %s4779
          %s4782 = sshll.u32 %s4758, 4
          %s4783 = int_to_ptr.vmem [resolvable:$true] %s4782
          %4785 = dma.vmem_to_hbm [thread:$0]  %s4783, 128, %s4780, %s4755
        $region92: #{tpu_custom_call.1} parent=59 // pred_fallthru
          _
      $region60: #{tpu_custom_call.1} parent=5 // pred_fallthru
        _
      %p4786 = scmp.le.s32.totalorder 2, %s32
      // Predicated region
      $region93: #{tpu_custom_call.1} parent=5 // pred_check
        %p4787 = pneg %p4786
      $region94: #{tpu_custom_call.1} parent=5 // pred_check_branch
        %4789 = sbr.rel (%p4787) target = $region96
      $region95: #{tpu_custom_call.1} parent=5 // pred_region
        %s4790 = ssub.s32 %s32, 2
        // Predicated region
        $region97: #{tpu_custom_call.1} parent=95 // pred_check
          %p4791 = pneg %p281
        $region98: #{tpu_custom_call.1} parent=95 // pred_check_branch
          %4793 = sbr.rel (%p4791) target = $region100
        $region99: #{tpu_custom_call.1} parent=95 // pred_region
          %s4794 = sand.u32 %s266, 1
          %s4795 = scalar_lea.sflag [#allocation4], %s4794
          %s4796 = sand.u32 %s266, 1
          %s4797 = smul.addr %s4796, 28
          %s4798 = scalar_lea.vmem [#allocation13], %s4797
          %4799 = dma.done %s4795, 448
        $region100: #{tpu_custom_call.1} parent=95 // pred_fallthru
          _
        // Predicated region
        $region101: #{tpu_custom_call.1} parent=95 // pred_check
          %p4800 = pneg %p307
        $region102: #{tpu_custom_call.1} parent=95 // pred_check_branch
          %4802 = sbr.rel (%p4800) target = $region104
        $region103: #{tpu_custom_call.1} parent=95 // pred_region
          %s4803 = sand.u32 %s292, 1
          %s4804 = scalar_lea.sflag [#allocation15], %s4803
          %s4805 = sand.u32 %s292, 1
          %s4806 = smul.addr %s4805, 8
          %s4807 = scalar_lea.vmem [#allocation14], %s4806
          %4808 = dma.done %s4804, 128
        $region104: #{tpu_custom_call.1} parent=95 // pred_fallthru
          _
      $region96: #{tpu_custom_call.1} parent=5 // pred_fallthru
        _
    $region6: #{tpu_custom_call.1} parent=1 // loop_footer
      %s36 = sadd.s32 1, %s32
    $region7: #{tpu_custom_call.1} parent=1 // loop_footer_branch
      %31 = sbr.rel target = $region3
    $region8: #{tpu_custom_call.1} parent=1 // loop_exit
      _
    %4809 = vsyncpa [#allocation3], 1
    %s4810 = scalar_lea.sflag [#allocation3], 1
    %4811 = vsyncpa %s4810, 1
    %4812 = vsyncpa [#allocation6], 1
    %s4813 = scalar_lea.sflag [#allocation6], 1
    %4814 = vsyncpa %s4813, 1
    %4815 = vsyncpa [#allocation9], 1
    %4816 = vsyncpa [#allocation12], 1
    %4817 = vsyncpa [#allocation4], 1
    %s4818 = scalar_lea.sflag [#allocation4], 1
    %4819 = vsyncpa %s4818, 1
    %4820 = vsyncpa [#allocation15], 1
    %s4821 = scalar_lea.sflag [#allocation15], 1
    %4822 = vsyncpa %s4821, 1

</llo_original>
